<compile_context>
chip_gen: v7x
topology: tpu7x:2x2x1
jax: 0.10.0
libtpu: 0.0.40
codegen_flags: <defaults>
</compile_context>

<pallas_src>
import jax
import jax.numpy as jnp
from jax.experimental import pallas as pl
from jax.experimental.pallas import tpu as pltpu

# ----- config (small shapes consistent with the module) -----
TIME_STEPS = 16
FEATURE_DIM = 16
CNN_INPUT_CHANNELS = 1
NUM_CLASSES = 8
CONV_CH = 32
HIDDEN = 128
BN_EPS = 1e-5
HH = TIME_STEPS // 2            # pooled height (8)
WH = FEATURE_DIM // 2           # pooled width  (8)
S = HH * WH                     # pooled spatial positions per channel (64)
NR = CONV_CH // 2               # packed channel-pair rows (16): 2 channels per 128 lanes
FLAT = CONV_CH * S              # 2048
OUT_PAD = 128                   # fc2 output padded to one full lane tile


# ---------------------------------------------------------------------------
# Fused kernel: conv(BN-folded) + ReLU + maxpool(2,2) + fc1(bf16 MXU) + ReLU + fc2(bf16 MXU)
# ---------------------------------------------------------------------------
def fused_cnn_kernel(p_ref, w9_ref, cb_ref, w1_ref, b1_ref, w2_ref, b2_ref, o_ref):
    # p_ref : (36, TB, 128)  im2col rows (row t = pool_phase*9 + conv_tap); the 64-wide
    #                        spatial patch is duplicated into both lane halves.
    # w9_ref: (9, NR, 128)   BN-folded conv taps, channel-pair packed & lane-dense.
    # cb_ref: (NR, 128)      BN-folded conv bias, channel-pair packed.
    # w1_ref: (NR, 128, 128) fc1 weight, bf16: [r, l, n] = fc1_w[n, r*128 + l].
    # b1_ref: (1, 128)       fc1 bias (f32).
    # w2_ref: (128, 128)     fc2 weight, bf16, zero-padded output lanes.
    # b2_ref: (1, 128)       fc2 bias, zero-padded (f32).
    # o_ref : (TB, 128)      fc2 output (f32), lane-padded.
    TB = o_ref.shape[0]

    # Conv taps are already lane-dense (host pre-broadcast the per-channel scalars across
    # each 64-lane half); the only remaining broadcast inside the FMA is across the TB
    # batch sublanes, which cannot be hoisted without blowing up HBM traffic.
    wk = [w9_ref[k][:, None, :] for k in range(9)]          # each (NR, 1, 128)
    cb = cb_ref[...][:, None, :]                            # (NR, 1, 128)

    # conv3x3(pad=1) + folded BN + ReLU fused with MaxPool2d(2,2):
    # 4 pooling phases x 9 taps of full-width broadcast-FMAs; activations never leave vregs.
    pooled = None
    for p in range(4):
        acc = jnp.zeros((NR, TB, 128), jnp.float32)
        for k in range(9):
            acc = acc + wk[k] * p_ref[p * 9 + k][None, :, :]      # (NR, TB, 128)
        y = jnp.maximum(acc + cb, 0.0)                            # folded BN bias + ReLU
        pooled = y if pooled is None else jnp.maximum(pooled, y)  # max over pool phases

    # fc1 on the MXU in bf16 (f32 accumulate).  Row r of `pooled` holds exactly columns
    # [r*128, (r+1)*128) of torch's x.view(B, -1) (channel 2r in lanes 0-63, channel 2r+1
    # in lanes 64-127), so fc1 is a sum of 16 (TB,128)x(128,128) matmuls: no reshape,
    # no flatten scratch, no masked stores.
    pooled_bf = pooled.astype(jnp.bfloat16)
    h = jnp.zeros((TB, HIDDEN), jnp.float32)
    for r in range(NR):
        h = h + jnp.dot(pooled_bf[r], w1_ref[r], preferred_element_type=jnp.float32)
    h = jnp.maximum(h + b1_ref[...], 0.0)                         # fc1 bias + ReLU

    # Dropout(p=0.1) is identity in eval mode.
    # TODO(synk): training-mode dropout (pltpu.prng_random_bits mask) not implemented.
    o_ref[...] = jnp.dot(h.astype(jnp.bfloat16), w2_ref[...],
                         preferred_element_type=jnp.float32) + b2_ref[...]


def cnn_emotion_forward(x, params):
    if x.ndim == 3:                               # (B, T, F) -> (B, 1, T, F)
        x = x[:, None, :, :]
    B = x.shape[0]
    H, W = TIME_STEPS, FEATURE_DIM

    # batch padding + batch tile.  TB guidance: 128 on v5e (MXU M dim), 256 on v6e,
    # re-derive for v7x against its 64 MiB VMEM.  Weights stay VMEM-resident across tiles.
    Bp = max(8, ((B + 7) // 8) * 8)
    if Bp <= 256:
        TB = Bp
    else:
        TB = 256
        Bp = ((Bp + TB - 1) // TB) * TB
    nb = Bp // TB

    # ------------------ host-side glue (layout plumbing only) ------------------
    # zero-pad batch + 1-pixel spatial border for the 3x3 / padding=1 conv
    xb = jnp.zeros((Bp, H, W), jnp.float32).at[:B].set(x[:, 0].astype(jnp.float32))
    xp = jnp.pad(xb, ((0, 0), (1, 1), (1, 1)))    # (Bp, 18, 18)

    # im2col rows, one per (pool phase (i,j), conv tap (dh,dw)); each 64-wide spatial
    # patch is duplicated into both 64-lane halves (channel-pair packing).
    # NOTE: for large batches, ship these as bf16 (upcast in-kernel on v5e) or pass the
    # padded image and derive tap shifts with static slices/pltpu.roll to avoid the 9x
    # host-side expansion; at B=2 this is negligible.
    rows = []
    for i in range(2):
        for j in range(2):
            for dh in range(3):
                for dw in range(3):
                    r = xp[:, i + dh:i + dh + H:2, j + dw:j + dw + W:2].reshape(Bp, S)
                    rows.append(jnp.concatenate([r, r], axis=-1))      # (Bp, 128)
    patches = jnp.stack(rows, axis=0)             # (36, Bp, 128)

    # fold BatchNorm (eval) into the conv weights / bias, channel-pair packed & lane-dense
    scale = params["bn_gamma"] * jax.lax.rsqrt(params["bn_var"] + BN_EPS)        # (C,)
    w_scaled = params["conv_w"][:, 0].reshape(CONV_CH, 9) * scale[:, None]        # (C, 9)
    w9 = jnp.repeat(w_scaled.T.reshape(9, NR, 2), S, axis=2)                      # (9, NR, 128)
    cb_fold = (params["conv_b"] - params["bn_mean"]) * scale + params["bn_beta"]  # (C,)
    cb = jnp.repeat(cb_fold.reshape(NR, 2), S, axis=1)                            # (NR, 128)

    # fc weights in bf16 for the MXU; fc1 weight reshaped to match the packed layout.
    w1 = params["fc1_w"].T.reshape(NR, 2 * S, HIDDEN).astype(jnp.bfloat16)        # (16,128,128)
    b1 = params["fc1_b"].reshape(1, HIDDEN).astype(jnp.float32)
    w2 = jnp.zeros((HIDDEN, OUT_PAD), jnp.float32).at[:, :NUM_CLASSES].set(
        params["out_w"].T).astype(jnp.bfloat16)                                   # (128, 128)
    b2 = jnp.zeros((1, OUT_PAD), jnp.float32).at[:, :NUM_CLASSES].set(
        params["out_b"][None, :])

    flops = 2 * Bp * (4 * 9 * CONV_CH * S + FLAT * HIDDEN + HIDDEN * HIDDEN)
    bytes_accessed = (patches.size * 4 + w9.size * 4 + cb.size * 4 + w1.size * 2
                      + b1.size * 4 + w2.size * 2 + b2.size * 4 + Bp * OUT_PAD * 4)

    # ------------------ single fused pallas_call, batch-tiled grid ------------------
    out = pl.pallas_call(
        fused_cnn_kernel,
        out_shape=jax.ShapeDtypeStruct((Bp, OUT_PAD), jnp.float32),
        grid=(nb,),
        in_specs=[
            pl.BlockSpec((36, TB, 128), lambda i: (0, i, 0)),        # patches: batch-tiled
            pl.BlockSpec((9, NR, 128), lambda i: (0, 0, 0)),         # conv taps: resident
            pl.BlockSpec((NR, 128), lambda i: (0, 0)),               # conv bias: resident
            pl.BlockSpec((NR, 128, HIDDEN), lambda i: (0, 0, 0)),    # fc1 w: resident
            pl.BlockSpec((1, HIDDEN), lambda i: (0, 0)),             # fc1 b: resident
            pl.BlockSpec((HIDDEN, OUT_PAD), lambda i: (0, 0)),       # fc2 w: resident
            pl.BlockSpec((1, OUT_PAD), lambda i: (0, 0)),            # fc2 b: resident
        ],
        out_specs=pl.BlockSpec((TB, OUT_PAD), lambda i: (i, 0)),
        compiler_params=pltpu.CompilerParams(dimension_semantics=("parallel",)),
        cost_estimate=pl.CostEstimate(flops=flops, transcendentals=0,
                                      bytes_accessed=bytes_accessed),
    )(patches, w9, cb, w1, b1, w2, b2)
    return out[:B, :NUM_CLASSES]


# ---------------------------------------------------------------------------
# Deterministic synthetic parameters + pure-JAX reference
# ---------------------------------------------------------------------------
def init_params(key):
    ks = jax.random.split(key, 10)
    return dict(
        conv_w=0.1 * jax.random.normal(ks[0], (CONV_CH, CNN_INPUT_CHANNELS, 3, 3), jnp.float32),
        conv_b=0.05 * jax.random.normal(ks[1], (CONV_CH,), jnp.float32),
        bn_gamma=1.0 + 0.1 * jax.random.normal(ks[2], (CONV_CH,), jnp.float32),
        bn_beta=0.05 * jax.random.normal(ks[3], (CONV_CH,), jnp.float32),
        bn_mean=0.05 * jax.random.normal(ks[4], (CONV_CH,), jnp.float32),
        bn_var=1.0 + 0.5 * jax.random.uniform(ks[5], (CONV_CH,), jnp.float32),
        fc1_w=0.02 * jax.random.normal(ks[6], (HIDDEN, FLAT), jnp.float32),
        fc1_b=0.05 * jax.random.normal(ks[7], (HIDDEN,), jnp.float32),
        out_w=0.05 * jax.random.normal(ks[8], (NUM_CLASSES, HIDDEN), jnp.float32),
        out_b=0.05 * jax.random.normal(ks[9], (NUM_CLASSES,), jnp.float32),
    )


def reference_forward(x, params):
    if x.ndim == 3:
        x = x[:, None]
    y = jax.lax.conv_general_dilated(
        x, params["conv_w"], window_strides=(1, 1), padding=((1, 1), (1, 1)),
        dimension_numbers=("NCHW", "OIHW", "NCHW"),
        precision=jax.lax.Precision.HIGHEST)
    y = y + params["conv_b"][None, :, None, None]
    scale = params["bn_gamma"] / jnp.sqrt(params["bn_var"] + BN_EPS)
    y = (y - params["bn_mean"][None, :, None, None]) * scale[None, :, None, None] \
        + params["bn_beta"][None, :, None, None]
    y = jnp.maximum(y, 0.0)
    y = jax.lax.reduce_window(y, -jnp.inf, jax.lax.max,
                              (1, 1, 2, 2), (1, 1, 2, 2), "VALID")
    y = y.reshape(y.shape[0], -1)
    h = jnp.maximum(y @ params["fc1_w"].T + params["fc1_b"], 0.0)
    return h @ params["out_w"].T + params["out_b"]


if __name__ == "__main__":
    key = jax.random.PRNGKey(0)
    kx, kp = jax.random.split(key)
    params = init_params(kp)
    x = jax.random.normal(kx, (2, CNN_INPUT_CHANNELS, TIME_STEPS, FEATURE_DIM), jnp.float32)

    out = jax.block_until_ready(cnn_emotion_forward(x, params))
    assert out.shape == (2, NUM_CLASSES), out.shape

    ref = reference_forward(x, params)
    if not jnp.allclose(out, ref, rtol=2e-2, atol=2e-2):
        raise AssertionError(
            f"kernel/reference mismatch, max abs err={float(jnp.max(jnp.abs(out - ref)))}")

    print("KERNEL_OK")
</pallas_src>

<mosaic_0001>
module attributes {stable_mosaic.version = 11 : i64} {
  func.func @fused_cnn_kernel(%arg0: i32, %arg1: memref<36x8x128xf32, #tpu.memory_space<vmem>>, %arg2: memref<9x16x128xf32, #tpu.memory_space<vmem>>, %arg3: memref<16x128xf32, #tpu.memory_space<vmem>>, %arg4: memref<16x128x128xbf16, #tpu.memory_space<vmem>>, %arg5: memref<1x128xf32, #tpu.memory_space<vmem>>, %arg6: memref<128x128xbf16, #tpu.memory_space<vmem>>, %arg7: memref<1x128xf32, #tpu.memory_space<vmem>>, %arg8: memref<8x128xf32, #tpu.memory_space<vmem>>) attributes {dimension_semantics = [#tpu.dimension_semantics<parallel>], iteration_bounds = array<i64: 1>, scalar_prefetch = 0 : i64, scratch_operands = 0 : i64, tpu.core_type = #tpu.core_type<tc>, window_params = [{transform_indices = @transform_0, window_bounds = array<i64: 36, 8, 128>}, {pipeline_mode = #tpu.pipeline_mode<synchronous>, transform_indices = @transform_1, window_bounds = array<i64: 9, 16, 128>}, {pipeline_mode = #tpu.pipeline_mode<synchronous>, transform_indices = @transform_2, window_bounds = array<i64: 16, 128>}, {pipeline_mode = #tpu.pipeline_mode<synchronous>, transform_indices = @transform_3, window_bounds = array<i64: 16, 128, 128>}, {pipeline_mode = #tpu.pipeline_mode<synchronous>, transform_indices = @transform_4, window_bounds = array<i64: 1, 128>}, {pipeline_mode = #tpu.pipeline_mode<synchronous>, transform_indices = @transform_5, window_bounds = array<i64: 128, 128>}, {pipeline_mode = #tpu.pipeline_mode<synchronous>, transform_indices = @transform_6, window_bounds = array<i64: 1, 128>}, {transform_indices = @transform_7, window_bounds = array<i64: 8, 128>}]} {
    %c0 = arith.constant 0 : index
    %c0_0 = arith.constant 0 : index
    %c0_1 = arith.constant 0 : index
    %0 = vector.load %arg2[%c0, %c0_0, %c0_1] : memref<9x16x128xf32, #tpu.memory_space<vmem>>, vector<1x16x128xf32>
    %1 = vector.shape_cast %0 : vector<1x16x128xf32> to vector<16x128xf32>
    %2 = vector.shape_cast %1 : vector<16x128xf32> to vector<16x1x128xf32>
    %c1 = arith.constant 1 : index
    %c0_2 = arith.constant 0 : index
    %c0_3 = arith.constant 0 : index
    %3 = vector.load %arg2[%c1, %c0_2, %c0_3] : memref<9x16x128xf32, #tpu.memory_space<vmem>>, vector<1x16x128xf32>
    %4 = vector.shape_cast %3 : vector<1x16x128xf32> to vector<16x128xf32>
    %5 = vector.shape_cast %4 : vector<16x128xf32> to vector<16x1x128xf32>
    %c2 = arith.constant 2 : index
    %c0_4 = arith.constant 0 : index
    %c0_5 = arith.constant 0 : index
    %6 = vector.load %arg2[%c2, %c0_4, %c0_5] : memref<9x16x128xf32, #tpu.memory_space<vmem>>, vector<1x16x128xf32>
    %7 = vector.shape_cast %6 : vector<1x16x128xf32> to vector<16x128xf32>
    %8 = vector.shape_cast %7 : vector<16x128xf32> to vector<16x1x128xf32>
    %c3 = arith.constant 3 : index
    %c0_6 = arith.constant 0 : index
    %c0_7 = arith.constant 0 : index
    %9 = vector.load %arg2[%c3, %c0_6, %c0_7] : memref<9x16x128xf32, #tpu.memory_space<vmem>>, vector<1x16x128xf32>
    %10 = vector.shape_cast %9 : vector<1x16x128xf32> to vector<16x128xf32>
    %11 = vector.shape_cast %10 : vector<16x128xf32> to vector<16x1x128xf32>
    %c4 = arith.constant 4 : index
    %c0_8 = arith.constant 0 : index
    %c0_9 = arith.constant 0 : index
    %12 = vector.load %arg2[%c4, %c0_8, %c0_9] : memref<9x16x128xf32, #tpu.memory_space<vmem>>, vector<1x16x128xf32>
    %13 = vector.shape_cast %12 : vector<1x16x128xf32> to vector<16x128xf32>
    %14 = vector.shape_cast %13 : vector<16x128xf32> to vector<16x1x128xf32>
    %c5 = arith.constant 5 : index
    %c0_10 = arith.constant 0 : index
    %c0_11 = arith.constant 0 : index
    %15 = vector.load %arg2[%c5, %c0_10, %c0_11] : memref<9x16x128xf32, #tpu.memory_space<vmem>>, vector<1x16x128xf32>
    %16 = vector.shape_cast %15 : vector<1x16x128xf32> to vector<16x128xf32>
    %17 = vector.shape_cast %16 : vector<16x128xf32> to vector<16x1x128xf32>
    %c6 = arith.constant 6 : index
    %c0_12 = arith.constant 0 : index
    %c0_13 = arith.constant 0 : index
    %18 = vector.load %arg2[%c6, %c0_12, %c0_13] : memref<9x16x128xf32, #tpu.memory_space<vmem>>, vector<1x16x128xf32>
    %19 = vector.shape_cast %18 : vector<1x16x128xf32> to vector<16x128xf32>
    %20 = vector.shape_cast %19 : vector<16x128xf32> to vector<16x1x128xf32>
    %c7 = arith.constant 7 : index
    %c0_14 = arith.constant 0 : index
    %c0_15 = arith.constant 0 : index
    %21 = vector.load %arg2[%c7, %c0_14, %c0_15] : memref<9x16x128xf32, #tpu.memory_space<vmem>>, vector<1x16x128xf32>
    %22 = vector.shape_cast %21 : vector<1x16x128xf32> to vector<16x128xf32>
    %23 = vector.shape_cast %22 : vector<16x128xf32> to vector<16x1x128xf32>
    %c8 = arith.constant 8 : index
    %c0_16 = arith.constant 0 : index
    %c0_17 = arith.constant 0 : index
    %24 = vector.load %arg2[%c8, %c0_16, %c0_17] : memref<9x16x128xf32, #tpu.memory_space<vmem>>, vector<1x16x128xf32>
    %25 = vector.shape_cast %24 : vector<1x16x128xf32> to vector<16x128xf32>
    %26 = vector.shape_cast %25 : vector<16x128xf32> to vector<16x1x128xf32>
    %c0_18 = arith.constant 0 : index
    %c0_19 = arith.constant 0 : index
    %27 = vector.load %arg3[%c0_18, %c0_19] : memref<16x128xf32, #tpu.memory_space<vmem>>, vector<16x128xf32>
    %28 = vector.shape_cast %27 : vector<16x128xf32> to vector<16x1x128xf32>
    %cst = arith.constant 0.000000e+00 : f32
    %29 = vector.broadcast %cst : f32 to vector<16x8x128xf32>
    %c0_20 = arith.constant 0 : index
    %c0_21 = arith.constant 0 : index
    %c0_22 = arith.constant 0 : index
    %30 = vector.load %arg1[%c0_20, %c0_21, %c0_22] : memref<36x8x128xf32, #tpu.memory_space<vmem>>, vector<1x8x128xf32>
    %31 = vector.shape_cast %30 : vector<1x8x128xf32> to vector<8x128xf32>
    %32 = vector.shape_cast %31 : vector<8x128xf32> to vector<1x8x128xf32>
    %33 = vector.broadcast %2 : vector<16x1x128xf32> to vector<16x8x128xf32>
    %34 = vector.broadcast %32 : vector<1x8x128xf32> to vector<16x8x128xf32>
    %35 = arith.mulf %33, %34 : vector<16x8x128xf32>
    %36 = arith.addf %29, %35 : vector<16x8x128xf32>
    %c1_23 = arith.constant 1 : index
    %c0_24 = arith.constant 0 : index
    %c0_25 = arith.constant 0 : index
    %37 = vector.load %arg1[%c1_23, %c0_24, %c0_25] : memref<36x8x128xf32, #tpu.memory_space<vmem>>, vector<1x8x128xf32>
    %38 = vector.shape_cast %37 : vector<1x8x128xf32> to vector<8x128xf32>
    %39 = vector.shape_cast %38 : vector<8x128xf32> to vector<1x8x128xf32>
    %40 = vector.broadcast %5 : vector<16x1x128xf32> to vector<16x8x128xf32>
    %41 = vector.broadcast %39 : vector<1x8x128xf32> to vector<16x8x128xf32>
    %42 = arith.mulf %40, %41 : vector<16x8x128xf32>
    %43 = arith.addf %36, %42 : vector<16x8x128xf32>
    %c2_26 = arith.constant 2 : index
    %c0_27 = arith.constant 0 : index
    %c0_28 = arith.constant 0 : index
    %44 = vector.load %arg1[%c2_26, %c0_27, %c0_28] : memref<36x8x128xf32, #tpu.memory_space<vmem>>, vector<1x8x128xf32>
    %45 = vector.shape_cast %44 : vector<1x8x128xf32> to vector<8x128xf32>
    %46 = vector.shape_cast %45 : vector<8x128xf32> to vector<1x8x128xf32>
    %47 = vector.broadcast %8 : vector<16x1x128xf32> to vector<16x8x128xf32>
    %48 = vector.broadcast %46 : vector<1x8x128xf32> to vector<16x8x128xf32>
    %49 = arith.mulf %47, %48 : vector<16x8x128xf32>
    %50 = arith.addf %43, %49 : vector<16x8x128xf32>
    %c3_29 = arith.constant 3 : index
    %c0_30 = arith.constant 0 : index
    %c0_31 = arith.constant 0 : index
    %51 = vector.load %arg1[%c3_29, %c0_30, %c0_31] : memref<36x8x128xf32, #tpu.memory_space<vmem>>, vector<1x8x128xf32>
    %52 = vector.shape_cast %51 : vector<1x8x128xf32> to vector<8x128xf32>
    %53 = vector.shape_cast %52 : vector<8x128xf32> to vector<1x8x128xf32>
    %54 = vector.broadcast %11 : vector<16x1x128xf32> to vector<16x8x128xf32>
    %55 = vector.broadcast %53 : vector<1x8x128xf32> to vector<16x8x128xf32>
    %56 = arith.mulf %54, %55 : vector<16x8x128xf32>
    %57 = arith.addf %50, %56 : vector<16x8x128xf32>
    %c4_32 = arith.constant 4 : index
    %c0_33 = arith.constant 0 : index
    %c0_34 = arith.constant 0 : index
    %58 = vector.load %arg1[%c4_32, %c0_33, %c0_34] : memref<36x8x128xf32, #tpu.memory_space<vmem>>, vector<1x8x128xf32>
    %59 = vector.shape_cast %58 : vector<1x8x128xf32> to vector<8x128xf32>
    %60 = vector.shape_cast %59 : vector<8x128xf32> to vector<1x8x128xf32>
    %61 = vector.broadcast %14 : vector<16x1x128xf32> to vector<16x8x128xf32>
    %62 = vector.broadcast %60 : vector<1x8x128xf32> to vector<16x8x128xf32>
    %63 = arith.mulf %61, %62 : vector<16x8x128xf32>
    %64 = arith.addf %57, %63 : vector<16x8x128xf32>
    %c5_35 = arith.constant 5 : index
    %c0_36 = arith.constant 0 : index
    %c0_37 = arith.constant 0 : index
    %65 = vector.load %arg1[%c5_35, %c0_36, %c0_37] : memref<36x8x128xf32, #tpu.memory_space<vmem>>, vector<1x8x128xf32>
    %66 = vector.shape_cast %65 : vector<1x8x128xf32> to vector<8x128xf32>
    %67 = vector.shape_cast %66 : vector<8x128xf32> to vector<1x8x128xf32>
    %68 = vector.broadcast %17 : vector<16x1x128xf32> to vector<16x8x128xf32>
    %69 = vector.broadcast %67 : vector<1x8x128xf32> to vector<16x8x128xf32>
    %70 = arith.mulf %68, %69 : vector<16x8x128xf32>
    %71 = arith.addf %64, %70 : vector<16x8x128xf32>
    %c6_38 = arith.constant 6 : index
    %c0_39 = arith.constant 0 : index
    %c0_40 = arith.constant 0 : index
    %72 = vector.load %arg1[%c6_38, %c0_39, %c0_40] : memref<36x8x128xf32, #tpu.memory_space<vmem>>, vector<1x8x128xf32>
    %73 = vector.shape_cast %72 : vector<1x8x128xf32> to vector<8x128xf32>
    %74 = vector.shape_cast %73 : vector<8x128xf32> to vector<1x8x128xf32>
    %75 = vector.broadcast %20 : vector<16x1x128xf32> to vector<16x8x128xf32>
    %76 = vector.broadcast %74 : vector<1x8x128xf32> to vector<16x8x128xf32>
    %77 = arith.mulf %75, %76 : vector<16x8x128xf32>
    %78 = arith.addf %71, %77 : vector<16x8x128xf32>
    %c7_41 = arith.constant 7 : index
    %c0_42 = arith.constant 0 : index
    %c0_43 = arith.constant 0 : index
    %79 = vector.load %arg1[%c7_41, %c0_42, %c0_43] : memref<36x8x128xf32, #tpu.memory_space<vmem>>, vector<1x8x128xf32>
    %80 = vector.shape_cast %79 : vector<1x8x128xf32> to vector<8x128xf32>
    %81 = vector.shape_cast %80 : vector<8x128xf32> to vector<1x8x128xf32>
    %82 = vector.broadcast %23 : vector<16x1x128xf32> to vector<16x8x128xf32>
    %83 = vector.broadcast %81 : vector<1x8x128xf32> to vector<16x8x128xf32>
    %84 = arith.mulf %82, %83 : vector<16x8x128xf32>
    %85 = arith.addf %78, %84 : vector<16x8x128xf32>
    %c8_44 = arith.constant 8 : index
    %c0_45 = arith.constant 0 : index
    %c0_46 = arith.constant 0 : index
    %86 = vector.load %arg1[%c8_44, %c0_45, %c0_46] : memref<36x8x128xf32, #tpu.memory_space<vmem>>, vector<1x8x128xf32>
    %87 = vector.shape_cast %86 : vector<1x8x128xf32> to vector<8x128xf32>
    %88 = vector.shape_cast %87 : vector<8x128xf32> to vector<1x8x128xf32>
    %89 = vector.broadcast %26 : vector<16x1x128xf32> to vector<16x8x128xf32>
    %90 = vector.broadcast %88 : vector<1x8x128xf32> to vector<16x8x128xf32>
    %91 = arith.mulf %89, %90 : vector<16x8x128xf32>
    %92 = arith.addf %85, %91 : vector<16x8x128xf32>
    %93 = vector.broadcast %28 : vector<16x1x128xf32> to vector<16x8x128xf32>
    %94 = arith.addf %92, %93 : vector<16x8x128xf32>
    %cst_47 = arith.constant 0.000000e+00 : f32
    %95 = vector.broadcast %cst_47 : f32 to vector<16x8x128xf32>
    %96 = arith.maximumf %94, %95 : vector<16x8x128xf32>
    %cst_48 = arith.constant 0.000000e+00 : f32
    %97 = vector.broadcast %cst_48 : f32 to vector<16x8x128xf32>
    %c9 = arith.constant 9 : index
    %c0_49 = arith.constant 0 : index
    %c0_50 = arith.constant 0 : index
    %98 = vector.load %arg1[%c9, %c0_49, %c0_50] : memref<36x8x128xf32, #tpu.memory_space<vmem>>, vector<1x8x128xf32>
    %99 = vector.shape_cast %98 : vector<1x8x128xf32> to vector<8x128xf32>
    %100 = vector.shape_cast %99 : vector<8x128xf32> to vector<1x8x128xf32>
    %101 = vector.broadcast %2 : vector<16x1x128xf32> to vector<16x8x128xf32>
    %102 = vector.broadcast %100 : vector<1x8x128xf32> to vector<16x8x128xf32>
    %103 = arith.mulf %101, %102 : vector<16x8x128xf32>
    %104 = arith.addf %97, %103 : vector<16x8x128xf32>
    %c10 = arith.constant 10 : index
    %c0_51 = arith.constant 0 : index
    %c0_52 = arith.constant 0 : index
    %105 = vector.load %arg1[%c10, %c0_51, %c0_52] : memref<36x8x128xf32, #tpu.memory_space<vmem>>, vector<1x8x128xf32>
    %106 = vector.shape_cast %105 : vector<1x8x128xf32> to vector<8x128xf32>
    %107 = vector.shape_cast %106 : vector<8x128xf32> to vector<1x8x128xf32>
    %108 = vector.broadcast %5 : vector<16x1x128xf32> to vector<16x8x128xf32>
    %109 = vector.broadcast %107 : vector<1x8x128xf32> to vector<16x8x128xf32>
    %110 = arith.mulf %108, %109 : vector<16x8x128xf32>
    %111 = arith.addf %104, %110 : vector<16x8x128xf32>
    %c11 = arith.constant 11 : index
    %c0_53 = arith.constant 0 : index
    %c0_54 = arith.constant 0 : index
    %112 = vector.load %arg1[%c11, %c0_53, %c0_54] : memref<36x8x128xf32, #tpu.memory_space<vmem>>, vector<1x8x128xf32>
    %113 = vector.shape_cast %112 : vector<1x8x128xf32> to vector<8x128xf32>
    %114 = vector.shape_cast %113 : vector<8x128xf32> to vector<1x8x128xf32>
    %115 = vector.broadcast %8 : vector<16x1x128xf32> to vector<16x8x128xf32>
    %116 = vector.broadcast %114 : vector<1x8x128xf32> to vector<16x8x128xf32>
    %117 = arith.mulf %115, %116 : vector<16x8x128xf32>
    %118 = arith.addf %111, %117 : vector<16x8x128xf32>
    %c12 = arith.constant 12 : index
    %c0_55 = arith.constant 0 : index
    %c0_56 = arith.constant 0 : index
    %119 = vector.load %arg1[%c12, %c0_55, %c0_56] : memref<36x8x128xf32, #tpu.memory_space<vmem>>, vector<1x8x128xf32>
    %120 = vector.shape_cast %119 : vector<1x8x128xf32> to vector<8x128xf32>
    %121 = vector.shape_cast %120 : vector<8x128xf32> to vector<1x8x128xf32>
    %122 = vector.broadcast %11 : vector<16x1x128xf32> to vector<16x8x128xf32>
    %123 = vector.broadcast %121 : vector<1x8x128xf32> to vector<16x8x128xf32>
    %124 = arith.mulf %122, %123 : vector<16x8x128xf32>
    %125 = arith.addf %118, %124 : vector<16x8x128xf32>
    %c13 = arith.constant 13 : index
    %c0_57 = arith.constant 0 : index
    %c0_58 = arith.constant 0 : index
    %126 = vector.load %arg1[%c13, %c0_57, %c0_58] : memref<36x8x128xf32, #tpu.memory_space<vmem>>, vector<1x8x128xf32>
    %127 = vector.shape_cast %126 : vector<1x8x128xf32> to vector<8x128xf32>
    %128 = vector.shape_cast %127 : vector<8x128xf32> to vector<1x8x128xf32>
    %129 = vector.broadcast %14 : vector<16x1x128xf32> to vector<16x8x128xf32>
    %130 = vector.broadcast %128 : vector<1x8x128xf32> to vector<16x8x128xf32>
    %131 = arith.mulf %129, %130 : vector<16x8x128xf32>
    %132 = arith.addf %125, %131 : vector<16x8x128xf32>
    %c14 = arith.constant 14 : index
    %c0_59 = arith.constant 0 : index
    %c0_60 = arith.constant 0 : index
    %133 = vector.load %arg1[%c14, %c0_59, %c0_60] : memref<36x8x128xf32, #tpu.memory_space<vmem>>, vector<1x8x128xf32>
    %134 = vector.shape_cast %133 : vector<1x8x128xf32> to vector<8x128xf32>
    %135 = vector.shape_cast %134 : vector<8x128xf32> to vector<1x8x128xf32>
    %136 = vector.broadcast %17 : vector<16x1x128xf32> to vector<16x8x128xf32>
    %137 = vector.broadcast %135 : vector<1x8x128xf32> to vector<16x8x128xf32>
    %138 = arith.mulf %136, %137 : vector<16x8x128xf32>
    %139 = arith.addf %132, %138 : vector<16x8x128xf32>
    %c15 = arith.constant 15 : index
    %c0_61 = arith.constant 0 : index
    %c0_62 = arith.constant 0 : index
    %140 = vector.load %arg1[%c15, %c0_61, %c0_62] : memref<36x8x128xf32, #tpu.memory_space<vmem>>, vector<1x8x128xf32>
    %141 = vector.shape_cast %140 : vector<1x8x128xf32> to vector<8x128xf32>
    %142 = vector.shape_cast %141 : vector<8x128xf32> to vector<1x8x128xf32>
    %143 = vector.broadcast %20 : vector<16x1x128xf32> to vector<16x8x128xf32>
    %144 = vector.broadcast %142 : vector<1x8x128xf32> to vector<16x8x128xf32>
    %145 = arith.mulf %143, %144 : vector<16x8x128xf32>
    %146 = arith.addf %139, %145 : vector<16x8x128xf32>
    %c16 = arith.constant 16 : index
    %c0_63 = arith.constant 0 : index
    %c0_64 = arith.constant 0 : index
    %147 = vector.load %arg1[%c16, %c0_63, %c0_64] : memref<36x8x128xf32, #tpu.memory_space<vmem>>, vector<1x8x128xf32>
    %148 = vector.shape_cast %147 : vector<1x8x128xf32> to vector<8x128xf32>
    %149 = vector.shape_cast %148 : vector<8x128xf32> to vector<1x8x128xf32>
    %150 = vector.broadcast %23 : vector<16x1x128xf32> to vector<16x8x128xf32>
    %151 = vector.broadcast %149 : vector<1x8x128xf32> to vector<16x8x128xf32>
    %152 = arith.mulf %150, %151 : vector<16x8x128xf32>
    %153 = arith.addf %146, %152 : vector<16x8x128xf32>
    %c17 = arith.constant 17 : index
    %c0_65 = arith.constant 0 : index
    %c0_66 = arith.constant 0 : index
    %154 = vector.load %arg1[%c17, %c0_65, %c0_66] : memref<36x8x128xf32, #tpu.memory_space<vmem>>, vector<1x8x128xf32>
    %155 = vector.shape_cast %154 : vector<1x8x128xf32> to vector<8x128xf32>
    %156 = vector.shape_cast %155 : vector<8x128xf32> to vector<1x8x128xf32>
    %157 = vector.broadcast %26 : vector<16x1x128xf32> to vector<16x8x128xf32>
    %158 = vector.broadcast %156 : vector<1x8x128xf32> to vector<16x8x128xf32>
    %159 = arith.mulf %157, %158 : vector<16x8x128xf32>
    %160 = arith.addf %153, %159 : vector<16x8x128xf32>
    %161 = vector.broadcast %28 : vector<16x1x128xf32> to vector<16x8x128xf32>
    %162 = arith.addf %160, %161 : vector<16x8x128xf32>
    %cst_67 = arith.constant 0.000000e+00 : f32
    %163 = vector.broadcast %cst_67 : f32 to vector<16x8x128xf32>
    %164 = arith.maximumf %162, %163 : vector<16x8x128xf32>
    %165 = arith.maximumf %96, %164 : vector<16x8x128xf32>
    %cst_68 = arith.constant 0.000000e+00 : f32
    %166 = vector.broadcast %cst_68 : f32 to vector<16x8x128xf32>
    %c18 = arith.constant 18 : index
    %c0_69 = arith.constant 0 : index
    %c0_70 = arith.constant 0 : index
    %167 = vector.load %arg1[%c18, %c0_69, %c0_70] : memref<36x8x128xf32, #tpu.memory_space<vmem>>, vector<1x8x128xf32>
    %168 = vector.shape_cast %167 : vector<1x8x128xf32> to vector<8x128xf32>
    %169 = vector.shape_cast %168 : vector<8x128xf32> to vector<1x8x128xf32>
    %170 = vector.broadcast %2 : vector<16x1x128xf32> to vector<16x8x128xf32>
    %171 = vector.broadcast %169 : vector<1x8x128xf32> to vector<16x8x128xf32>
    %172 = arith.mulf %170, %171 : vector<16x8x128xf32>
    %173 = arith.addf %166, %172 : vector<16x8x128xf32>
    %c19 = arith.constant 19 : index
    %c0_71 = arith.constant 0 : index
    %c0_72 = arith.constant 0 : index
    %174 = vector.load %arg1[%c19, %c0_71, %c0_72] : memref<36x8x128xf32, #tpu.memory_space<vmem>>, vector<1x8x128xf32>
    %175 = vector.shape_cast %174 : vector<1x8x128xf32> to vector<8x128xf32>
    %176 = vector.shape_cast %175 : vector<8x128xf32> to vector<1x8x128xf32>
    %177 = vector.broadcast %5 : vector<16x1x128xf32> to vector<16x8x128xf32>
    %178 = vector.broadcast %176 : vector<1x8x128xf32> to vector<16x8x128xf32>
    %179 = arith.mulf %177, %178 : vector<16x8x128xf32>
    %180 = arith.addf %173, %179 : vector<16x8x128xf32>
    %c20 = arith.constant 20 : index
    %c0_73 = arith.constant 0 : index
    %c0_74 = arith.constant 0 : index
    %181 = vector.load %arg1[%c20, %c0_73, %c0_74] : memref<36x8x128xf32, #tpu.memory_space<vmem>>, vector<1x8x128xf32>
    %182 = vector.shape_cast %181 : vector<1x8x128xf32> to vector<8x128xf32>
    %183 = vector.shape_cast %182 : vector<8x128xf32> to vector<1x8x128xf32>
    %184 = vector.broadcast %8 : vector<16x1x128xf32> to vector<16x8x128xf32>
    %185 = vector.broadcast %183 : vector<1x8x128xf32> to vector<16x8x128xf32>
    %186 = arith.mulf %184, %185 : vector<16x8x128xf32>
    %187 = arith.addf %180, %186 : vector<16x8x128xf32>
    %c21 = arith.constant 21 : index
    %c0_75 = arith.constant 0 : index
    %c0_76 = arith.constant 0 : index
    %188 = vector.load %arg1[%c21, %c0_75, %c0_76] : memref<36x8x128xf32, #tpu.memory_space<vmem>>, vector<1x8x128xf32>
    %189 = vector.shape_cast %188 : vector<1x8x128xf32> to vector<8x128xf32>
    %190 = vector.shape_cast %189 : vector<8x128xf32> to vector<1x8x128xf32>
    %191 = vector.broadcast %11 : vector<16x1x128xf32> to vector<16x8x128xf32>
    %192 = vector.broadcast %190 : vector<1x8x128xf32> to vector<16x8x128xf32>
    %193 = arith.mulf %191, %192 : vector<16x8x128xf32>
    %194 = arith.addf %187, %193 : vector<16x8x128xf32>
    %c22 = arith.constant 22 : index
    %c0_77 = arith.constant 0 : index
    %c0_78 = arith.constant 0 : index
    %195 = vector.load %arg1[%c22, %c0_77, %c0_78] : memref<36x8x128xf32, #tpu.memory_space<vmem>>, vector<1x8x128xf32>
    %196 = vector.shape_cast %195 : vector<1x8x128xf32> to vector<8x128xf32>
    %197 = vector.shape_cast %196 : vector<8x128xf32> to vector<1x8x128xf32>
    %198 = vector.broadcast %14 : vector<16x1x128xf32> to vector<16x8x128xf32>
    %199 = vector.broadcast %197 : vector<1x8x128xf32> to vector<16x8x128xf32>
    %200 = arith.mulf %198, %199 : vector<16x8x128xf32>
    %201 = arith.addf %194, %200 : vector<16x8x128xf32>
    %c23 = arith.constant 23 : index
    %c0_79 = arith.constant 0 : index
    %c0_80 = arith.constant 0 : index
    %202 = vector.load %arg1[%c23, %c0_79, %c0_80] : memref<36x8x128xf32, #tpu.memory_space<vmem>>, vector<1x8x128xf32>
    %203 = vector.shape_cast %202 : vector<1x8x128xf32> to vector<8x128xf32>
    %204 = vector.shape_cast %203 : vector<8x128xf32> to vector<1x8x128xf32>
    %205 = vector.broadcast %17 : vector<16x1x128xf32> to vector<16x8x128xf32>
    %206 = vector.broadcast %204 : vector<1x8x128xf32> to vector<16x8x128xf32>
    %207 = arith.mulf %205, %206 : vector<16x8x128xf32>
    %208 = arith.addf %201, %207 : vector<16x8x128xf32>
    %c24 = arith.constant 24 : index
    %c0_81 = arith.constant 0 : index
    %c0_82 = arith.constant 0 : index
    %209 = vector.load %arg1[%c24, %c0_81, %c0_82] : memref<36x8x128xf32, #tpu.memory_space<vmem>>, vector<1x8x128xf32>
    %210 = vector.shape_cast %209 : vector<1x8x128xf32> to vector<8x128xf32>
    %211 = vector.shape_cast %210 : vector<8x128xf32> to vector<1x8x128xf32>
    %212 = vector.broadcast %20 : vector<16x1x128xf32> to vector<16x8x128xf32>
    %213 = vector.broadcast %211 : vector<1x8x128xf32> to vector<16x8x128xf32>
    %214 = arith.mulf %212, %213 : vector<16x8x128xf32>
    %215 = arith.addf %208, %214 : vector<16x8x128xf32>
    %c25 = arith.constant 25 : index
    %c0_83 = arith.constant 0 : index
    %c0_84 = arith.constant 0 : index
    %216 = vector.load %arg1[%c25, %c0_83, %c0_84] : memref<36x8x128xf32, #tpu.memory_space<vmem>>, vector<1x8x128xf32>
    %217 = vector.shape_cast %216 : vector<1x8x128xf32> to vector<8x128xf32>
    %218 = vector.shape_cast %217 : vector<8x128xf32> to vector<1x8x128xf32>
    %219 = vector.broadcast %23 : vector<16x1x128xf32> to vector<16x8x128xf32>
    %220 = vector.broadcast %218 : vector<1x8x128xf32> to vector<16x8x128xf32>
    %221 = arith.mulf %219, %220 : vector<16x8x128xf32>
    %222 = arith.addf %215, %221 : vector<16x8x128xf32>
    %c26 = arith.constant 26 : index
    %c0_85 = arith.constant 0 : index
    %c0_86 = arith.constant 0 : index
    %223 = vector.load %arg1[%c26, %c0_85, %c0_86] : memref<36x8x128xf32, #tpu.memory_space<vmem>>, vector<1x8x128xf32>
    %224 = vector.shape_cast %223 : vector<1x8x128xf32> to vector<8x128xf32>
    %225 = vector.shape_cast %224 : vector<8x128xf32> to vector<1x8x128xf32>
    %226 = vector.broadcast %26 : vector<16x1x128xf32> to vector<16x8x128xf32>
    %227 = vector.broadcast %225 : vector<1x8x128xf32> to vector<16x8x128xf32>
    %228 = arith.mulf %226, %227 : vector<16x8x128xf32>
    %229 = arith.addf %222, %228 : vector<16x8x128xf32>
    %230 = vector.broadcast %28 : vector<16x1x128xf32> to vector<16x8x128xf32>
    %231 = arith.addf %229, %230 : vector<16x8x128xf32>
    %cst_87 = arith.constant 0.000000e+00 : f32
    %232 = vector.broadcast %cst_87 : f32 to vector<16x8x128xf32>
    %233 = arith.maximumf %231, %232 : vector<16x8x128xf32>
    %234 = arith.maximumf %165, %233 : vector<16x8x128xf32>
    %cst_88 = arith.constant 0.000000e+00 : f32
    %235 = vector.broadcast %cst_88 : f32 to vector<16x8x128xf32>
    %c27 = arith.constant 27 : index
    %c0_89 = arith.constant 0 : index
    %c0_90 = arith.constant 0 : index
    %236 = vector.load %arg1[%c27, %c0_89, %c0_90] : memref<36x8x128xf32, #tpu.memory_space<vmem>>, vector<1x8x128xf32>
    %237 = vector.shape_cast %236 : vector<1x8x128xf32> to vector<8x128xf32>
    %238 = vector.shape_cast %237 : vector<8x128xf32> to vector<1x8x128xf32>
    %239 = vector.broadcast %2 : vector<16x1x128xf32> to vector<16x8x128xf32>
    %240 = vector.broadcast %238 : vector<1x8x128xf32> to vector<16x8x128xf32>
    %241 = arith.mulf %239, %240 : vector<16x8x128xf32>
    %242 = arith.addf %235, %241 : vector<16x8x128xf32>
    %c28 = arith.constant 28 : index
    %c0_91 = arith.constant 0 : index
    %c0_92 = arith.constant 0 : index
    %243 = vector.load %arg1[%c28, %c0_91, %c0_92] : memref<36x8x128xf32, #tpu.memory_space<vmem>>, vector<1x8x128xf32>
    %244 = vector.shape_cast %243 : vector<1x8x128xf32> to vector<8x128xf32>
    %245 = vector.shape_cast %244 : vector<8x128xf32> to vector<1x8x128xf32>
    %246 = vector.broadcast %5 : vector<16x1x128xf32> to vector<16x8x128xf32>
    %247 = vector.broadcast %245 : vector<1x8x128xf32> to vector<16x8x128xf32>
    %248 = arith.mulf %246, %247 : vector<16x8x128xf32>
    %249 = arith.addf %242, %248 : vector<16x8x128xf32>
    %c29 = arith.constant 29 : index
    %c0_93 = arith.constant 0 : index
    %c0_94 = arith.constant 0 : index
    %250 = vector.load %arg1[%c29, %c0_93, %c0_94] : memref<36x8x128xf32, #tpu.memory_space<vmem>>, vector<1x8x128xf32>
    %251 = vector.shape_cast %250 : vector<1x8x128xf32> to vector<8x128xf32>
    %252 = vector.shape_cast %251 : vector<8x128xf32> to vector<1x8x128xf32>
    %253 = vector.broadcast %8 : vector<16x1x128xf32> to vector<16x8x128xf32>
    %254 = vector.broadcast %252 : vector<1x8x128xf32> to vector<16x8x128xf32>
    %255 = arith.mulf %253, %254 : vector<16x8x128xf32>
    %256 = arith.addf %249, %255 : vector<16x8x128xf32>
    %c30 = arith.constant 30 : index
    %c0_95 = arith.constant 0 : index
    %c0_96 = arith.constant 0 : index
    %257 = vector.load %arg1[%c30, %c0_95, %c0_96] : memref<36x8x128xf32, #tpu.memory_space<vmem>>, vector<1x8x128xf32>
    %258 = vector.shape_cast %257 : vector<1x8x128xf32> to vector<8x128xf32>
    %259 = vector.shape_cast %258 : vector<8x128xf32> to vector<1x8x128xf32>
    %260 = vector.broadcast %11 : vector<16x1x128xf32> to vector<16x8x128xf32>
    %261 = vector.broadcast %259 : vector<1x8x128xf32> to vector<16x8x128xf32>
    %262 = arith.mulf %260, %261 : vector<16x8x128xf32>
    %263 = arith.addf %256, %262 : vector<16x8x128xf32>
    %c31 = arith.constant 31 : index
    %c0_97 = arith.constant 0 : index
    %c0_98 = arith.constant 0 : index
    %264 = vector.load %arg1[%c31, %c0_97, %c0_98] : memref<36x8x128xf32, #tpu.memory_space<vmem>>, vector<1x8x128xf32>
    %265 = vector.shape_cast %264 : vector<1x8x128xf32> to vector<8x128xf32>
    %266 = vector.shape_cast %265 : vector<8x128xf32> to vector<1x8x128xf32>
    %267 = vector.broadcast %14 : vector<16x1x128xf32> to vector<16x8x128xf32>
    %268 = vector.broadcast %266 : vector<1x8x128xf32> to vector<16x8x128xf32>
    %269 = arith.mulf %267, %268 : vector<16x8x128xf32>
    %270 = arith.addf %263, %269 : vector<16x8x128xf32>
    %c32 = arith.constant 32 : index
    %c0_99 = arith.constant 0 : index
    %c0_100 = arith.constant 0 : index
    %271 = vector.load %arg1[%c32, %c0_99, %c0_100] : memref<36x8x128xf32, #tpu.memory_space<vmem>>, vector<1x8x128xf32>
    %272 = vector.shape_cast %271 : vector<1x8x128xf32> to vector<8x128xf32>
    %273 = vector.shape_cast %272 : vector<8x128xf32> to vector<1x8x128xf32>
    %274 = vector.broadcast %17 : vector<16x1x128xf32> to vector<16x8x128xf32>
    %275 = vector.broadcast %273 : vector<1x8x128xf32> to vector<16x8x128xf32>
    %276 = arith.mulf %274, %275 : vector<16x8x128xf32>
    %277 = arith.addf %270, %276 : vector<16x8x128xf32>
    %c33 = arith.constant 33 : index
    %c0_101 = arith.constant 0 : index
    %c0_102 = arith.constant 0 : index
    %278 = vector.load %arg1[%c33, %c0_101, %c0_102] : memref<36x8x128xf32, #tpu.memory_space<vmem>>, vector<1x8x128xf32>
    %279 = vector.shape_cast %278 : vector<1x8x128xf32> to vector<8x128xf32>
    %280 = vector.shape_cast %279 : vector<8x128xf32> to vector<1x8x128xf32>
    %281 = vector.broadcast %20 : vector<16x1x128xf32> to vector<16x8x128xf32>
    %282 = vector.broadcast %280 : vector<1x8x128xf32> to vector<16x8x128xf32>
    %283 = arith.mulf %281, %282 : vector<16x8x128xf32>
    %284 = arith.addf %277, %283 : vector<16x8x128xf32>
    %c34 = arith.constant 34 : index
    %c0_103 = arith.constant 0 : index
    %c0_104 = arith.constant 0 : index
    %285 = vector.load %arg1[%c34, %c0_103, %c0_104] : memref<36x8x128xf32, #tpu.memory_space<vmem>>, vector<1x8x128xf32>
    %286 = vector.shape_cast %285 : vector<1x8x128xf32> to vector<8x128xf32>
    %287 = vector.shape_cast %286 : vector<8x128xf32> to vector<1x8x128xf32>
    %288 = vector.broadcast %23 : vector<16x1x128xf32> to vector<16x8x128xf32>
    %289 = vector.broadcast %287 : vector<1x8x128xf32> to vector<16x8x128xf32>
    %290 = arith.mulf %288, %289 : vector<16x8x128xf32>
    %291 = arith.addf %284, %290 : vector<16x8x128xf32>
    %c35 = arith.constant 35 : index
    %c0_105 = arith.constant 0 : index
    %c0_106 = arith.constant 0 : index
    %292 = vector.load %arg1[%c35, %c0_105, %c0_106] : memref<36x8x128xf32, #tpu.memory_space<vmem>>, vector<1x8x128xf32>
    %293 = vector.shape_cast %292 : vector<1x8x128xf32> to vector<8x128xf32>
    %294 = vector.shape_cast %293 : vector<8x128xf32> to vector<1x8x128xf32>
    %295 = vector.broadcast %26 : vector<16x1x128xf32> to vector<16x8x128xf32>
    %296 = vector.broadcast %294 : vector<1x8x128xf32> to vector<16x8x128xf32>
    %297 = arith.mulf %295, %296 : vector<16x8x128xf32>
    %298 = arith.addf %291, %297 : vector<16x8x128xf32>
    %299 = vector.broadcast %28 : vector<16x1x128xf32> to vector<16x8x128xf32>
    %300 = arith.addf %298, %299 : vector<16x8x128xf32>
    %cst_107 = arith.constant 0.000000e+00 : f32
    %301 = vector.broadcast %cst_107 : f32 to vector<16x8x128xf32>
    %302 = arith.maximumf %300, %301 : vector<16x8x128xf32>
    %303 = arith.maximumf %234, %302 : vector<16x8x128xf32>
    %304 = arith.truncf %303 : vector<16x8x128xf32> to vector<16x8x128xbf16>
    %cst_108 = arith.constant 0.000000e+00 : f32
    %305 = vector.broadcast %cst_108 : f32 to vector<8x128xf32>
    %306 = vector.extract_strided_slice %304 {offsets = [0, 0, 0], sizes = [1, 8, 128], strides = [1, 1, 1]} : vector<16x8x128xbf16> to vector<1x8x128xbf16>
    %307 = vector.shape_cast %306 : vector<1x8x128xbf16> to vector<8x128xbf16>
    %c0_109 = arith.constant 0 : index
    %c0_110 = arith.constant 0 : index
    %c0_111 = arith.constant 0 : index
    %308 = vector.load %arg4[%c0_109, %c0_110, %c0_111] : memref<16x128x128xbf16, #tpu.memory_space<vmem>>, vector<1x128x128xbf16>
    %309 = vector.shape_cast %308 : vector<1x128x128xbf16> to vector<128x128xbf16>
    %cst_112 = arith.constant dense<0.000000e+00> : vector<8x128xf32>
    %310 = tpu.matmul %307, %309, %cst_112 {dimension_numbers = #tpu.dot_dimension_numbers<[1], [0], [0], [1], [0, 0, 1, 1], [], []>} : vector<8x128xbf16>, vector<128x128xbf16>, vector<8x128xf32> -> vector<8x128xf32>
    %311 = arith.addf %305, %310 : vector<8x128xf32>
    %312 = vector.extract_strided_slice %304 {offsets = [1, 0, 0], sizes = [1, 8, 128], strides = [1, 1, 1]} : vector<16x8x128xbf16> to vector<1x8x128xbf16>
    %313 = vector.shape_cast %312 : vector<1x8x128xbf16> to vector<8x128xbf16>
    %c1_113 = arith.constant 1 : index
    %c0_114 = arith.constant 0 : index
    %c0_115 = arith.constant 0 : index
    %314 = vector.load %arg4[%c1_113, %c0_114, %c0_115] : memref<16x128x128xbf16, #tpu.memory_space<vmem>>, vector<1x128x128xbf16>
    %315 = vector.shape_cast %314 : vector<1x128x128xbf16> to vector<128x128xbf16>
    %cst_116 = arith.constant dense<0.000000e+00> : vector<8x128xf32>
    %316 = tpu.matmul %313, %315, %cst_116 {dimension_numbers = #tpu.dot_dimension_numbers<[1], [0], [0], [1], [0, 0, 1, 1], [], []>} : vector<8x128xbf16>, vector<128x128xbf16>, vector<8x128xf32> -> vector<8x128xf32>
    %317 = arith.addf %311, %316 : vector<8x128xf32>
    %318 = vector.extract_strided_slice %304 {offsets = [2, 0, 0], sizes = [1, 8, 128], strides = [1, 1, 1]} : vector<16x8x128xbf16> to vector<1x8x128xbf16>
    %319 = vector.shape_cast %318 : vector<1x8x128xbf16> to vector<8x128xbf16>
    %c2_117 = arith.constant 2 : index
    %c0_118 = arith.constant 0 : index
    %c0_119 = arith.constant 0 : index
    %320 = vector.load %arg4[%c2_117, %c0_118, %c0_119] : memref<16x128x128xbf16, #tpu.memory_space<vmem>>, vector<1x128x128xbf16>
    %321 = vector.shape_cast %320 : vector<1x128x128xbf16> to vector<128x128xbf16>
    %cst_120 = arith.constant dense<0.000000e+00> : vector<8x128xf32>
    %322 = tpu.matmul %319, %321, %cst_120 {dimension_numbers = #tpu.dot_dimension_numbers<[1], [0], [0], [1], [0, 0, 1, 1], [], []>} : vector<8x128xbf16>, vector<128x128xbf16>, vector<8x128xf32> -> vector<8x128xf32>
    %323 = arith.addf %317, %322 : vector<8x128xf32>
    %324 = vector.extract_strided_slice %304 {offsets = [3, 0, 0], sizes = [1, 8, 128], strides = [1, 1, 1]} : vector<16x8x128xbf16> to vector<1x8x128xbf16>
    %325 = vector.shape_cast %324 : vector<1x8x128xbf16> to vector<8x128xbf16>
    %c3_121 = arith.constant 3 : index
    %c0_122 = arith.constant 0 : index
    %c0_123 = arith.constant 0 : index
    %326 = vector.load %arg4[%c3_121, %c0_122, %c0_123] : memref<16x128x128xbf16, #tpu.memory_space<vmem>>, vector<1x128x128xbf16>
    %327 = vector.shape_cast %326 : vector<1x128x128xbf16> to vector<128x128xbf16>
    %cst_124 = arith.constant dense<0.000000e+00> : vector<8x128xf32>
    %328 = tpu.matmul %325, %327, %cst_124 {dimension_numbers = #tpu.dot_dimension_numbers<[1], [0], [0], [1], [0, 0, 1, 1], [], []>} : vector<8x128xbf16>, vector<128x128xbf16>, vector<8x128xf32> -> vector<8x128xf32>
    %329 = arith.addf %323, %328 : vector<8x128xf32>
    %330 = vector.extract_strided_slice %304 {offsets = [4, 0, 0], sizes = [1, 8, 128], strides = [1, 1, 1]} : vector<16x8x128xbf16> to vector<1x8x128xbf16>
    %331 = vector.shape_cast %330 : vector<1x8x128xbf16> to vector<8x128xbf16>
    %c4_125 = arith.constant 4 : index
    %c0_126 = arith.constant 0 : index
    %c0_127 = arith.constant 0 : index
    %332 = vector.load %arg4[%c4_125, %c0_126, %c0_127] : memref<16x128x128xbf16, #tpu.memory_space<vmem>>, vector<1x128x128xbf16>
    %333 = vector.shape_cast %332 : vector<1x128x128xbf16> to vector<128x128xbf16>
    %cst_128 = arith.constant dense<0.000000e+00> : vector<8x128xf32>
    %334 = tpu.matmul %331, %333, %cst_128 {dimension_numbers = #tpu.dot_dimension_numbers<[1], [0], [0], [1], [0, 0, 1, 1], [], []>} : vector<8x128xbf16>, vector<128x128xbf16>, vector<8x128xf32> -> vector<8x128xf32>
    %335 = arith.addf %329, %334 : vector<8x128xf32>
    %336 = vector.extract_strided_slice %304 {offsets = [5, 0, 0], sizes = [1, 8, 128], strides = [1, 1, 1]} : vector<16x8x128xbf16> to vector<1x8x128xbf16>
    %337 = vector.shape_cast %336 : vector<1x8x128xbf16> to vector<8x128xbf16>
    %c5_129 = arith.constant 5 : index
    %c0_130 = arith.constant 0 : index
    %c0_131 = arith.constant 0 : index
    %338 = vector.load %arg4[%c5_129, %c0_130, %c0_131] : memref<16x128x128xbf16, #tpu.memory_space<vmem>>, vector<1x128x128xbf16>
    %339 = vector.shape_cast %338 : vector<1x128x128xbf16> to vector<128x128xbf16>
    %cst_132 = arith.constant dense<0.000000e+00> : vector<8x128xf32>
    %340 = tpu.matmul %337, %339, %cst_132 {dimension_numbers = #tpu.dot_dimension_numbers<[1], [0], [0], [1], [0, 0, 1, 1], [], []>} : vector<8x128xbf16>, vector<128x128xbf16>, vector<8x128xf32> -> vector<8x128xf32>
    %341 = arith.addf %335, %340 : vector<8x128xf32>
    %342 = vector.extract_strided_slice %304 {offsets = [6, 0, 0], sizes = [1, 8, 128], strides = [1, 1, 1]} : vector<16x8x128xbf16> to vector<1x8x128xbf16>
    %343 = vector.shape_cast %342 : vector<1x8x128xbf16> to vector<8x128xbf16>
    %c6_133 = arith.constant 6 : index
    %c0_134 = arith.constant 0 : index
    %c0_135 = arith.constant 0 : index
    %344 = vector.load %arg4[%c6_133, %c0_134, %c0_135] : memref<16x128x128xbf16, #tpu.memory_space<vmem>>, vector<1x128x128xbf16>
    %345 = vector.shape_cast %344 : vector<1x128x128xbf16> to vector<128x128xbf16>
    %cst_136 = arith.constant dense<0.000000e+00> : vector<8x128xf32>
    %346 = tpu.matmul %343, %345, %cst_136 {dimension_numbers = #tpu.dot_dimension_numbers<[1], [0], [0], [1], [0, 0, 1, 1], [], []>} : vector<8x128xbf16>, vector<128x128xbf16>, vector<8x128xf32> -> vector<8x128xf32>
    %347 = arith.addf %341, %346 : vector<8x128xf32>
    %348 = vector.extract_strided_slice %304 {offsets = [7, 0, 0], sizes = [1, 8, 128], strides = [1, 1, 1]} : vector<16x8x128xbf16> to vector<1x8x128xbf16>
    %349 = vector.shape_cast %348 : vector<1x8x128xbf16> to vector<8x128xbf16>
    %c7_137 = arith.constant 7 : index
    %c0_138 = arith.constant 0 : index
    %c0_139 = arith.constant 0 : index
    %350 = vector.load %arg4[%c7_137, %c0_138, %c0_139] : memref<16x128x128xbf16, #tpu.memory_space<vmem>>, vector<1x128x128xbf16>
    %351 = vector.shape_cast %350 : vector<1x128x128xbf16> to vector<128x128xbf16>
    %cst_140 = arith.constant dense<0.000000e+00> : vector<8x128xf32>
    %352 = tpu.matmul %349, %351, %cst_140 {dimension_numbers = #tpu.dot_dimension_numbers<[1], [0], [0], [1], [0, 0, 1, 1], [], []>} : vector<8x128xbf16>, vector<128x128xbf16>, vector<8x128xf32> -> vector<8x128xf32>
    %353 = arith.addf %347, %352 : vector<8x128xf32>
    %354 = vector.extract_strided_slice %304 {offsets = [8, 0, 0], sizes = [1, 8, 128], strides = [1, 1, 1]} : vector<16x8x128xbf16> to vector<1x8x128xbf16>
    %355 = vector.shape_cast %354 : vector<1x8x128xbf16> to vector<8x128xbf16>
    %c8_141 = arith.constant 8 : index
    %c0_142 = arith.constant 0 : index
    %c0_143 = arith.constant 0 : index
    %356 = vector.load %arg4[%c8_141, %c0_142, %c0_143] : memref<16x128x128xbf16, #tpu.memory_space<vmem>>, vector<1x128x128xbf16>
    %357 = vector.shape_cast %356 : vector<1x128x128xbf16> to vector<128x128xbf16>
    %cst_144 = arith.constant dense<0.000000e+00> : vector<8x128xf32>
    %358 = tpu.matmul %355, %357, %cst_144 {dimension_numbers = #tpu.dot_dimension_numbers<[1], [0], [0], [1], [0, 0, 1, 1], [], []>} : vector<8x128xbf16>, vector<128x128xbf16>, vector<8x128xf32> -> vector<8x128xf32>
    %359 = arith.addf %353, %358 : vector<8x128xf32>
    %360 = vector.extract_strided_slice %304 {offsets = [9, 0, 0], sizes = [1, 8, 128], strides = [1, 1, 1]} : vector<16x8x128xbf16> to vector<1x8x128xbf16>
    %361 = vector.shape_cast %360 : vector<1x8x128xbf16> to vector<8x128xbf16>
    %c9_145 = arith.constant 9 : index
    %c0_146 = arith.constant 0 : index
    %c0_147 = arith.constant 0 : index
    %362 = vector.load %arg4[%c9_145, %c0_146, %c0_147] : memref<16x128x128xbf16, #tpu.memory_space<vmem>>, vector<1x128x128xbf16>
    %363 = vector.shape_cast %362 : vector<1x128x128xbf16> to vector<128x128xbf16>
    %cst_148 = arith.constant dense<0.000000e+00> : vector<8x128xf32>
    %364 = tpu.matmul %361, %363, %cst_148 {dimension_numbers = #tpu.dot_dimension_numbers<[1], [0], [0], [1], [0, 0, 1, 1], [], []>} : vector<8x128xbf16>, vector<128x128xbf16>, vector<8x128xf32> -> vector<8x128xf32>
    %365 = arith.addf %359, %364 : vector<8x128xf32>
    %366 = vector.extract_strided_slice %304 {offsets = [10, 0, 0], sizes = [1, 8, 128], strides = [1, 1, 1]} : vector<16x8x128xbf16> to vector<1x8x128xbf16>
    %367 = vector.shape_cast %366 : vector<1x8x128xbf16> to vector<8x128xbf16>
    %c10_149 = arith.constant 10 : index
    %c0_150 = arith.constant 0 : index
    %c0_151 = arith.constant 0 : index
    %368 = vector.load %arg4[%c10_149, %c0_150, %c0_151] : memref<16x128x128xbf16, #tpu.memory_space<vmem>>, vector<1x128x128xbf16>
    %369 = vector.shape_cast %368 : vector<1x128x128xbf16> to vector<128x128xbf16>
    %cst_152 = arith.constant dense<0.000000e+00> : vector<8x128xf32>
    %370 = tpu.matmul %367, %369, %cst_152 {dimension_numbers = #tpu.dot_dimension_numbers<[1], [0], [0], [1], [0, 0, 1, 1], [], []>} : vector<8x128xbf16>, vector<128x128xbf16>, vector<8x128xf32> -> vector<8x128xf32>
    %371 = arith.addf %365, %370 : vector<8x128xf32>
    %372 = vector.extract_strided_slice %304 {offsets = [11, 0, 0], sizes = [1, 8, 128], strides = [1, 1, 1]} : vector<16x8x128xbf16> to vector<1x8x128xbf16>
    %373 = vector.shape_cast %372 : vector<1x8x128xbf16> to vector<8x128xbf16>
    %c11_153 = arith.constant 11 : index
    %c0_154 = arith.constant 0 : index
    %c0_155 = arith.constant 0 : index
    %374 = vector.load %arg4[%c11_153, %c0_154, %c0_155] : memref<16x128x128xbf16, #tpu.memory_space<vmem>>, vector<1x128x128xbf16>
    %375 = vector.shape_cast %374 : vector<1x128x128xbf16> to vector<128x128xbf16>
    %cst_156 = arith.constant dense<0.000000e+00> : vector<8x128xf32>
    %376 = tpu.matmul %373, %375, %cst_156 {dimension_numbers = #tpu.dot_dimension_numbers<[1], [0], [0], [1], [0, 0, 1, 1], [], []>} : vector<8x128xbf16>, vector<128x128xbf16>, vector<8x128xf32> -> vector<8x128xf32>
    %377 = arith.addf %371, %376 : vector<8x128xf32>
    %378 = vector.extract_strided_slice %304 {offsets = [12, 0, 0], sizes = [1, 8, 128], strides = [1, 1, 1]} : vector<16x8x128xbf16> to vector<1x8x128xbf16>
    %379 = vector.shape_cast %378 : vector<1x8x128xbf16> to vector<8x128xbf16>
    %c12_157 = arith.constant 12 : index
    %c0_158 = arith.constant 0 : index
    %c0_159 = arith.constant 0 : index
    %380 = vector.load %arg4[%c12_157, %c0_158, %c0_159] : memref<16x128x128xbf16, #tpu.memory_space<vmem>>, vector<1x128x128xbf16>
    %381 = vector.shape_cast %380 : vector<1x128x128xbf16> to vector<128x128xbf16>
    %cst_160 = arith.constant dense<0.000000e+00> : vector<8x128xf32>
    %382 = tpu.matmul %379, %381, %cst_160 {dimension_numbers = #tpu.dot_dimension_numbers<[1], [0], [0], [1], [0, 0, 1, 1], [], []>} : vector<8x128xbf16>, vector<128x128xbf16>, vector<8x128xf32> -> vector<8x128xf32>
    %383 = arith.addf %377, %382 : vector<8x128xf32>
    %384 = vector.extract_strided_slice %304 {offsets = [13, 0, 0], sizes = [1, 8, 128], strides = [1, 1, 1]} : vector<16x8x128xbf16> to vector<1x8x128xbf16>
    %385 = vector.shape_cast %384 : vector<1x8x128xbf16> to vector<8x128xbf16>
    %c13_161 = arith.constant 13 : index
    %c0_162 = arith.constant 0 : index
    %c0_163 = arith.constant 0 : index
    %386 = vector.load %arg4[%c13_161, %c0_162, %c0_163] : memref<16x128x128xbf16, #tpu.memory_space<vmem>>, vector<1x128x128xbf16>
    %387 = vector.shape_cast %386 : vector<1x128x128xbf16> to vector<128x128xbf16>
    %cst_164 = arith.constant dense<0.000000e+00> : vector<8x128xf32>
    %388 = tpu.matmul %385, %387, %cst_164 {dimension_numbers = #tpu.dot_dimension_numbers<[1], [0], [0], [1], [0, 0, 1, 1], [], []>} : vector<8x128xbf16>, vector<128x128xbf16>, vector<8x128xf32> -> vector<8x128xf32>
    %389 = arith.addf %383, %388 : vector<8x128xf32>
    %390 = vector.extract_strided_slice %304 {offsets = [14, 0, 0], sizes = [1, 8, 128], strides = [1, 1, 1]} : vector<16x8x128xbf16> to vector<1x8x128xbf16>
    %391 = vector.shape_cast %390 : vector<1x8x128xbf16> to vector<8x128xbf16>
    %c14_165 = arith.constant 14 : index
    %c0_166 = arith.constant 0 : index
    %c0_167 = arith.constant 0 : index
    %392 = vector.load %arg4[%c14_165, %c0_166, %c0_167] : memref<16x128x128xbf16, #tpu.memory_space<vmem>>, vector<1x128x128xbf16>
    %393 = vector.shape_cast %392 : vector<1x128x128xbf16> to vector<128x128xbf16>
    %cst_168 = arith.constant dense<0.000000e+00> : vector<8x128xf32>
    %394 = tpu.matmul %391, %393, %cst_168 {dimension_numbers = #tpu.dot_dimension_numbers<[1], [0], [0], [1], [0, 0, 1, 1], [], []>} : vector<8x128xbf16>, vector<128x128xbf16>, vector<8x128xf32> -> vector<8x128xf32>
    %395 = arith.addf %389, %394 : vector<8x128xf32>
    %396 = vector.extract_strided_slice %304 {offsets = [15, 0, 0], sizes = [1, 8, 128], strides = [1, 1, 1]} : vector<16x8x128xbf16> to vector<1x8x128xbf16>
    %397 = vector.shape_cast %396 : vector<1x8x128xbf16> to vector<8x128xbf16>
    %c15_169 = arith.constant 15 : index
    %c0_170 = arith.constant 0 : index
    %c0_171 = arith.constant 0 : index
    %398 = vector.load %arg4[%c15_169, %c0_170, %c0_171] : memref<16x128x128xbf16, #tpu.memory_space<vmem>>, vector<1x128x128xbf16>
    %399 = vector.shape_cast %398 : vector<1x128x128xbf16> to vector<128x128xbf16>
    %cst_172 = arith.constant dense<0.000000e+00> : vector<8x128xf32>
    %400 = tpu.matmul %397, %399, %cst_172 {dimension_numbers = #tpu.dot_dimension_numbers<[1], [0], [0], [1], [0, 0, 1, 1], [], []>} : vector<8x128xbf16>, vector<128x128xbf16>, vector<8x128xf32> -> vector<8x128xf32>
    %401 = arith.addf %395, %400 : vector<8x128xf32>
    %c0_173 = arith.constant 0 : index
    %c0_174 = arith.constant 0 : index
    %402 = vector.load %arg5[%c0_173, %c0_174] : memref<1x128xf32, #tpu.memory_space<vmem>>, vector<1x128xf32>
    %403 = vector.broadcast %402 : vector<1x128xf32> to vector<8x128xf32>
    %404 = arith.addf %401, %403 : vector<8x128xf32>
    %cst_175 = arith.constant 0.000000e+00 : f32
    %405 = vector.broadcast %cst_175 : f32 to vector<8x128xf32>
    %406 = arith.maximumf %404, %405 : vector<8x128xf32>
    %407 = arith.truncf %406 : vector<8x128xf32> to vector<8x128xbf16>
    %c0_176 = arith.constant 0 : index
    %c0_177 = arith.constant 0 : index
    %408 = vector.load %arg6[%c0_176, %c0_177] : memref<128x128xbf16, #tpu.memory_space<vmem>>, vector<128x128xbf16>
    %cst_178 = arith.constant dense<0.000000e+00> : vector<8x128xf32>
    %409 = tpu.matmul %407, %408, %cst_178 {dimension_numbers = #tpu.dot_dimension_numbers<[1], [0], [0], [1], [0, 0, 1, 1], [], []>} : vector<8x128xbf16>, vector<128x128xbf16>, vector<8x128xf32> -> vector<8x128xf32>
    %c0_179 = arith.constant 0 : index
    %c0_180 = arith.constant 0 : index
    %410 = vector.load %arg7[%c0_179, %c0_180] : memref<1x128xf32, #tpu.memory_space<vmem>>, vector<1x128xf32>
    %411 = vector.broadcast %410 : vector<1x128xf32> to vector<8x128xf32>
    %412 = arith.addf %409, %411 : vector<8x128xf32>
    %c0_181 = arith.constant 0 : index
    %c0_182 = arith.constant 0 : index
    %413 = vector.load %arg8[%c0_181, %c0_182] : memref<8x128xf32, #tpu.memory_space<vmem>>, vector<8x128xf32>
    tpu.vector_store %arg8[%c0_181, %c0_182], %412 {strides = array<i32>} : memref<8x128xf32, #tpu.memory_space<vmem>>, vector<8x128xf32>,
    return
  }
  func.func @transform_0(%arg0: i32) -> (i32, i32, i32) {
    %c0_i32 = arith.constant 0 : i32
    %c0_i32_0 = arith.constant 0 : i32
    %c0_i32_1 = arith.constant 0 : i32
    return %c0_i32, %arg0, %c0_i32_0 : i32, i32, i32
  }
  func.func @transform_1(%arg0: i32) -> (i32, i32, i32) {
    %c0_i32 = arith.constant 0 : i32
    %c0_i32_0 = arith.constant 0 : i32
    %c0_i32_1 = arith.constant 0 : i32
    %c0_i32_2 = arith.constant 0 : i32
    return %c0_i32, %c0_i32_0, %c0_i32_1 : i32, i32, i32
  }
  func.func @transform_2(%arg0: i32) -> (i32, i32) {
    %c0_i32 = arith.constant 0 : i32
    %c0_i32_0 = arith.constant 0 : i32
    %c0_i32_1 = arith.constant 0 : i32
    return %c0_i32, %c0_i32_0 : i32, i32
  }
  func.func @transform_3(%arg0: i32) -> (i32, i32, i32) {
    %c0_i32 = arith.constant 0 : i32
    %c0_i32_0 = arith.constant 0 : i32
    %c0_i32_1 = arith.constant 0 : i32
    %c0_i32_2 = arith.constant 0 : i32
    return %c0_i32, %c0_i32_0, %c0_i32_1 : i32, i32, i32
  }
  func.func @transform_4(%arg0: i32) -> (i32, i32) {
    %c0_i32 = arith.constant 0 : i32
    %c0_i32_0 = arith.constant 0 : i32
    %c0_i32_1 = arith.constant 0 : i32
    return %c0_i32, %c0_i32_0 : i32, i32
  }
  func.func @transform_5(%arg0: i32) -> (i32, i32) {
    %c0_i32 = arith.constant 0 : i32
    %c0_i32_0 = arith.constant 0 : i32
    %c0_i32_1 = arith.constant 0 : i32
    return %c0_i32, %c0_i32_0 : i32, i32
  }
  func.func @transform_6(%arg0: i32) -> (i32, i32) {
    %c0_i32 = arith.constant 0 : i32
    %c0_i32_0 = arith.constant 0 : i32
    %c0_i32_1 = arith.constant 0 : i32
    return %c0_i32, %c0_i32_0 : i32, i32
  }
  func.func @transform_7(%arg0: i32) -> (i32, i32) {
    %c0_i32 = arith.constant 0 : i32
    %c0_i32_0 = arith.constant 0 : i32
    return %arg0, %c0_i32 : i32, i32
  }
}

</mosaic_0001>

<llo_original>
// kernel: tpu_custom_call.1
$region0: #{tpu_custom_call.1}
  #allocation0 [shape = 'u32[]', space=smem, size = 0x4, offset = 0x4, fixed_abs, tag = 'smem constant byte address 0x4 - core index']
  #allocation1 [shape = 'u32[144,128]{1,0:T(1,128)}', space=vmem, size = 0x12000, scoped, tag = 'internal scratch']
  %s0 = inlined_call_operand.hbm [shape: f32[36,8,128], index: 0, kind: input, shape index: {}]
  %s1 = inlined_call_operand.hbm [shape: f32[9,16,128], index: 1, kind: input, shape index: {}]
  %s2 = inlined_call_operand.hbm [shape: f32[16,128], index: 2, kind: input, shape index: {}]
  %s3 = inlined_call_operand.hbm [shape: bf16[16,128,128], index: 3, kind: input, shape index: {}]
  %s4 = inlined_call_operand.vmem [shape: f32[1,128], index: 4, kind: input, shape index: {}]
  %s5 = inlined_call_operand.hbm [shape: bf16[128,128], index: 5, kind: input, shape index: {}]
  %s6 = inlined_call_operand.vmem [shape: f32[1,128], index: 6, kind: input, shape index: {}]
  %s7 = inlined_call_operand.hbm [shape: f32[8,128], index: 7, kind: output, shape index: {}]
  %s8 = sld [smem:[#allocation0]]
  $region58: #{tpu_custom_call.1} parent=0
    _
  %s10 = ssub.s32 1, %s8
  %s11 = scalar_select 0, %s10, %s8
  $region1: #{tpu_custom_call.1} parent=0
    #allocation2 [shape = 'u8[147456]{0}', space=vmem, size = 0x24000, scoped, tag = 'input window, operand 0, single buffered']
    #allocation3 [shape = 's32[1]{0}', space=sflag, size = 0x4, scoped, tag = 'scoped memory for tpu_custom_call.1']
    #allocation4 [shape = 's32[1]{0}', space=sflag, size = 0x4, scoped, tag = 'scoped memory for tpu_custom_call.1']
    #allocation5 [shape = 'u8[73728]{0}', space=vmem, size = 0x12000, scoped, tag = 'input window, operand 1, single buffered']
    #allocation6 [shape = 's32[1]{0}', space=sflag, size = 0x4, scoped, tag = 'scoped memory for tpu_custom_call.1']
    #allocation7 [shape = 'u8[8192]{0}', space=vmem, size = 0x2000, scoped, tag = 'input window, operand 2, single buffered']
    #allocation8 [shape = 'u8[524288]{0}', space=vmem, size = 0x80000, scoped, tag = 'input window, operand 3, single buffered']
    #allocation9 [shape = 's32[1]{0}', space=sflag, size = 0x4, scoped, tag = 'scoped memory for tpu_custom_call.1']
    #allocation10 [shape = 'u8[32768]{0}', space=vmem, size = 0x8000, scoped, tag = 'input window, operand 5, single buffered']
    #allocation11 [shape = 'u8[4096]{0}', space=vmem, size = 0x1000, scoped, tag = 'output window, operand 0, single buffered']
    %12 = vsyncpa [#allocation3], 0
    %13 = vsyncpa [#allocation6], 0
    %14 = vsyncpa [#allocation9], 0
    %15 = vsyncpa [#allocation4], 0
    // Predicated region
    $region2: #{tpu_custom_call.1} parent=1 // pred_check
      _
    $region3: #{tpu_custom_call.1} parent=1 // pred_check_branch
      %17 = sbr.rel (0) target = $region5
    $region4: #{tpu_custom_call.1} parent=1 // pred_region
      %s19 = ssub.s32 4608, 4608
      %20 = vsyncadd [#allocation3], %s19
      %s21 = sshll.u32 [#allocation2], 4
      %s22 = int_to_ptr.vmem [resolvable:$true] %s21
      %27 = dma.hbm_to_vmem [thread:$0]  %s0, 4608, %s22, [#allocation3], 128, 128, 8
    $region5: #{tpu_custom_call.1} parent=1 // pred_fallthru
      _
    // Predicated region
    $region6: #{tpu_custom_call.1} parent=1 // pred_check
      _
    $region7: #{tpu_custom_call.1} parent=1 // pred_check_branch
      %29 = sbr.rel (0) target = $region9
    $region8: #{tpu_custom_call.1} parent=1 // pred_region
      %s31 = ssub.s32 2304, 2304
      %32 = vsyncadd [#allocation6], %s31
      %s33 = sshll.u32 [#allocation5], 4
      %s34 = int_to_ptr.vmem [resolvable:$true] %s33
      %39 = dma.hbm_to_vmem [thread:$0]  %s1, 2304, %s34, [#allocation6], 128, 128, 8
    $region9: #{tpu_custom_call.1} parent=1 // pred_fallthru
      _
    // Predicated region
    $region10: #{tpu_custom_call.1} parent=1 // pred_check
      _
    $region11: #{tpu_custom_call.1} parent=1 // pred_check_branch
      %41 = sbr.rel (0) target = $region13
    $region12: #{tpu_custom_call.1} parent=1 // pred_region
      %s43 = ssub.s32 256, 256
      %44 = vsyncadd [#allocation6], %s43
      %s45 = sshll.u32 [#allocation7], 4
      %s46 = int_to_ptr.vmem [resolvable:$true] %s45
      %51 = dma.hbm_to_vmem [thread:$0]  %s2, 256, %s46, [#allocation6], 128, 128, 8
    $region13: #{tpu_custom_call.1} parent=1 // pred_fallthru
      _
    // Predicated region
    $region14: #{tpu_custom_call.1} parent=1 // pred_check
      _
    $region15: #{tpu_custom_call.1} parent=1 // pred_check_branch
      %53 = sbr.rel (0) target = $region17
    $region16: #{tpu_custom_call.1} parent=1 // pred_region
      %s55 = ssub.s32 16384, 16384
      %56 = vsyncadd [#allocation9], %s55
      %s57 = sshll.u32 [#allocation8], 4
      %s58 = int_to_ptr.vmem [resolvable:$true] %s57
      %63 = dma.hbm_to_vmem [thread:$0]  %s3, 16384, %s58, [#allocation9], 64, 64, 4
    $region17: #{tpu_custom_call.1} parent=1 // pred_fallthru
      _
    // Predicated region
    $region18: #{tpu_custom_call.1} parent=1 // pred_check
      _
    $region19: #{tpu_custom_call.1} parent=1 // pred_check_branch
      %65 = sbr.rel (0) target = $region21
    $region20: #{tpu_custom_call.1} parent=1 // pred_region
      _
    $region21: #{tpu_custom_call.1} parent=1 // pred_fallthru
      _
    // Predicated region
    $region22: #{tpu_custom_call.1} parent=1 // pred_check
      _
    $region23: #{tpu_custom_call.1} parent=1 // pred_check_branch
      %67 = sbr.rel (0) target = $region25
    $region24: #{tpu_custom_call.1} parent=1 // pred_region
      %s69 = ssub.s32 1024, 1024
      %70 = vsyncadd [#allocation9], %s69
      %s71 = sshll.u32 [#allocation10], 4
      %s72 = int_to_ptr.vmem [resolvable:$true] %s71
      %77 = dma.hbm_to_vmem [thread:$0]  %s5, 1024, %s72, [#allocation9], 64, 64, 4
    $region25: #{tpu_custom_call.1} parent=1 // pred_fallthru
      _
    // Predicated region
    $region26: #{tpu_custom_call.1} parent=1 // pred_check
      _
    $region27: #{tpu_custom_call.1} parent=1 // pred_check_branch
      %79 = sbr.rel (0) target = $region29
    $region28: #{tpu_custom_call.1} parent=1 // pred_region
      _
    $region29: #{tpu_custom_call.1} parent=1 // pred_fallthru
      _
    // Predicated region
    $region30: #{tpu_custom_call.1} parent=1 // pred_check
      _
    $region31: #{tpu_custom_call.1} parent=1 // pred_check_branch
      %81 = sbr.rel (0) target = $region33
    $region32: #{tpu_custom_call.1} parent=1 // pred_region
      %82 = dma.done [#allocation3], 4608
    $region33: #{tpu_custom_call.1} parent=1 // pred_fallthru
      _
    // Predicated region
    $region34: #{tpu_custom_call.1} parent=1 // pred_check
      _
    $region35: #{tpu_custom_call.1} parent=1 // pred_check_branch
      %84 = sbr.rel (0) target = $region37
    $region36: #{tpu_custom_call.1} parent=1 // pred_region
      %85 = dma.done [#allocation6], 2304
    $region37: #{tpu_custom_call.1} parent=1 // pred_fallthru
      _
    // Predicated region
    $region38: #{tpu_custom_call.1} parent=1 // pred_check
      _
    $region39: #{tpu_custom_call.1} parent=1 // pred_check_branch
      %87 = sbr.rel (0) target = $region41
    $region40: #{tpu_custom_call.1} parent=1 // pred_region
      %88 = dma.done [#allocation6], 256
    $region41: #{tpu_custom_call.1} parent=1 // pred_fallthru
      _
    // Predicated region
    $region42: #{tpu_custom_call.1} parent=1 // pred_check
      _
    $region43: #{tpu_custom_call.1} parent=1 // pred_check_branch
      %90 = sbr.rel (0) target = $region45
    $region44: #{tpu_custom_call.1} parent=1 // pred_region
      %91 = dma.done [#allocation9], 16384
    $region45: #{tpu_custom_call.1} parent=1 // pred_fallthru
      _
    // Predicated region
    $region46: #{tpu_custom_call.1} parent=1 // pred_check
      _
    $region47: #{tpu_custom_call.1} parent=1 // pred_check_branch
      %93 = sbr.rel (0) target = $region49
    $region48: #{tpu_custom_call.1} parent=1 // pred_region
      %94 = dma.done [#allocation9], 1024
    $region49: #{tpu_custom_call.1} parent=1 // pred_fallthru
      _
    %v96 = vld [vmem:[#allocation5] sm:$0xff]
    %v97 = vld [vmem:[#allocation5 + $0x8] sm:$0xff]
    %v100 = vcombine.high %v96, %v96
    %v102 = vunpack.c.l.s4 1966171168
    %v103 = vunpack.c.0.s8 %v102
    %v104 = vlaneseq
    %v105 = vshrl.u32 %v104, 7
    %v106 = vsub.s32 %v103, %v105
    %v107 = vrot.slane %v96, %v106
    %v109 = vunpack.c.l.s4 1966171168
    %v110 = vunpack.c.0.s8 %v109
    %v111 = vlaneseq
    %v112 = vshrl.u32 %v111, 7
    %v113 = vsub.s32 %v110, %v112
    %v114 = vrot.slane %v100, %v113
    %v115 = vcombine.high %v107, %v107
    %v116 = vcombine.high %v114, %v114
    %v118 = vunpack.c.l.s4 1966171168
    %v119 = vunpack.c.0.s8 %v118
    %v120 = vlaneseq
    %v121 = vshrl.u32 %v120, 7
    %v122 = vsub.s32 %v119, %v121
    %v123 = vrot.slane %v107, %v122
    %v125 = vunpack.c.l.s4 1966171168
    %v126 = vunpack.c.0.s8 %v125
    %v127 = vlaneseq
    %v128 = vshrl.u32 %v127, 7
    %v129 = vsub.s32 %v126, %v128
    %v130 = vrot.slane %v114, %v129
    %v132 = vunpack.c.l.s4 1966171168
    %v133 = vunpack.c.0.s8 %v132
    %v134 = vlaneseq
    %v135 = vshrl.u32 %v134, 7
    %v136 = vsub.s32 %v133, %v135
    %v137 = vrot.slane %v115, %v136
    %v139 = vunpack.c.l.s4 1966171168
    %v140 = vunpack.c.0.s8 %v139
    %v141 = vlaneseq
    %v142 = vshrl.u32 %v141, 7
    %v143 = vsub.s32 %v140, %v142
    %v144 = vrot.slane %v116, %v143
    %v145 = vcombine.high %v123, %v123
    %v146 = vcombine.high %v130, %v130
    %v147 = vcombine.high %v137, %v137
    %v148 = vcombine.high %v144, %v144
    %v149 = vcombine.high %v97, %v97
    %v151 = vunpack.c.l.s4 1966171168
    %v152 = vunpack.c.0.s8 %v151
    %v153 = vlaneseq
    %v154 = vshrl.u32 %v153, 7
    %v155 = vsub.s32 %v152, %v154
    %v156 = vrot.slane %v97, %v155
    %v158 = vunpack.c.l.s4 1966171168
    %v159 = vunpack.c.0.s8 %v158
    %v160 = vlaneseq
    %v161 = vshrl.u32 %v160, 7
    %v162 = vsub.s32 %v159, %v161
    %v163 = vrot.slane %v149, %v162
    %v164 = vcombine.high %v156, %v156
    %v165 = vcombine.high %v163, %v163
    %v167 = vunpack.c.l.s4 1966171168
    %v168 = vunpack.c.0.s8 %v167
    %v169 = vlaneseq
    %v170 = vshrl.u32 %v169, 7
    %v171 = vsub.s32 %v168, %v170
    %v172 = vrot.slane %v156, %v171
    %v174 = vunpack.c.l.s4 1966171168
    %v175 = vunpack.c.0.s8 %v174
    %v176 = vlaneseq
    %v177 = vshrl.u32 %v176, 7
    %v178 = vsub.s32 %v175, %v177
    %v179 = vrot.slane %v163, %v178
    %v181 = vunpack.c.l.s4 1966171168
    %v182 = vunpack.c.0.s8 %v181
    %v183 = vlaneseq
    %v184 = vshrl.u32 %v183, 7
    %v185 = vsub.s32 %v182, %v184
    %v186 = vrot.slane %v164, %v185
    %v188 = vunpack.c.l.s4 1966171168
    %v189 = vunpack.c.0.s8 %v188
    %v190 = vlaneseq
    %v191 = vshrl.u32 %v190, 7
    %v192 = vsub.s32 %v189, %v191
    %v193 = vrot.slane %v165, %v192
    %v194 = vcombine.high %v172, %v172
    %v195 = vcombine.high %v179, %v179
    %v196 = vcombine.high %v186, %v186
    %v197 = vcombine.high %v193, %v193
    %s198 = scalar_lea.vmem [#allocation5], 16
    %v199 = vld [vmem:[%s198] sm:$0xff]
    %v200 = vld [vmem:[%s198 + $0x8] sm:$0xff]
    %v203 = vcombine.high %v199, %v199
    %v205 = vunpack.c.l.s4 1966171168
    %v206 = vunpack.c.0.s8 %v205
    %v207 = vlaneseq
    %v208 = vshrl.u32 %v207, 7
    %v209 = vsub.s32 %v206, %v208
    %v210 = vrot.slane %v199, %v209
    %v212 = vunpack.c.l.s4 1966171168
    %v213 = vunpack.c.0.s8 %v212
    %v214 = vlaneseq
    %v215 = vshrl.u32 %v214, 7
    %v216 = vsub.s32 %v213, %v215
    %v217 = vrot.slane %v203, %v216
    %v218 = vcombine.high %v210, %v210
    %v219 = vcombine.high %v217, %v217
    %v221 = vunpack.c.l.s4 1966171168
    %v222 = vunpack.c.0.s8 %v221
    %v223 = vlaneseq
    %v224 = vshrl.u32 %v223, 7
    %v225 = vsub.s32 %v222, %v224
    %v226 = vrot.slane %v210, %v225
    %v228 = vunpack.c.l.s4 1966171168
    %v229 = vunpack.c.0.s8 %v228
    %v230 = vlaneseq
    %v231 = vshrl.u32 %v230, 7
    %v232 = vsub.s32 %v229, %v231
    %v233 = vrot.slane %v217, %v232
    %v235 = vunpack.c.l.s4 1966171168
    %v236 = vunpack.c.0.s8 %v235
    %v237 = vlaneseq
    %v238 = vshrl.u32 %v237, 7
    %v239 = vsub.s32 %v236, %v238
    %v240 = vrot.slane %v218, %v239
    %v242 = vunpack.c.l.s4 1966171168
    %v243 = vunpack.c.0.s8 %v242
    %v244 = vlaneseq
    %v245 = vshrl.u32 %v244, 7
    %v246 = vsub.s32 %v243, %v245
    %v247 = vrot.slane %v219, %v246
    %v248 = vcombine.high %v226, %v226
    %v249 = vcombine.high %v233, %v233
    %v250 = vcombine.high %v240, %v240
    %v251 = vcombine.high %v247, %v247
    %v252 = vcombine.high %v200, %v200
    %v254 = vunpack.c.l.s4 1966171168
    %v255 = vunpack.c.0.s8 %v254
    %v256 = vlaneseq
    %v257 = vshrl.u32 %v256, 7
    %v258 = vsub.s32 %v255, %v257
    %v259 = vrot.slane %v200, %v258
    %v261 = vunpack.c.l.s4 1966171168
    %v262 = vunpack.c.0.s8 %v261
    %v263 = vlaneseq
    %v264 = vshrl.u32 %v263, 7
    %v265 = vsub.s32 %v262, %v264
    %v266 = vrot.slane %v252, %v265
    %v267 = vcombine.high %v259, %v259
    %v268 = vcombine.high %v266, %v266
    %v270 = vunpack.c.l.s4 1966171168
    %v271 = vunpack.c.0.s8 %v270
    %v272 = vlaneseq
    %v273 = vshrl.u32 %v272, 7
    %v274 = vsub.s32 %v271, %v273
    %v275 = vrot.slane %v259, %v274
    %v277 = vunpack.c.l.s4 1966171168
    %v278 = vunpack.c.0.s8 %v277
    %v279 = vlaneseq
    %v280 = vshrl.u32 %v279, 7
    %v281 = vsub.s32 %v278, %v280
    %v282 = vrot.slane %v266, %v281
    %v284 = vunpack.c.l.s4 1966171168
    %v285 = vunpack.c.0.s8 %v284
    %v286 = vlaneseq
    %v287 = vshrl.u32 %v286, 7
    %v288 = vsub.s32 %v285, %v287
    %v289 = vrot.slane %v267, %v288
    %v291 = vunpack.c.l.s4 1966171168
    %v292 = vunpack.c.0.s8 %v291
    %v293 = vlaneseq
    %v294 = vshrl.u32 %v293, 7
    %v295 = vsub.s32 %v292, %v294
    %v296 = vrot.slane %v268, %v295
    %v297 = vcombine.high %v275, %v275
    %v298 = vcombine.high %v282, %v282
    %v299 = vcombine.high %v289, %v289
    %v300 = vcombine.high %v296, %v296
    %s301 = scalar_lea.vmem [#allocation5], 32
    %v302 = vld [vmem:[%s301] sm:$0xff]
    %v303 = vld [vmem:[%s301 + $0x8] sm:$0xff]
    %v306 = vcombine.high %v302, %v302
    %v308 = vunpack.c.l.s4 1966171168
    %v309 = vunpack.c.0.s8 %v308
    %v310 = vlaneseq
    %v311 = vshrl.u32 %v310, 7
    %v312 = vsub.s32 %v309, %v311
    %v313 = vrot.slane %v302, %v312
    %v315 = vunpack.c.l.s4 1966171168
    %v316 = vunpack.c.0.s8 %v315
    %v317 = vlaneseq
    %v318 = vshrl.u32 %v317, 7
    %v319 = vsub.s32 %v316, %v318
    %v320 = vrot.slane %v306, %v319
    %v321 = vcombine.high %v313, %v313
    %v322 = vcombine.high %v320, %v320
    %v324 = vunpack.c.l.s4 1966171168
    %v325 = vunpack.c.0.s8 %v324
    %v326 = vlaneseq
    %v327 = vshrl.u32 %v326, 7
    %v328 = vsub.s32 %v325, %v327
    %v329 = vrot.slane %v313, %v328
    %v331 = vunpack.c.l.s4 1966171168
    %v332 = vunpack.c.0.s8 %v331
    %v333 = vlaneseq
    %v334 = vshrl.u32 %v333, 7
    %v335 = vsub.s32 %v332, %v334
    %v336 = vrot.slane %v320, %v335
    %v338 = vunpack.c.l.s4 1966171168
    %v339 = vunpack.c.0.s8 %v338
    %v340 = vlaneseq
    %v341 = vshrl.u32 %v340, 7
    %v342 = vsub.s32 %v339, %v341
    %v343 = vrot.slane %v321, %v342
    %v345 = vunpack.c.l.s4 1966171168
    %v346 = vunpack.c.0.s8 %v345
    %v347 = vlaneseq
    %v348 = vshrl.u32 %v347, 7
    %v349 = vsub.s32 %v346, %v348
    %v350 = vrot.slane %v322, %v349
    %v351 = vcombine.high %v329, %v329
    %v352 = vcombine.high %v336, %v336
    %v353 = vcombine.high %v343, %v343
    %v354 = vcombine.high %v350, %v350
    %v355 = vcombine.high %v303, %v303
    %v357 = vunpack.c.l.s4 1966171168
    %v358 = vunpack.c.0.s8 %v357
    %v359 = vlaneseq
    %v360 = vshrl.u32 %v359, 7
    %v361 = vsub.s32 %v358, %v360
    %v362 = vrot.slane %v303, %v361
    %v364 = vunpack.c.l.s4 1966171168
    %v365 = vunpack.c.0.s8 %v364
    %v366 = vlaneseq
    %v367 = vshrl.u32 %v366, 7
    %v368 = vsub.s32 %v365, %v367
    %v369 = vrot.slane %v355, %v368
    %v370 = vcombine.high %v362, %v362
    %v371 = vcombine.high %v369, %v369
    %v373 = vunpack.c.l.s4 1966171168
    %v374 = vunpack.c.0.s8 %v373
    %v375 = vlaneseq
    %v376 = vshrl.u32 %v375, 7
    %v377 = vsub.s32 %v374, %v376
    %v378 = vrot.slane %v362, %v377
    %v380 = vunpack.c.l.s4 1966171168
    %v381 = vunpack.c.0.s8 %v380
    %v382 = vlaneseq
    %v383 = vshrl.u32 %v382, 7
    %v384 = vsub.s32 %v381, %v383
    %v385 = vrot.slane %v369, %v384
    %v387 = vunpack.c.l.s4 1966171168
    %v388 = vunpack.c.0.s8 %v387
    %v389 = vlaneseq
    %v390 = vshrl.u32 %v389, 7
    %v391 = vsub.s32 %v388, %v390
    %v392 = vrot.slane %v370, %v391
    %v394 = vunpack.c.l.s4 1966171168
    %v395 = vunpack.c.0.s8 %v394
    %v396 = vlaneseq
    %v397 = vshrl.u32 %v396, 7
    %v398 = vsub.s32 %v395, %v397
    %v399 = vrot.slane %v371, %v398
    %v400 = vcombine.high %v378, %v378
    %v401 = vcombine.high %v385, %v385
    %v402 = vcombine.high %v392, %v392
    %v403 = vcombine.high %v399, %v399
    %s404 = scalar_lea.vmem [#allocation5], 48
    %v405 = vld [vmem:[%s404] sm:$0xff]
    %v406 = vld [vmem:[%s404 + $0x8] sm:$0xff]
    %v409 = vcombine.high %v405, %v405
    %v411 = vunpack.c.l.s4 1966171168
    %v412 = vunpack.c.0.s8 %v411
    %v413 = vlaneseq
    %v414 = vshrl.u32 %v413, 7
    %v415 = vsub.s32 %v412, %v414
    %v416 = vrot.slane %v405, %v415
    %v418 = vunpack.c.l.s4 1966171168
    %v419 = vunpack.c.0.s8 %v418
    %v420 = vlaneseq
    %v421 = vshrl.u32 %v420, 7
    %v422 = vsub.s32 %v419, %v421
    %v423 = vrot.slane %v409, %v422
    %v424 = vcombine.high %v416, %v416
    %v425 = vcombine.high %v423, %v423
    %v427 = vunpack.c.l.s4 1966171168
    %v428 = vunpack.c.0.s8 %v427
    %v429 = vlaneseq
    %v430 = vshrl.u32 %v429, 7
    %v431 = vsub.s32 %v428, %v430
    %v432 = vrot.slane %v416, %v431
    %v434 = vunpack.c.l.s4 1966171168
    %v435 = vunpack.c.0.s8 %v434
    %v436 = vlaneseq
    %v437 = vshrl.u32 %v436, 7
    %v438 = vsub.s32 %v435, %v437
    %v439 = vrot.slane %v423, %v438
    %v441 = vunpack.c.l.s4 1966171168
    %v442 = vunpack.c.0.s8 %v441
    %v443 = vlaneseq
    %v444 = vshrl.u32 %v443, 7
    %v445 = vsub.s32 %v442, %v444
    %v446 = vrot.slane %v424, %v445
    %v448 = vunpack.c.l.s4 1966171168
    %v449 = vunpack.c.0.s8 %v448
    %v450 = vlaneseq
    %v451 = vshrl.u32 %v450, 7
    %v452 = vsub.s32 %v449, %v451
    %v453 = vrot.slane %v425, %v452
    %v454 = vcombine.high %v432, %v432
    %v455 = vcombine.high %v439, %v439
    %v456 = vcombine.high %v446, %v446
    %v457 = vcombine.high %v453, %v453
    %v458 = vcombine.high %v406, %v406
    %v460 = vunpack.c.l.s4 1966171168
    %v461 = vunpack.c.0.s8 %v460
    %v462 = vlaneseq
    %v463 = vshrl.u32 %v462, 7
    %v464 = vsub.s32 %v461, %v463
    %v465 = vrot.slane %v406, %v464
    %v467 = vunpack.c.l.s4 1966171168
    %v468 = vunpack.c.0.s8 %v467
    %v469 = vlaneseq
    %v470 = vshrl.u32 %v469, 7
    %v471 = vsub.s32 %v468, %v470
    %v472 = vrot.slane %v458, %v471
    %v473 = vcombine.high %v465, %v465
    %v474 = vcombine.high %v472, %v472
    %v476 = vunpack.c.l.s4 1966171168
    %v477 = vunpack.c.0.s8 %v476
    %v478 = vlaneseq
    %v479 = vshrl.u32 %v478, 7
    %v480 = vsub.s32 %v477, %v479
    %v481 = vrot.slane %v465, %v480
    %v483 = vunpack.c.l.s4 1966171168
    %v484 = vunpack.c.0.s8 %v483
    %v485 = vlaneseq
    %v486 = vshrl.u32 %v485, 7
    %v487 = vsub.s32 %v484, %v486
    %v488 = vrot.slane %v472, %v487
    %v490 = vunpack.c.l.s4 1966171168
    %v491 = vunpack.c.0.s8 %v490
    %v492 = vlaneseq
    %v493 = vshrl.u32 %v492, 7
    %v494 = vsub.s32 %v491, %v493
    %v495 = vrot.slane %v473, %v494
    %v497 = vunpack.c.l.s4 1966171168
    %v498 = vunpack.c.0.s8 %v497
    %v499 = vlaneseq
    %v500 = vshrl.u32 %v499, 7
    %v501 = vsub.s32 %v498, %v500
    %v502 = vrot.slane %v474, %v501
    %v503 = vcombine.high %v481, %v481
    %v504 = vcombine.high %v488, %v488
    %v505 = vcombine.high %v495, %v495
    %v506 = vcombine.high %v502, %v502
    %s507 = scalar_lea.vmem [#allocation5], 64
    %v508 = vld [vmem:[%s507] sm:$0xff]
    %v509 = vld [vmem:[%s507 + $0x8] sm:$0xff]
    %v512 = vcombine.high %v508, %v508
    %v514 = vunpack.c.l.s4 1966171168
    %v515 = vunpack.c.0.s8 %v514
    %v516 = vlaneseq
    %v517 = vshrl.u32 %v516, 7
    %v518 = vsub.s32 %v515, %v517
    %v519 = vrot.slane %v508, %v518
    %v521 = vunpack.c.l.s4 1966171168
    %v522 = vunpack.c.0.s8 %v521
    %v523 = vlaneseq
    %v524 = vshrl.u32 %v523, 7
    %v525 = vsub.s32 %v522, %v524
    %v526 = vrot.slane %v512, %v525
    %v527 = vcombine.high %v519, %v519
    %v528 = vcombine.high %v526, %v526
    %v530 = vunpack.c.l.s4 1966171168
    %v531 = vunpack.c.0.s8 %v530
    %v532 = vlaneseq
    %v533 = vshrl.u32 %v532, 7
    %v534 = vsub.s32 %v531, %v533
    %v535 = vrot.slane %v519, %v534
    %v537 = vunpack.c.l.s4 1966171168
    %v538 = vunpack.c.0.s8 %v537
    %v539 = vlaneseq
    %v540 = vshrl.u32 %v539, 7
    %v541 = vsub.s32 %v538, %v540
    %v542 = vrot.slane %v526, %v541
    %v544 = vunpack.c.l.s4 1966171168
    %v545 = vunpack.c.0.s8 %v544
    %v546 = vlaneseq
    %v547 = vshrl.u32 %v546, 7
    %v548 = vsub.s32 %v545, %v547
    %v549 = vrot.slane %v527, %v548
    %v551 = vunpack.c.l.s4 1966171168
    %v552 = vunpack.c.0.s8 %v551
    %v553 = vlaneseq
    %v554 = vshrl.u32 %v553, 7
    %v555 = vsub.s32 %v552, %v554
    %v556 = vrot.slane %v528, %v555
    %v557 = vcombine.high %v535, %v535
    %v558 = vcombine.high %v542, %v542
    %v559 = vcombine.high %v549, %v549
    %v560 = vcombine.high %v556, %v556
    %v561 = vcombine.high %v509, %v509
    %v563 = vunpack.c.l.s4 1966171168
    %v564 = vunpack.c.0.s8 %v563
    %v565 = vlaneseq
    %v566 = vshrl.u32 %v565, 7
    %v567 = vsub.s32 %v564, %v566
    %v568 = vrot.slane %v509, %v567
    %v570 = vunpack.c.l.s4 1966171168
    %v571 = vunpack.c.0.s8 %v570
    %v572 = vlaneseq
    %v573 = vshrl.u32 %v572, 7
    %v574 = vsub.s32 %v571, %v573
    %v575 = vrot.slane %v561, %v574
    %v576 = vcombine.high %v568, %v568
    %v577 = vcombine.high %v575, %v575
    %v579 = vunpack.c.l.s4 1966171168
    %v580 = vunpack.c.0.s8 %v579
    %v581 = vlaneseq
    %v582 = vshrl.u32 %v581, 7
    %v583 = vsub.s32 %v580, %v582
    %v584 = vrot.slane %v568, %v583
    %v586 = vunpack.c.l.s4 1966171168
    %v587 = vunpack.c.0.s8 %v586
    %v588 = vlaneseq
    %v589 = vshrl.u32 %v588, 7
    %v590 = vsub.s32 %v587, %v589
    %v591 = vrot.slane %v575, %v590
    %v593 = vunpack.c.l.s4 1966171168
    %v594 = vunpack.c.0.s8 %v593
    %v595 = vlaneseq
    %v596 = vshrl.u32 %v595, 7
    %v597 = vsub.s32 %v594, %v596
    %v598 = vrot.slane %v576, %v597
    %v600 = vunpack.c.l.s4 1966171168
    %v601 = vunpack.c.0.s8 %v600
    %v602 = vlaneseq
    %v603 = vshrl.u32 %v602, 7
    %v604 = vsub.s32 %v601, %v603
    %v605 = vrot.slane %v577, %v604
    %v606 = vcombine.high %v584, %v584
    %v607 = vcombine.high %v591, %v591
    %v608 = vcombine.high %v598, %v598
    %v609 = vcombine.high %v605, %v605
    %s610 = scalar_lea.vmem [#allocation5], 80
    %v611 = vld [vmem:[%s610] sm:$0xff]
    %v612 = vld [vmem:[%s610 + $0x8] sm:$0xff]
    %v615 = vcombine.high %v611, %v611
    %v617 = vunpack.c.l.s4 1966171168
    %v618 = vunpack.c.0.s8 %v617
    %v619 = vlaneseq
    %v620 = vshrl.u32 %v619, 7
    %v621 = vsub.s32 %v618, %v620
    %v622 = vrot.slane %v611, %v621
    %v624 = vunpack.c.l.s4 1966171168
    %v625 = vunpack.c.0.s8 %v624
    %v626 = vlaneseq
    %v627 = vshrl.u32 %v626, 7
    %v628 = vsub.s32 %v625, %v627
    %v629 = vrot.slane %v615, %v628
    %v630 = vcombine.high %v622, %v622
    %v631 = vcombine.high %v629, %v629
    %v633 = vunpack.c.l.s4 1966171168
    %v634 = vunpack.c.0.s8 %v633
    %v635 = vlaneseq
    %v636 = vshrl.u32 %v635, 7
    %v637 = vsub.s32 %v634, %v636
    %v638 = vrot.slane %v622, %v637
    %v640 = vunpack.c.l.s4 1966171168
    %v641 = vunpack.c.0.s8 %v640
    %v642 = vlaneseq
    %v643 = vshrl.u32 %v642, 7
    %v644 = vsub.s32 %v641, %v643
    %v645 = vrot.slane %v629, %v644
    %v647 = vunpack.c.l.s4 1966171168
    %v648 = vunpack.c.0.s8 %v647
    %v649 = vlaneseq
    %v650 = vshrl.u32 %v649, 7
    %v651 = vsub.s32 %v648, %v650
    %v652 = vrot.slane %v630, %v651
    %v654 = vunpack.c.l.s4 1966171168
    %v655 = vunpack.c.0.s8 %v654
    %v656 = vlaneseq
    %v657 = vshrl.u32 %v656, 7
    %v658 = vsub.s32 %v655, %v657
    %v659 = vrot.slane %v631, %v658
    %v660 = vcombine.high %v638, %v638
    %v661 = vcombine.high %v645, %v645
    %v662 = vcombine.high %v652, %v652
    %v663 = vcombine.high %v659, %v659
    %v664 = vcombine.high %v612, %v612
    %v666 = vunpack.c.l.s4 1966171168
    %v667 = vunpack.c.0.s8 %v666
    %v668 = vlaneseq
    %v669 = vshrl.u32 %v668, 7
    %v670 = vsub.s32 %v667, %v669
    %v671 = vrot.slane %v612, %v670
    %v673 = vunpack.c.l.s4 1966171168
    %v674 = vunpack.c.0.s8 %v673
    %v675 = vlaneseq
    %v676 = vshrl.u32 %v675, 7
    %v677 = vsub.s32 %v674, %v676
    %v678 = vrot.slane %v664, %v677
    %v679 = vcombine.high %v671, %v671
    %v680 = vcombine.high %v678, %v678
    %v682 = vunpack.c.l.s4 1966171168
    %v683 = vunpack.c.0.s8 %v682
    %v684 = vlaneseq
    %v685 = vshrl.u32 %v684, 7
    %v686 = vsub.s32 %v683, %v685
    %v687 = vrot.slane %v671, %v686
    %v689 = vunpack.c.l.s4 1966171168
    %v690 = vunpack.c.0.s8 %v689
    %v691 = vlaneseq
    %v692 = vshrl.u32 %v691, 7
    %v693 = vsub.s32 %v690, %v692
    %v694 = vrot.slane %v678, %v693
    %v696 = vunpack.c.l.s4 1966171168
    %v697 = vunpack.c.0.s8 %v696
    %v698 = vlaneseq
    %v699 = vshrl.u32 %v698, 7
    %v700 = vsub.s32 %v697, %v699
    %v701 = vrot.slane %v679, %v700
    %v703 = vunpack.c.l.s4 1966171168
    %v704 = vunpack.c.0.s8 %v703
    %v705 = vlaneseq
    %v706 = vshrl.u32 %v705, 7
    %v707 = vsub.s32 %v704, %v706
    %v708 = vrot.slane %v680, %v707
    %v709 = vcombine.high %v687, %v687
    %v710 = vcombine.high %v694, %v694
    %v711 = vcombine.high %v701, %v701
    %v712 = vcombine.high %v708, %v708
    %s713 = scalar_lea.vmem [#allocation5], 96
    %v714 = vld [vmem:[%s713] sm:$0xff]
    %v715 = vld [vmem:[%s713 + $0x8] sm:$0xff]
    %v718 = vcombine.high %v714, %v714
    %v720 = vunpack.c.l.s4 1966171168
    %v721 = vunpack.c.0.s8 %v720
    %v722 = vlaneseq
    %v723 = vshrl.u32 %v722, 7
    %v724 = vsub.s32 %v721, %v723
    %v725 = vrot.slane %v714, %v724
    %v727 = vunpack.c.l.s4 1966171168
    %v728 = vunpack.c.0.s8 %v727
    %v729 = vlaneseq
    %v730 = vshrl.u32 %v729, 7
    %v731 = vsub.s32 %v728, %v730
    %v732 = vrot.slane %v718, %v731
    %v733 = vcombine.high %v725, %v725
    %v734 = vcombine.high %v732, %v732
    %v736 = vunpack.c.l.s4 1966171168
    %v737 = vunpack.c.0.s8 %v736
    %v738 = vlaneseq
    %v739 = vshrl.u32 %v738, 7
    %v740 = vsub.s32 %v737, %v739
    %v741 = vrot.slane %v725, %v740
    %v743 = vunpack.c.l.s4 1966171168
    %v744 = vunpack.c.0.s8 %v743
    %v745 = vlaneseq
    %v746 = vshrl.u32 %v745, 7
    %v747 = vsub.s32 %v744, %v746
    %v748 = vrot.slane %v732, %v747
    %v750 = vunpack.c.l.s4 1966171168
    %v751 = vunpack.c.0.s8 %v750
    %v752 = vlaneseq
    %v753 = vshrl.u32 %v752, 7
    %v754 = vsub.s32 %v751, %v753
    %v755 = vrot.slane %v733, %v754
    %v757 = vunpack.c.l.s4 1966171168
    %v758 = vunpack.c.0.s8 %v757
    %v759 = vlaneseq
    %v760 = vshrl.u32 %v759, 7
    %v761 = vsub.s32 %v758, %v760
    %v762 = vrot.slane %v734, %v761
    %v763 = vcombine.high %v741, %v741
    %v764 = vcombine.high %v748, %v748
    %v765 = vcombine.high %v755, %v755
    %v766 = vcombine.high %v762, %v762
    %v767 = vcombine.high %v715, %v715
    %v769 = vunpack.c.l.s4 1966171168
    %v770 = vunpack.c.0.s8 %v769
    %v771 = vlaneseq
    %v772 = vshrl.u32 %v771, 7
    %v773 = vsub.s32 %v770, %v772
    %v774 = vrot.slane %v715, %v773
    %v776 = vunpack.c.l.s4 1966171168
    %v777 = vunpack.c.0.s8 %v776
    %v778 = vlaneseq
    %v779 = vshrl.u32 %v778, 7
    %v780 = vsub.s32 %v777, %v779
    %v781 = vrot.slane %v767, %v780
    %v782 = vcombine.high %v774, %v774
    %v783 = vcombine.high %v781, %v781
    %v785 = vunpack.c.l.s4 1966171168
    %v786 = vunpack.c.0.s8 %v785
    %v787 = vlaneseq
    %v788 = vshrl.u32 %v787, 7
    %v789 = vsub.s32 %v786, %v788
    %v790 = vrot.slane %v774, %v789
    %v792 = vunpack.c.l.s4 1966171168
    %v793 = vunpack.c.0.s8 %v792
    %v794 = vlaneseq
    %v795 = vshrl.u32 %v794, 7
    %v796 = vsub.s32 %v793, %v795
    %v797 = vrot.slane %v781, %v796
    %v799 = vunpack.c.l.s4 1966171168
    %v800 = vunpack.c.0.s8 %v799
    %v801 = vlaneseq
    %v802 = vshrl.u32 %v801, 7
    %v803 = vsub.s32 %v800, %v802
    %v804 = vrot.slane %v782, %v803
    %v806 = vunpack.c.l.s4 1966171168
    %v807 = vunpack.c.0.s8 %v806
    %v808 = vlaneseq
    %v809 = vshrl.u32 %v808, 7
    %v810 = vsub.s32 %v807, %v809
    %v811 = vrot.slane %v783, %v810
    %v812 = vcombine.high %v790, %v790
    %v813 = vcombine.high %v797, %v797
    %v814 = vcombine.high %v804, %v804
    %v815 = vcombine.high %v811, %v811
    %s816 = scalar_lea.vmem [#allocation5], 112
    %v817 = vld [vmem:[%s816] sm:$0xff]
    %v818 = vld [vmem:[%s816 + $0x8] sm:$0xff]
    %v821 = vcombine.high %v817, %v817
    %v823 = vunpack.c.l.s4 1966171168
    %v824 = vunpack.c.0.s8 %v823
    %v825 = vlaneseq
    %v826 = vshrl.u32 %v825, 7
    %v827 = vsub.s32 %v824, %v826
    %v828 = vrot.slane %v817, %v827
    %v830 = vunpack.c.l.s4 1966171168
    %v831 = vunpack.c.0.s8 %v830
    %v832 = vlaneseq
    %v833 = vshrl.u32 %v832, 7
    %v834 = vsub.s32 %v831, %v833
    %v835 = vrot.slane %v821, %v834
    %v836 = vcombine.high %v828, %v828
    %v837 = vcombine.high %v835, %v835
    %v839 = vunpack.c.l.s4 1966171168
    %v840 = vunpack.c.0.s8 %v839
    %v841 = vlaneseq
    %v842 = vshrl.u32 %v841, 7
    %v843 = vsub.s32 %v840, %v842
    %v844 = vrot.slane %v828, %v843
    %v846 = vunpack.c.l.s4 1966171168
    %v847 = vunpack.c.0.s8 %v846
    %v848 = vlaneseq
    %v849 = vshrl.u32 %v848, 7
    %v850 = vsub.s32 %v847, %v849
    %v851 = vrot.slane %v835, %v850
    %v853 = vunpack.c.l.s4 1966171168
    %v854 = vunpack.c.0.s8 %v853
    %v855 = vlaneseq
    %v856 = vshrl.u32 %v855, 7
    %v857 = vsub.s32 %v854, %v856
    %v858 = vrot.slane %v836, %v857
    %v860 = vunpack.c.l.s4 1966171168
    %v861 = vunpack.c.0.s8 %v860
    %v862 = vlaneseq
    %v863 = vshrl.u32 %v862, 7
    %v864 = vsub.s32 %v861, %v863
    %v865 = vrot.slane %v837, %v864
    %v866 = vcombine.high %v844, %v844
    %v867 = vcombine.high %v851, %v851
    %v868 = vcombine.high %v858, %v858
    %v869 = vcombine.high %v865, %v865
    %v870 = vcombine.high %v818, %v818
    %v872 = vunpack.c.l.s4 1966171168
    %v873 = vunpack.c.0.s8 %v872
    %v874 = vlaneseq
    %v875 = vshrl.u32 %v874, 7
    %v876 = vsub.s32 %v873, %v875
    %v877 = vrot.slane %v818, %v876
    %v879 = vunpack.c.l.s4 1966171168
    %v880 = vunpack.c.0.s8 %v879
    %v881 = vlaneseq
    %v882 = vshrl.u32 %v881, 7
    %v883 = vsub.s32 %v880, %v882
    %v884 = vrot.slane %v870, %v883
    %v885 = vcombine.high %v877, %v877
    %v886 = vcombine.high %v884, %v884
    %v888 = vunpack.c.l.s4 1966171168
    %v889 = vunpack.c.0.s8 %v888
    %v890 = vlaneseq
    %v891 = vshrl.u32 %v890, 7
    %v892 = vsub.s32 %v889, %v891
    %v893 = vrot.slane %v877, %v892
    %v895 = vunpack.c.l.s4 1966171168
    %v896 = vunpack.c.0.s8 %v895
    %v897 = vlaneseq
    %v898 = vshrl.u32 %v897, 7
    %v899 = vsub.s32 %v896, %v898
    %v900 = vrot.slane %v884, %v899
    %v902 = vunpack.c.l.s4 1966171168
    %v903 = vunpack.c.0.s8 %v902
    %v904 = vlaneseq
    %v905 = vshrl.u32 %v904, 7
    %v906 = vsub.s32 %v903, %v905
    %v907 = vrot.slane %v885, %v906
    %v909 = vunpack.c.l.s4 1966171168
    %v910 = vunpack.c.0.s8 %v909
    %v911 = vlaneseq
    %v912 = vshrl.u32 %v911, 7
    %v913 = vsub.s32 %v910, %v912
    %v914 = vrot.slane %v886, %v913
    %v915 = vcombine.high %v893, %v893
    %v916 = vcombine.high %v900, %v900
    %v917 = vcombine.high %v907, %v907
    %v918 = vcombine.high %v914, %v914
    %s919 = scalar_lea.vmem [#allocation5], 128
    %v920 = vld [vmem:[%s919] sm:$0xff]
    %v921 = vld [vmem:[%s919 + $0x8] sm:$0xff]
    %v924 = vcombine.high %v920, %v920
    %v926 = vunpack.c.l.s4 1966171168
    %v927 = vunpack.c.0.s8 %v926
    %v928 = vlaneseq
    %v929 = vshrl.u32 %v928, 7
    %v930 = vsub.s32 %v927, %v929
    %v931 = vrot.slane %v920, %v930
    %v933 = vunpack.c.l.s4 1966171168
    %v934 = vunpack.c.0.s8 %v933
    %v935 = vlaneseq
    %v936 = vshrl.u32 %v935, 7
    %v937 = vsub.s32 %v934, %v936
    %v938 = vrot.slane %v924, %v937
    %v939 = vcombine.high %v931, %v931
    %v940 = vcombine.high %v938, %v938
    %v942 = vunpack.c.l.s4 1966171168
    %v943 = vunpack.c.0.s8 %v942
    %v944 = vlaneseq
    %v945 = vshrl.u32 %v944, 7
    %v946 = vsub.s32 %v943, %v945
    %v947 = vrot.slane %v931, %v946
    %v949 = vunpack.c.l.s4 1966171168
    %v950 = vunpack.c.0.s8 %v949
    %v951 = vlaneseq
    %v952 = vshrl.u32 %v951, 7
    %v953 = vsub.s32 %v950, %v952
    %v954 = vrot.slane %v938, %v953
    %v956 = vunpack.c.l.s4 1966171168
    %v957 = vunpack.c.0.s8 %v956
    %v958 = vlaneseq
    %v959 = vshrl.u32 %v958, 7
    %v960 = vsub.s32 %v957, %v959
    %v961 = vrot.slane %v939, %v960
    %v963 = vunpack.c.l.s4 1966171168
    %v964 = vunpack.c.0.s8 %v963
    %v965 = vlaneseq
    %v966 = vshrl.u32 %v965, 7
    %v967 = vsub.s32 %v964, %v966
    %v968 = vrot.slane %v940, %v967
    %v969 = vcombine.high %v947, %v947
    %v970 = vcombine.high %v954, %v954
    %v971 = vcombine.high %v961, %v961
    %v972 = vcombine.high %v968, %v968
    %v973 = vcombine.high %v921, %v921
    %v975 = vunpack.c.l.s4 1966171168
    %v976 = vunpack.c.0.s8 %v975
    %v977 = vlaneseq
    %v978 = vshrl.u32 %v977, 7
    %v979 = vsub.s32 %v976, %v978
    %v980 = vrot.slane %v921, %v979
    %v982 = vunpack.c.l.s4 1966171168
    %v983 = vunpack.c.0.s8 %v982
    %v984 = vlaneseq
    %v985 = vshrl.u32 %v984, 7
    %v986 = vsub.s32 %v983, %v985
    %v987 = vrot.slane %v973, %v986
    %v988 = vcombine.high %v980, %v980
    %v989 = vcombine.high %v987, %v987
    %v991 = vunpack.c.l.s4 1966171168
    %v992 = vunpack.c.0.s8 %v991
    %v993 = vlaneseq
    %v994 = vshrl.u32 %v993, 7
    %v995 = vsub.s32 %v992, %v994
    %v996 = vrot.slane %v980, %v995
    %v998 = vunpack.c.l.s4 1966171168
    %v999 = vunpack.c.0.s8 %v998
    %v1000 = vlaneseq
    %v1001 = vshrl.u32 %v1000, 7
    %v1002 = vsub.s32 %v999, %v1001
    %v1003 = vrot.slane %v987, %v1002
    %v1005 = vunpack.c.l.s4 1966171168
    %v1006 = vunpack.c.0.s8 %v1005
    %v1007 = vlaneseq
    %v1008 = vshrl.u32 %v1007, 7
    %v1009 = vsub.s32 %v1006, %v1008
    %v1010 = vrot.slane %v988, %v1009
    %v1012 = vunpack.c.l.s4 1966171168
    %v1013 = vunpack.c.0.s8 %v1012
    %v1014 = vlaneseq
    %v1015 = vshrl.u32 %v1014, 7
    %v1016 = vsub.s32 %v1013, %v1015
    %v1017 = vrot.slane %v989, %v1016
    %v1018 = vcombine.high %v996, %v996
    %v1019 = vcombine.high %v1003, %v1003
    %v1020 = vcombine.high %v1010, %v1010
    %v1021 = vcombine.high %v1017, %v1017
    %v1022 = vld [vmem:[#allocation7] sm:$0xff]
    %v1023 = vld [vmem:[#allocation7 + $0x8] sm:$0xff]
    %v1026 = vcombine.high %v1022, %v1022
    %v1028 = vunpack.c.l.s4 1966171168
    %v1029 = vunpack.c.0.s8 %v1028
    %v1030 = vlaneseq
    %v1031 = vshrl.u32 %v1030, 7
    %v1032 = vsub.s32 %v1029, %v1031
    %v1033 = vrot.slane %v1022, %v1032
    %v1035 = vunpack.c.l.s4 1966171168
    %v1036 = vunpack.c.0.s8 %v1035
    %v1037 = vlaneseq
    %v1038 = vshrl.u32 %v1037, 7
    %v1039 = vsub.s32 %v1036, %v1038
    %v1040 = vrot.slane %v1026, %v1039
    %v1041 = vcombine.high %v1033, %v1033
    %v1042 = vcombine.high %v1040, %v1040
    %v1044 = vunpack.c.l.s4 1966171168
    %v1045 = vunpack.c.0.s8 %v1044
    %v1046 = vlaneseq
    %v1047 = vshrl.u32 %v1046, 7
    %v1048 = vsub.s32 %v1045, %v1047
    %v1049 = vrot.slane %v1033, %v1048
    %v1051 = vunpack.c.l.s4 1966171168
    %v1052 = vunpack.c.0.s8 %v1051
    %v1053 = vlaneseq
    %v1054 = vshrl.u32 %v1053, 7
    %v1055 = vsub.s32 %v1052, %v1054
    %v1056 = vrot.slane %v1040, %v1055
    %v1058 = vunpack.c.l.s4 1966171168
    %v1059 = vunpack.c.0.s8 %v1058
    %v1060 = vlaneseq
    %v1061 = vshrl.u32 %v1060, 7
    %v1062 = vsub.s32 %v1059, %v1061
    %v1063 = vrot.slane %v1041, %v1062
    %v1065 = vunpack.c.l.s4 1966171168
    %v1066 = vunpack.c.0.s8 %v1065
    %v1067 = vlaneseq
    %v1068 = vshrl.u32 %v1067, 7
    %v1069 = vsub.s32 %v1066, %v1068
    %v1070 = vrot.slane %v1042, %v1069
    %v1071 = vcombine.high %v1049, %v1049
    %v1072 = vcombine.high %v1056, %v1056
    %v1073 = vcombine.high %v1063, %v1063
    %v1074 = vcombine.high %v1070, %v1070
    %v1075 = vcombine.high %v1023, %v1023
    %v1077 = vunpack.c.l.s4 1966171168
    %v1078 = vunpack.c.0.s8 %v1077
    %v1079 = vlaneseq
    %v1080 = vshrl.u32 %v1079, 7
    %v1081 = vsub.s32 %v1078, %v1080
    %v1082 = vrot.slane %v1023, %v1081
    %v1084 = vunpack.c.l.s4 1966171168
    %v1085 = vunpack.c.0.s8 %v1084
    %v1086 = vlaneseq
    %v1087 = vshrl.u32 %v1086, 7
    %v1088 = vsub.s32 %v1085, %v1087
    %v1089 = vrot.slane %v1075, %v1088
    %v1090 = vcombine.high %v1082, %v1082
    %v1091 = vcombine.high %v1089, %v1089
    %v1093 = vunpack.c.l.s4 1966171168
    %v1094 = vunpack.c.0.s8 %v1093
    %v1095 = vlaneseq
    %v1096 = vshrl.u32 %v1095, 7
    %v1097 = vsub.s32 %v1094, %v1096
    %v1098 = vrot.slane %v1082, %v1097
    %v1100 = vunpack.c.l.s4 1966171168
    %v1101 = vunpack.c.0.s8 %v1100
    %v1102 = vlaneseq
    %v1103 = vshrl.u32 %v1102, 7
    %v1104 = vsub.s32 %v1101, %v1103
    %v1105 = vrot.slane %v1089, %v1104
    %v1107 = vunpack.c.l.s4 1966171168
    %v1108 = vunpack.c.0.s8 %v1107
    %v1109 = vlaneseq
    %v1110 = vshrl.u32 %v1109, 7
    %v1111 = vsub.s32 %v1108, %v1110
    %v1112 = vrot.slane %v1090, %v1111
    %v1114 = vunpack.c.l.s4 1966171168
    %v1115 = vunpack.c.0.s8 %v1114
    %v1116 = vlaneseq
    %v1117 = vshrl.u32 %v1116, 7
    %v1118 = vsub.s32 %v1115, %v1117
    %v1119 = vrot.slane %v1091, %v1118
    %v1120 = vcombine.high %v1098, %v1098
    %v1121 = vcombine.high %v1105, %v1105
    %v1122 = vcombine.high %v1112, %v1112
    %v1123 = vcombine.high %v1119, %v1119
    %v1124 = vld [vmem:[#allocation2] sm:$0xff]
    %v1125 = vlaneseq
    %v1126 = vshrl.u32 %v1125, 7
    %v1127 = vsub.s32 0, %v1126
    %v1128 = vrot.slane %v123, %v1127
    %v1129 = vlaneseq
    %v1130 = vshrl.u32 %v1129, 7
    %v1131 = vsub.s32 0, %v1130
    %v1132 = vrot.slane %v137, %v1131
    %v1133 = vlaneseq
    %v1134 = vshrl.u32 %v1133, 7
    %v1135 = vsub.s32 0, %v1134
    %v1136 = vrot.slane %v145, %v1135
    %v1137 = vlaneseq
    %v1138 = vshrl.u32 %v1137, 7
    %v1139 = vsub.s32 0, %v1138
    %v1140 = vrot.slane %v147, %v1139
    %v1141 = vlaneseq
    %v1142 = vshrl.u32 %v1141, 7
    %v1143 = vsub.s32 0, %v1142
    %v1144 = vrot.slane %v130, %v1143
    %v1145 = vlaneseq
    %v1146 = vshrl.u32 %v1145, 7
    %v1147 = vsub.s32 0, %v1146
    %v1148 = vrot.slane %v144, %v1147
    %v1149 = vlaneseq
    %v1150 = vshrl.u32 %v1149, 7
    %v1151 = vsub.s32 0, %v1150
    %v1152 = vrot.slane %v146, %v1151
    %v1153 = vlaneseq
    %v1154 = vshrl.u32 %v1153, 7
    %v1155 = vsub.s32 0, %v1154
    %v1156 = vrot.slane %v148, %v1155
    %v1157 = vlaneseq
    %v1158 = vshrl.u32 %v1157, 7
    %v1159 = vsub.s32 0, %v1158
    %v1160 = vrot.slane %v172, %v1159
    %v1161 = vlaneseq
    %v1162 = vshrl.u32 %v1161, 7
    %v1163 = vsub.s32 0, %v1162
    %v1164 = vrot.slane %v186, %v1163
    %v1165 = vlaneseq
    %v1166 = vshrl.u32 %v1165, 7
    %v1167 = vsub.s32 0, %v1166
    %v1168 = vrot.slane %v194, %v1167
    %v1169 = vlaneseq
    %v1170 = vshrl.u32 %v1169, 7
    %v1171 = vsub.s32 0, %v1170
    %v1172 = vrot.slane %v196, %v1171
    %v1173 = vlaneseq
    %v1174 = vshrl.u32 %v1173, 7
    %v1175 = vsub.s32 0, %v1174
    %v1176 = vrot.slane %v179, %v1175
    %v1177 = vlaneseq
    %v1178 = vshrl.u32 %v1177, 7
    %v1179 = vsub.s32 0, %v1178
    %v1180 = vrot.slane %v193, %v1179
    %v1181 = vlaneseq
    %v1182 = vshrl.u32 %v1181, 7
    %v1183 = vsub.s32 0, %v1182
    %v1184 = vrot.slane %v195, %v1183
    %v1185 = vlaneseq
    %v1186 = vshrl.u32 %v1185, 7
    %v1187 = vsub.s32 0, %v1186
    %v1188 = vrot.slane %v197, %v1187
    %v1205 = vmul.f32 %v1128, %v1124
    %v1206 = vmul.f32 %v1132, %v1124
    %v1207 = vmul.f32 %v1136, %v1124
    %v1208 = vmul.f32 %v1140, %v1124
    %v1209 = vmul.f32 %v1144, %v1124
    %v1210 = vmul.f32 %v1148, %v1124
    %v1211 = vmul.f32 %v1152, %v1124
    %v1212 = vmul.f32 %v1156, %v1124
    %v1213 = vmul.f32 %v1160, %v1124
    %v1214 = vmul.f32 %v1164, %v1124
    %v1215 = vmul.f32 %v1168, %v1124
    %v1216 = vmul.f32 %v1172, %v1124
    %v1217 = vmul.f32 %v1176, %v1124
    %v1218 = vmul.f32 %v1180, %v1124
    %v1219 = vmul.f32 %v1184, %v1124
    %v1220 = vmul.f32 %v1188, %v1124
    %v1221 = vadd.f32 %v1205, 0.0
    %v1222 = vadd.f32 %v1206, 0.0
    %v1223 = vadd.f32 %v1207, 0.0
    %v1224 = vadd.f32 %v1208, 0.0
    %v1225 = vadd.f32 %v1209, 0.0
    %v1226 = vadd.f32 %v1210, 0.0
    %v1227 = vadd.f32 %v1211, 0.0
    %v1228 = vadd.f32 %v1212, 0.0
    %v1229 = vadd.f32 %v1213, 0.0
    %v1230 = vadd.f32 %v1214, 0.0
    %v1231 = vadd.f32 %v1215, 0.0
    %v1232 = vadd.f32 %v1216, 0.0
    %v1233 = vadd.f32 %v1217, 0.0
    %v1234 = vadd.f32 %v1218, 0.0
    %v1235 = vadd.f32 %v1219, 0.0
    %v1236 = vadd.f32 %v1220, 0.0
    %s1237 = scalar_lea.vmem [#allocation2], 8
    %v1238 = vld [vmem:[%s1237] sm:$0xff]
    %v1239 = vlaneseq
    %v1240 = vshrl.u32 %v1239, 7
    %v1241 = vsub.s32 0, %v1240
    %v1242 = vrot.slane %v226, %v1241
    %v1243 = vlaneseq
    %v1244 = vshrl.u32 %v1243, 7
    %v1245 = vsub.s32 0, %v1244
    %v1246 = vrot.slane %v240, %v1245
    %v1247 = vlaneseq
    %v1248 = vshrl.u32 %v1247, 7
    %v1249 = vsub.s32 0, %v1248
    %v1250 = vrot.slane %v248, %v1249
    %v1251 = vlaneseq
    %v1252 = vshrl.u32 %v1251, 7
    %v1253 = vsub.s32 0, %v1252
    %v1254 = vrot.slane %v250, %v1253
    %v1255 = vlaneseq
    %v1256 = vshrl.u32 %v1255, 7
    %v1257 = vsub.s32 0, %v1256
    %v1258 = vrot.slane %v233, %v1257
    %v1259 = vlaneseq
    %v1260 = vshrl.u32 %v1259, 7
    %v1261 = vsub.s32 0, %v1260
    %v1262 = vrot.slane %v247, %v1261
    %v1263 = vlaneseq
    %v1264 = vshrl.u32 %v1263, 7
    %v1265 = vsub.s32 0, %v1264
    %v1266 = vrot.slane %v249, %v1265
    %v1267 = vlaneseq
    %v1268 = vshrl.u32 %v1267, 7
    %v1269 = vsub.s32 0, %v1268
    %v1270 = vrot.slane %v251, %v1269
    %v1271 = vlaneseq
    %v1272 = vshrl.u32 %v1271, 7
    %v1273 = vsub.s32 0, %v1272
    %v1274 = vrot.slane %v275, %v1273
    %v1275 = vlaneseq
    %v1276 = vshrl.u32 %v1275, 7
    %v1277 = vsub.s32 0, %v1276
    %v1278 = vrot.slane %v289, %v1277
    %v1279 = vlaneseq
    %v1280 = vshrl.u32 %v1279, 7
    %v1281 = vsub.s32 0, %v1280
    %v1282 = vrot.slane %v297, %v1281
    %v1283 = vlaneseq
    %v1284 = vshrl.u32 %v1283, 7
    %v1285 = vsub.s32 0, %v1284
    %v1286 = vrot.slane %v299, %v1285
    %v1287 = vlaneseq
    %v1288 = vshrl.u32 %v1287, 7
    %v1289 = vsub.s32 0, %v1288
    %v1290 = vrot.slane %v282, %v1289
    %v1291 = vlaneseq
    %v1292 = vshrl.u32 %v1291, 7
    %v1293 = vsub.s32 0, %v1292
    %v1294 = vrot.slane %v296, %v1293
    %v1295 = vlaneseq
    %v1296 = vshrl.u32 %v1295, 7
    %v1297 = vsub.s32 0, %v1296
    %v1298 = vrot.slane %v298, %v1297
    %v1299 = vlaneseq
    %v1300 = vshrl.u32 %v1299, 7
    %v1301 = vsub.s32 0, %v1300
    %v1302 = vrot.slane %v300, %v1301
    %v1319 = vmul.f32 %v1242, %v1238
    %v1320 = vmul.f32 %v1246, %v1238
    %v1321 = vmul.f32 %v1250, %v1238
    %v1322 = vmul.f32 %v1254, %v1238
    %v1323 = vmul.f32 %v1258, %v1238
    %v1324 = vmul.f32 %v1262, %v1238
    %v1325 = vmul.f32 %v1266, %v1238
    %v1326 = vmul.f32 %v1270, %v1238
    %v1327 = vmul.f32 %v1274, %v1238
    %v1328 = vmul.f32 %v1278, %v1238
    %v1329 = vmul.f32 %v1282, %v1238
    %v1330 = vmul.f32 %v1286, %v1238
    %v1331 = vmul.f32 %v1290, %v1238
    %v1332 = vmul.f32 %v1294, %v1238
    %v1333 = vmul.f32 %v1298, %v1238
    %v1334 = vmul.f32 %v1302, %v1238
    %v1335 = vadd.f32 %v1221, %v1319
    %v1336 = vadd.f32 %v1222, %v1320
    %v1337 = vadd.f32 %v1223, %v1321
    %v1338 = vadd.f32 %v1224, %v1322
    %v1339 = vadd.f32 %v1225, %v1323
    %v1340 = vadd.f32 %v1226, %v1324
    %v1341 = vadd.f32 %v1227, %v1325
    %v1342 = vadd.f32 %v1228, %v1326
    %v1343 = vadd.f32 %v1229, %v1327
    %v1344 = vadd.f32 %v1230, %v1328
    %v1345 = vadd.f32 %v1231, %v1329
    %v1346 = vadd.f32 %v1232, %v1330
    %v1347 = vadd.f32 %v1233, %v1331
    %v1348 = vadd.f32 %v1234, %v1332
    %v1349 = vadd.f32 %v1235, %v1333
    %v1350 = vadd.f32 %v1236, %v1334
    %s1351 = scalar_lea.vmem [#allocation2], 16
    %v1352 = vld [vmem:[%s1351] sm:$0xff]
    %v1353 = vlaneseq
    %v1354 = vshrl.u32 %v1353, 7
    %v1355 = vsub.s32 0, %v1354
    %v1356 = vrot.slane %v329, %v1355
    %v1357 = vlaneseq
    %v1358 = vshrl.u32 %v1357, 7
    %v1359 = vsub.s32 0, %v1358
    %v1360 = vrot.slane %v343, %v1359
    %v1361 = vlaneseq
    %v1362 = vshrl.u32 %v1361, 7
    %v1363 = vsub.s32 0, %v1362
    %v1364 = vrot.slane %v351, %v1363
    %v1365 = vlaneseq
    %v1366 = vshrl.u32 %v1365, 7
    %v1367 = vsub.s32 0, %v1366
    %v1368 = vrot.slane %v353, %v1367
    %v1369 = vlaneseq
    %v1370 = vshrl.u32 %v1369, 7
    %v1371 = vsub.s32 0, %v1370
    %v1372 = vrot.slane %v336, %v1371
    %v1373 = vlaneseq
    %v1374 = vshrl.u32 %v1373, 7
    %v1375 = vsub.s32 0, %v1374
    %v1376 = vrot.slane %v350, %v1375
    %v1377 = vlaneseq
    %v1378 = vshrl.u32 %v1377, 7
    %v1379 = vsub.s32 0, %v1378
    %v1380 = vrot.slane %v352, %v1379
    %v1381 = vlaneseq
    %v1382 = vshrl.u32 %v1381, 7
    %v1383 = vsub.s32 0, %v1382
    %v1384 = vrot.slane %v354, %v1383
    %v1385 = vlaneseq
    %v1386 = vshrl.u32 %v1385, 7
    %v1387 = vsub.s32 0, %v1386
    %v1388 = vrot.slane %v378, %v1387
    %v1389 = vlaneseq
    %v1390 = vshrl.u32 %v1389, 7
    %v1391 = vsub.s32 0, %v1390
    %v1392 = vrot.slane %v392, %v1391
    %v1393 = vlaneseq
    %v1394 = vshrl.u32 %v1393, 7
    %v1395 = vsub.s32 0, %v1394
    %v1396 = vrot.slane %v400, %v1395
    %v1397 = vlaneseq
    %v1398 = vshrl.u32 %v1397, 7
    %v1399 = vsub.s32 0, %v1398
    %v1400 = vrot.slane %v402, %v1399
    %v1401 = vlaneseq
    %v1402 = vshrl.u32 %v1401, 7
    %v1403 = vsub.s32 0, %v1402
    %v1404 = vrot.slane %v385, %v1403
    %v1405 = vlaneseq
    %v1406 = vshrl.u32 %v1405, 7
    %v1407 = vsub.s32 0, %v1406
    %v1408 = vrot.slane %v399, %v1407
    %v1409 = vlaneseq
    %v1410 = vshrl.u32 %v1409, 7
    %v1411 = vsub.s32 0, %v1410
    %v1412 = vrot.slane %v401, %v1411
    %v1413 = vlaneseq
    %v1414 = vshrl.u32 %v1413, 7
    %v1415 = vsub.s32 0, %v1414
    %v1416 = vrot.slane %v403, %v1415
    %v1433 = vmul.f32 %v1356, %v1352
    %v1434 = vmul.f32 %v1360, %v1352
    %v1435 = vmul.f32 %v1364, %v1352
    %v1436 = vmul.f32 %v1368, %v1352
    %v1437 = vmul.f32 %v1372, %v1352
    %v1438 = vmul.f32 %v1376, %v1352
    %v1439 = vmul.f32 %v1380, %v1352
    %v1440 = vmul.f32 %v1384, %v1352
    %v1441 = vmul.f32 %v1388, %v1352
    %v1442 = vmul.f32 %v1392, %v1352
    %v1443 = vmul.f32 %v1396, %v1352
    %v1444 = vmul.f32 %v1400, %v1352
    %v1445 = vmul.f32 %v1404, %v1352
    %v1446 = vmul.f32 %v1408, %v1352
    %v1447 = vmul.f32 %v1412, %v1352
    %v1448 = vmul.f32 %v1416, %v1352
    %v1449 = vadd.f32 %v1335, %v1433
    %v1450 = vadd.f32 %v1336, %v1434
    %v1451 = vadd.f32 %v1337, %v1435
    %v1452 = vadd.f32 %v1338, %v1436
    %v1453 = vadd.f32 %v1339, %v1437
    %v1454 = vadd.f32 %v1340, %v1438
    %v1455 = vadd.f32 %v1341, %v1439
    %v1456 = vadd.f32 %v1342, %v1440
    %v1457 = vadd.f32 %v1343, %v1441
    %v1458 = vadd.f32 %v1344, %v1442
    %v1459 = vadd.f32 %v1345, %v1443
    %v1460 = vadd.f32 %v1346, %v1444
    %v1461 = vadd.f32 %v1347, %v1445
    %v1462 = vadd.f32 %v1348, %v1446
    %v1463 = vadd.f32 %v1349, %v1447
    %v1464 = vadd.f32 %v1350, %v1448
    %s1465 = scalar_lea.vmem [#allocation2], 24
    %v1466 = vld [vmem:[%s1465] sm:$0xff]
    %v1467 = vlaneseq
    %v1468 = vshrl.u32 %v1467, 7
    %v1469 = vsub.s32 0, %v1468
    %v1470 = vrot.slane %v432, %v1469
    %v1471 = vlaneseq
    %v1472 = vshrl.u32 %v1471, 7
    %v1473 = vsub.s32 0, %v1472
    %v1474 = vrot.slane %v446, %v1473
    %v1475 = vlaneseq
    %v1476 = vshrl.u32 %v1475, 7
    %v1477 = vsub.s32 0, %v1476
    %v1478 = vrot.slane %v454, %v1477
    %v1479 = vlaneseq
    %v1480 = vshrl.u32 %v1479, 7
    %v1481 = vsub.s32 0, %v1480
    %v1482 = vrot.slane %v456, %v1481
    %v1483 = vlaneseq
    %v1484 = vshrl.u32 %v1483, 7
    %v1485 = vsub.s32 0, %v1484
    %v1486 = vrot.slane %v439, %v1485
    %v1487 = vlaneseq
    %v1488 = vshrl.u32 %v1487, 7
    %v1489 = vsub.s32 0, %v1488
    %v1490 = vrot.slane %v453, %v1489
    %v1491 = vlaneseq
    %v1492 = vshrl.u32 %v1491, 7
    %v1493 = vsub.s32 0, %v1492
    %v1494 = vrot.slane %v455, %v1493
    %v1495 = vlaneseq
    %v1496 = vshrl.u32 %v1495, 7
    %v1497 = vsub.s32 0, %v1496
    %v1498 = vrot.slane %v457, %v1497
    %v1499 = vlaneseq
    %v1500 = vshrl.u32 %v1499, 7
    %v1501 = vsub.s32 0, %v1500
    %v1502 = vrot.slane %v481, %v1501
    %v1503 = vlaneseq
    %v1504 = vshrl.u32 %v1503, 7
    %v1505 = vsub.s32 0, %v1504
    %v1506 = vrot.slane %v495, %v1505
    %v1507 = vlaneseq
    %v1508 = vshrl.u32 %v1507, 7
    %v1509 = vsub.s32 0, %v1508
    %v1510 = vrot.slane %v503, %v1509
    %v1511 = vlaneseq
    %v1512 = vshrl.u32 %v1511, 7
    %v1513 = vsub.s32 0, %v1512
    %v1514 = vrot.slane %v505, %v1513
    %v1515 = vlaneseq
    %v1516 = vshrl.u32 %v1515, 7
    %v1517 = vsub.s32 0, %v1516
    %v1518 = vrot.slane %v488, %v1517
    %v1519 = vlaneseq
    %v1520 = vshrl.u32 %v1519, 7
    %v1521 = vsub.s32 0, %v1520
    %v1522 = vrot.slane %v502, %v1521
    %v1523 = vlaneseq
    %v1524 = vshrl.u32 %v1523, 7
    %v1525 = vsub.s32 0, %v1524
    %v1526 = vrot.slane %v504, %v1525
    %v1527 = vlaneseq
    %v1528 = vshrl.u32 %v1527, 7
    %v1529 = vsub.s32 0, %v1528
    %v1530 = vrot.slane %v506, %v1529
    %v1547 = vmul.f32 %v1470, %v1466
    %v1548 = vmul.f32 %v1474, %v1466
    %v1549 = vmul.f32 %v1478, %v1466
    %v1550 = vmul.f32 %v1482, %v1466
    %v1551 = vmul.f32 %v1486, %v1466
    %v1552 = vmul.f32 %v1490, %v1466
    %v1553 = vmul.f32 %v1494, %v1466
    %v1554 = vmul.f32 %v1498, %v1466
    %v1555 = vmul.f32 %v1502, %v1466
    %v1556 = vmul.f32 %v1506, %v1466
    %v1557 = vmul.f32 %v1510, %v1466
    %v1558 = vmul.f32 %v1514, %v1466
    %v1559 = vmul.f32 %v1518, %v1466
    %v1560 = vmul.f32 %v1522, %v1466
    %v1561 = vmul.f32 %v1526, %v1466
    %v1562 = vmul.f32 %v1530, %v1466
    %v1563 = vadd.f32 %v1449, %v1547
    %v1564 = vadd.f32 %v1450, %v1548
    %v1565 = vadd.f32 %v1451, %v1549
    %v1566 = vadd.f32 %v1452, %v1550
    %v1567 = vadd.f32 %v1453, %v1551
    %v1568 = vadd.f32 %v1454, %v1552
    %v1569 = vadd.f32 %v1455, %v1553
    %v1570 = vadd.f32 %v1456, %v1554
    %v1571 = vadd.f32 %v1457, %v1555
    %v1572 = vadd.f32 %v1458, %v1556
    %v1573 = vadd.f32 %v1459, %v1557
    %v1574 = vadd.f32 %v1460, %v1558
    %v1575 = vadd.f32 %v1461, %v1559
    %v1576 = vadd.f32 %v1462, %v1560
    %v1577 = vadd.f32 %v1463, %v1561
    %v1578 = vadd.f32 %v1464, %v1562
    %s1579 = scalar_lea.vmem [#allocation2], 32
    %v1580 = vld [vmem:[%s1579] sm:$0xff]
    %v1581 = vlaneseq
    %v1582 = vshrl.u32 %v1581, 7
    %v1583 = vsub.s32 0, %v1582
    %v1584 = vrot.slane %v535, %v1583
    %v1585 = vlaneseq
    %v1586 = vshrl.u32 %v1585, 7
    %v1587 = vsub.s32 0, %v1586
    %v1588 = vrot.slane %v549, %v1587
    %v1589 = vlaneseq
    %v1590 = vshrl.u32 %v1589, 7
    %v1591 = vsub.s32 0, %v1590
    %v1592 = vrot.slane %v557, %v1591
    %v1593 = vlaneseq
    %v1594 = vshrl.u32 %v1593, 7
    %v1595 = vsub.s32 0, %v1594
    %v1596 = vrot.slane %v559, %v1595
    %v1597 = vlaneseq
    %v1598 = vshrl.u32 %v1597, 7
    %v1599 = vsub.s32 0, %v1598
    %v1600 = vrot.slane %v542, %v1599
    %v1601 = vlaneseq
    %v1602 = vshrl.u32 %v1601, 7
    %v1603 = vsub.s32 0, %v1602
    %v1604 = vrot.slane %v556, %v1603
    %v1605 = vlaneseq
    %v1606 = vshrl.u32 %v1605, 7
    %v1607 = vsub.s32 0, %v1606
    %v1608 = vrot.slane %v558, %v1607
    %v1609 = vlaneseq
    %v1610 = vshrl.u32 %v1609, 7
    %v1611 = vsub.s32 0, %v1610
    %v1612 = vrot.slane %v560, %v1611
    %v1613 = vlaneseq
    %v1614 = vshrl.u32 %v1613, 7
    %v1615 = vsub.s32 0, %v1614
    %v1616 = vrot.slane %v584, %v1615
    %v1617 = vlaneseq
    %v1618 = vshrl.u32 %v1617, 7
    %v1619 = vsub.s32 0, %v1618
    %v1620 = vrot.slane %v598, %v1619
    %v1621 = vlaneseq
    %v1622 = vshrl.u32 %v1621, 7
    %v1623 = vsub.s32 0, %v1622
    %v1624 = vrot.slane %v606, %v1623
    %v1625 = vlaneseq
    %v1626 = vshrl.u32 %v1625, 7
    %v1627 = vsub.s32 0, %v1626
    %v1628 = vrot.slane %v608, %v1627
    %v1629 = vlaneseq
    %v1630 = vshrl.u32 %v1629, 7
    %v1631 = vsub.s32 0, %v1630
    %v1632 = vrot.slane %v591, %v1631
    %v1633 = vlaneseq
    %v1634 = vshrl.u32 %v1633, 7
    %v1635 = vsub.s32 0, %v1634
    %v1636 = vrot.slane %v605, %v1635
    %v1637 = vlaneseq
    %v1638 = vshrl.u32 %v1637, 7
    %v1639 = vsub.s32 0, %v1638
    %v1640 = vrot.slane %v607, %v1639
    %v1641 = vlaneseq
    %v1642 = vshrl.u32 %v1641, 7
    %v1643 = vsub.s32 0, %v1642
    %v1644 = vrot.slane %v609, %v1643
    %v1661 = vmul.f32 %v1584, %v1580
    %v1662 = vmul.f32 %v1588, %v1580
    %v1663 = vmul.f32 %v1592, %v1580
    %v1664 = vmul.f32 %v1596, %v1580
    %v1665 = vmul.f32 %v1600, %v1580
    %v1666 = vmul.f32 %v1604, %v1580
    %v1667 = vmul.f32 %v1608, %v1580
    %v1668 = vmul.f32 %v1612, %v1580
    %v1669 = vmul.f32 %v1616, %v1580
    %v1670 = vmul.f32 %v1620, %v1580
    %v1671 = vmul.f32 %v1624, %v1580
    %v1672 = vmul.f32 %v1628, %v1580
    %v1673 = vmul.f32 %v1632, %v1580
    %v1674 = vmul.f32 %v1636, %v1580
    %v1675 = vmul.f32 %v1640, %v1580
    %v1676 = vmul.f32 %v1644, %v1580
    %v1677 = vadd.f32 %v1563, %v1661
    %v1678 = vadd.f32 %v1564, %v1662
    %v1679 = vadd.f32 %v1565, %v1663
    %v1680 = vadd.f32 %v1566, %v1664
    %v1681 = vadd.f32 %v1567, %v1665
    %v1682 = vadd.f32 %v1568, %v1666
    %v1683 = vadd.f32 %v1569, %v1667
    %v1684 = vadd.f32 %v1570, %v1668
    %v1685 = vadd.f32 %v1571, %v1669
    %v1686 = vadd.f32 %v1572, %v1670
    %v1687 = vadd.f32 %v1573, %v1671
    %v1688 = vadd.f32 %v1574, %v1672
    %v1689 = vadd.f32 %v1575, %v1673
    %v1690 = vadd.f32 %v1576, %v1674
    %v1691 = vadd.f32 %v1577, %v1675
    %v1692 = vadd.f32 %v1578, %v1676
    %s1693 = scalar_lea.vmem [#allocation2], 40
    %v1694 = vld [vmem:[%s1693] sm:$0xff]
    %v1695 = vlaneseq
    %v1696 = vshrl.u32 %v1695, 7
    %v1697 = vsub.s32 0, %v1696
    %v1698 = vrot.slane %v638, %v1697
    %v1699 = vlaneseq
    %v1700 = vshrl.u32 %v1699, 7
    %v1701 = vsub.s32 0, %v1700
    %v1702 = vrot.slane %v652, %v1701
    %v1703 = vlaneseq
    %v1704 = vshrl.u32 %v1703, 7
    %v1705 = vsub.s32 0, %v1704
    %v1706 = vrot.slane %v660, %v1705
    %v1707 = vlaneseq
    %v1708 = vshrl.u32 %v1707, 7
    %v1709 = vsub.s32 0, %v1708
    %v1710 = vrot.slane %v662, %v1709
    %v1711 = vlaneseq
    %v1712 = vshrl.u32 %v1711, 7
    %v1713 = vsub.s32 0, %v1712
    %v1714 = vrot.slane %v645, %v1713
    %v1715 = vlaneseq
    %v1716 = vshrl.u32 %v1715, 7
    %v1717 = vsub.s32 0, %v1716
    %v1718 = vrot.slane %v659, %v1717
    %v1719 = vlaneseq
    %v1720 = vshrl.u32 %v1719, 7
    %v1721 = vsub.s32 0, %v1720
    %v1722 = vrot.slane %v661, %v1721
    %v1723 = vlaneseq
    %v1724 = vshrl.u32 %v1723, 7
    %v1725 = vsub.s32 0, %v1724
    %v1726 = vrot.slane %v663, %v1725
    %v1727 = vlaneseq
    %v1728 = vshrl.u32 %v1727, 7
    %v1729 = vsub.s32 0, %v1728
    %v1730 = vrot.slane %v687, %v1729
    %v1731 = vlaneseq
    %v1732 = vshrl.u32 %v1731, 7
    %v1733 = vsub.s32 0, %v1732
    %v1734 = vrot.slane %v701, %v1733
    %v1735 = vlaneseq
    %v1736 = vshrl.u32 %v1735, 7
    %v1737 = vsub.s32 0, %v1736
    %v1738 = vrot.slane %v709, %v1737
    %v1739 = vlaneseq
    %v1740 = vshrl.u32 %v1739, 7
    %v1741 = vsub.s32 0, %v1740
    %v1742 = vrot.slane %v711, %v1741
    %v1743 = vlaneseq
    %v1744 = vshrl.u32 %v1743, 7
    %v1745 = vsub.s32 0, %v1744
    %v1746 = vrot.slane %v694, %v1745
    %v1747 = vlaneseq
    %v1748 = vshrl.u32 %v1747, 7
    %v1749 = vsub.s32 0, %v1748
    %v1750 = vrot.slane %v708, %v1749
    %v1751 = vlaneseq
    %v1752 = vshrl.u32 %v1751, 7
    %v1753 = vsub.s32 0, %v1752
    %v1754 = vrot.slane %v710, %v1753
    %v1755 = vlaneseq
    %v1756 = vshrl.u32 %v1755, 7
    %v1757 = vsub.s32 0, %v1756
    %v1758 = vrot.slane %v712, %v1757
    %v1775 = vmul.f32 %v1698, %v1694
    %v1776 = vmul.f32 %v1702, %v1694
    %v1777 = vmul.f32 %v1706, %v1694
    %v1778 = vmul.f32 %v1710, %v1694
    %v1779 = vmul.f32 %v1714, %v1694
    %v1780 = vmul.f32 %v1718, %v1694
    %v1781 = vmul.f32 %v1722, %v1694
    %v1782 = vmul.f32 %v1726, %v1694
    %v1783 = vmul.f32 %v1730, %v1694
    %v1784 = vmul.f32 %v1734, %v1694
    %v1785 = vmul.f32 %v1738, %v1694
    %v1786 = vmul.f32 %v1742, %v1694
    %v1787 = vmul.f32 %v1746, %v1694
    %v1788 = vmul.f32 %v1750, %v1694
    %v1789 = vmul.f32 %v1754, %v1694
    %v1790 = vmul.f32 %v1758, %v1694
    %v1791 = vadd.f32 %v1677, %v1775
    %v1792 = vadd.f32 %v1678, %v1776
    %v1793 = vadd.f32 %v1679, %v1777
    %v1794 = vadd.f32 %v1680, %v1778
    %v1795 = vadd.f32 %v1681, %v1779
    %v1796 = vadd.f32 %v1682, %v1780
    %v1797 = vadd.f32 %v1683, %v1781
    %v1798 = vadd.f32 %v1684, %v1782
    %v1799 = vadd.f32 %v1685, %v1783
    %v1800 = vadd.f32 %v1686, %v1784
    %v1801 = vadd.f32 %v1687, %v1785
    %v1802 = vadd.f32 %v1688, %v1786
    %v1803 = vadd.f32 %v1689, %v1787
    %v1804 = vadd.f32 %v1690, %v1788
    %v1805 = vadd.f32 %v1691, %v1789
    %v1806 = vadd.f32 %v1692, %v1790
    %s1807 = scalar_lea.vmem [#allocation2], 48
    %v1808 = vld [vmem:[%s1807] sm:$0xff]
    %v1809 = vlaneseq
    %v1810 = vshrl.u32 %v1809, 7
    %v1811 = vsub.s32 0, %v1810
    %v1812 = vrot.slane %v741, %v1811
    %v1813 = vlaneseq
    %v1814 = vshrl.u32 %v1813, 7
    %v1815 = vsub.s32 0, %v1814
    %v1816 = vrot.slane %v755, %v1815
    %v1817 = vlaneseq
    %v1818 = vshrl.u32 %v1817, 7
    %v1819 = vsub.s32 0, %v1818
    %v1820 = vrot.slane %v763, %v1819
    %v1821 = vlaneseq
    %v1822 = vshrl.u32 %v1821, 7
    %v1823 = vsub.s32 0, %v1822
    %v1824 = vrot.slane %v765, %v1823
    %v1825 = vlaneseq
    %v1826 = vshrl.u32 %v1825, 7
    %v1827 = vsub.s32 0, %v1826
    %v1828 = vrot.slane %v748, %v1827
    %v1829 = vlaneseq
    %v1830 = vshrl.u32 %v1829, 7
    %v1831 = vsub.s32 0, %v1830
    %v1832 = vrot.slane %v762, %v1831
    %v1833 = vlaneseq
    %v1834 = vshrl.u32 %v1833, 7
    %v1835 = vsub.s32 0, %v1834
    %v1836 = vrot.slane %v764, %v1835
    %v1837 = vlaneseq
    %v1838 = vshrl.u32 %v1837, 7
    %v1839 = vsub.s32 0, %v1838
    %v1840 = vrot.slane %v766, %v1839
    %v1841 = vlaneseq
    %v1842 = vshrl.u32 %v1841, 7
    %v1843 = vsub.s32 0, %v1842
    %v1844 = vrot.slane %v790, %v1843
    %v1845 = vlaneseq
    %v1846 = vshrl.u32 %v1845, 7
    %v1847 = vsub.s32 0, %v1846
    %v1848 = vrot.slane %v804, %v1847
    %v1849 = vlaneseq
    %v1850 = vshrl.u32 %v1849, 7
    %v1851 = vsub.s32 0, %v1850
    %v1852 = vrot.slane %v812, %v1851
    %v1853 = vlaneseq
    %v1854 = vshrl.u32 %v1853, 7
    %v1855 = vsub.s32 0, %v1854
    %v1856 = vrot.slane %v814, %v1855
    %v1857 = vlaneseq
    %v1858 = vshrl.u32 %v1857, 7
    %v1859 = vsub.s32 0, %v1858
    %v1860 = vrot.slane %v797, %v1859
    %v1861 = vlaneseq
    %v1862 = vshrl.u32 %v1861, 7
    %v1863 = vsub.s32 0, %v1862
    %v1864 = vrot.slane %v811, %v1863
    %v1865 = vlaneseq
    %v1866 = vshrl.u32 %v1865, 7
    %v1867 = vsub.s32 0, %v1866
    %v1868 = vrot.slane %v813, %v1867
    %v1869 = vlaneseq
    %v1870 = vshrl.u32 %v1869, 7
    %v1871 = vsub.s32 0, %v1870
    %v1872 = vrot.slane %v815, %v1871
    %v1889 = vmul.f32 %v1812, %v1808
    %v1890 = vmul.f32 %v1816, %v1808
    %v1891 = vmul.f32 %v1820, %v1808
    %v1892 = vmul.f32 %v1824, %v1808
    %v1893 = vmul.f32 %v1828, %v1808
    %v1894 = vmul.f32 %v1832, %v1808
    %v1895 = vmul.f32 %v1836, %v1808
    %v1896 = vmul.f32 %v1840, %v1808
    %v1897 = vmul.f32 %v1844, %v1808
    %v1898 = vmul.f32 %v1848, %v1808
    %v1899 = vmul.f32 %v1852, %v1808
    %v1900 = vmul.f32 %v1856, %v1808
    %v1901 = vmul.f32 %v1860, %v1808
    %v1902 = vmul.f32 %v1864, %v1808
    %v1903 = vmul.f32 %v1868, %v1808
    %v1904 = vmul.f32 %v1872, %v1808
    %v1905 = vadd.f32 %v1791, %v1889
    %v1906 = vadd.f32 %v1792, %v1890
    %v1907 = vadd.f32 %v1793, %v1891
    %v1908 = vadd.f32 %v1794, %v1892
    %v1909 = vadd.f32 %v1795, %v1893
    %v1910 = vadd.f32 %v1796, %v1894
    %v1911 = vadd.f32 %v1797, %v1895
    %v1912 = vadd.f32 %v1798, %v1896
    %v1913 = vadd.f32 %v1799, %v1897
    %v1914 = vadd.f32 %v1800, %v1898
    %v1915 = vadd.f32 %v1801, %v1899
    %v1916 = vadd.f32 %v1802, %v1900
    %v1917 = vadd.f32 %v1803, %v1901
    %v1918 = vadd.f32 %v1804, %v1902
    %v1919 = vadd.f32 %v1805, %v1903
    %v1920 = vadd.f32 %v1806, %v1904
    %s1921 = scalar_lea.vmem [#allocation2], 56
    %v1922 = vld [vmem:[%s1921] sm:$0xff]
    %v1923 = vlaneseq
    %v1924 = vshrl.u32 %v1923, 7
    %v1925 = vsub.s32 0, %v1924
    %v1926 = vrot.slane %v844, %v1925
    %v1927 = vlaneseq
    %v1928 = vshrl.u32 %v1927, 7
    %v1929 = vsub.s32 0, %v1928
    %v1930 = vrot.slane %v858, %v1929
    %v1931 = vlaneseq
    %v1932 = vshrl.u32 %v1931, 7
    %v1933 = vsub.s32 0, %v1932
    %v1934 = vrot.slane %v866, %v1933
    %v1935 = vlaneseq
    %v1936 = vshrl.u32 %v1935, 7
    %v1937 = vsub.s32 0, %v1936
    %v1938 = vrot.slane %v868, %v1937
    %v1939 = vlaneseq
    %v1940 = vshrl.u32 %v1939, 7
    %v1941 = vsub.s32 0, %v1940
    %v1942 = vrot.slane %v851, %v1941
    %v1943 = vlaneseq
    %v1944 = vshrl.u32 %v1943, 7
    %v1945 = vsub.s32 0, %v1944
    %v1946 = vrot.slane %v865, %v1945
    %v1947 = vlaneseq
    %v1948 = vshrl.u32 %v1947, 7
    %v1949 = vsub.s32 0, %v1948
    %v1950 = vrot.slane %v867, %v1949
    %v1951 = vlaneseq
    %v1952 = vshrl.u32 %v1951, 7
    %v1953 = vsub.s32 0, %v1952
    %v1954 = vrot.slane %v869, %v1953
    %v1955 = vlaneseq
    %v1956 = vshrl.u32 %v1955, 7
    %v1957 = vsub.s32 0, %v1956
    %v1958 = vrot.slane %v893, %v1957
    %v1959 = vlaneseq
    %v1960 = vshrl.u32 %v1959, 7
    %v1961 = vsub.s32 0, %v1960
    %v1962 = vrot.slane %v907, %v1961
    %v1963 = vlaneseq
    %v1964 = vshrl.u32 %v1963, 7
    %v1965 = vsub.s32 0, %v1964
    %v1966 = vrot.slane %v915, %v1965
    %v1967 = vlaneseq
    %v1968 = vshrl.u32 %v1967, 7
    %v1969 = vsub.s32 0, %v1968
    %v1970 = vrot.slane %v917, %v1969
    %v1971 = vlaneseq
    %v1972 = vshrl.u32 %v1971, 7
    %v1973 = vsub.s32 0, %v1972
    %v1974 = vrot.slane %v900, %v1973
    %v1975 = vlaneseq
    %v1976 = vshrl.u32 %v1975, 7
    %v1977 = vsub.s32 0, %v1976
    %v1978 = vrot.slane %v914, %v1977
    %v1979 = vlaneseq
    %v1980 = vshrl.u32 %v1979, 7
    %v1981 = vsub.s32 0, %v1980
    %v1982 = vrot.slane %v916, %v1981
    %v1983 = vlaneseq
    %v1984 = vshrl.u32 %v1983, 7
    %v1985 = vsub.s32 0, %v1984
    %v1986 = vrot.slane %v918, %v1985
    %v2003 = vmul.f32 %v1926, %v1922
    %v2004 = vmul.f32 %v1930, %v1922
    %v2005 = vmul.f32 %v1934, %v1922
    %v2006 = vmul.f32 %v1938, %v1922
    %v2007 = vmul.f32 %v1942, %v1922
    %v2008 = vmul.f32 %v1946, %v1922
    %v2009 = vmul.f32 %v1950, %v1922
    %v2010 = vmul.f32 %v1954, %v1922
    %v2011 = vmul.f32 %v1958, %v1922
    %v2012 = vmul.f32 %v1962, %v1922
    %v2013 = vmul.f32 %v1966, %v1922
    %v2014 = vmul.f32 %v1970, %v1922
    %v2015 = vmul.f32 %v1974, %v1922
    %v2016 = vmul.f32 %v1978, %v1922
    %v2017 = vmul.f32 %v1982, %v1922
    %v2018 = vmul.f32 %v1986, %v1922
    %v2019 = vadd.f32 %v1905, %v2003
    %v2020 = vadd.f32 %v1906, %v2004
    %v2021 = vadd.f32 %v1907, %v2005
    %v2022 = vadd.f32 %v1908, %v2006
    %v2023 = vadd.f32 %v1909, %v2007
    %v2024 = vadd.f32 %v1910, %v2008
    %v2025 = vadd.f32 %v1911, %v2009
    %v2026 = vadd.f32 %v1912, %v2010
    %v2027 = vadd.f32 %v1913, %v2011
    %v2028 = vadd.f32 %v1914, %v2012
    %v2029 = vadd.f32 %v1915, %v2013
    %v2030 = vadd.f32 %v1916, %v2014
    %v2031 = vadd.f32 %v1917, %v2015
    %v2032 = vadd.f32 %v1918, %v2016
    %v2033 = vadd.f32 %v1919, %v2017
    %v2034 = vadd.f32 %v1920, %v2018
    %s2035 = scalar_lea.vmem [#allocation2], 64
    %v2036 = vld [vmem:[%s2035] sm:$0xff]
    %v2037 = vlaneseq
    %v2038 = vshrl.u32 %v2037, 7
    %v2039 = vsub.s32 0, %v2038
    %v2040 = vrot.slane %v947, %v2039
    %v2041 = vlaneseq
    %v2042 = vshrl.u32 %v2041, 7
    %v2043 = vsub.s32 0, %v2042
    %v2044 = vrot.slane %v961, %v2043
    %v2045 = vlaneseq
    %v2046 = vshrl.u32 %v2045, 7
    %v2047 = vsub.s32 0, %v2046
    %v2048 = vrot.slane %v969, %v2047
    %v2049 = vlaneseq
    %v2050 = vshrl.u32 %v2049, 7
    %v2051 = vsub.s32 0, %v2050
    %v2052 = vrot.slane %v971, %v2051
    %v2053 = vlaneseq
    %v2054 = vshrl.u32 %v2053, 7
    %v2055 = vsub.s32 0, %v2054
    %v2056 = vrot.slane %v954, %v2055
    %v2057 = vlaneseq
    %v2058 = vshrl.u32 %v2057, 7
    %v2059 = vsub.s32 0, %v2058
    %v2060 = vrot.slane %v968, %v2059
    %v2061 = vlaneseq
    %v2062 = vshrl.u32 %v2061, 7
    %v2063 = vsub.s32 0, %v2062
    %v2064 = vrot.slane %v970, %v2063
    %v2065 = vlaneseq
    %v2066 = vshrl.u32 %v2065, 7
    %v2067 = vsub.s32 0, %v2066
    %v2068 = vrot.slane %v972, %v2067
    %v2069 = vlaneseq
    %v2070 = vshrl.u32 %v2069, 7
    %v2071 = vsub.s32 0, %v2070
    %v2072 = vrot.slane %v996, %v2071
    %v2073 = vlaneseq
    %v2074 = vshrl.u32 %v2073, 7
    %v2075 = vsub.s32 0, %v2074
    %v2076 = vrot.slane %v1010, %v2075
    %v2077 = vlaneseq
    %v2078 = vshrl.u32 %v2077, 7
    %v2079 = vsub.s32 0, %v2078
    %v2080 = vrot.slane %v1018, %v2079
    %v2081 = vlaneseq
    %v2082 = vshrl.u32 %v2081, 7
    %v2083 = vsub.s32 0, %v2082
    %v2084 = vrot.slane %v1020, %v2083
    %v2085 = vlaneseq
    %v2086 = vshrl.u32 %v2085, 7
    %v2087 = vsub.s32 0, %v2086
    %v2088 = vrot.slane %v1003, %v2087
    %v2089 = vlaneseq
    %v2090 = vshrl.u32 %v2089, 7
    %v2091 = vsub.s32 0, %v2090
    %v2092 = vrot.slane %v1017, %v2091
    %v2093 = vlaneseq
    %v2094 = vshrl.u32 %v2093, 7
    %v2095 = vsub.s32 0, %v2094
    %v2096 = vrot.slane %v1019, %v2095
    %v2097 = vlaneseq
    %v2098 = vshrl.u32 %v2097, 7
    %v2099 = vsub.s32 0, %v2098
    %v2100 = vrot.slane %v1021, %v2099
    %v2117 = vmul.f32 %v2040, %v2036
    %v2118 = vmul.f32 %v2044, %v2036
    %v2119 = vmul.f32 %v2048, %v2036
    %v2120 = vmul.f32 %v2052, %v2036
    %v2121 = vmul.f32 %v2056, %v2036
    %v2122 = vmul.f32 %v2060, %v2036
    %v2123 = vmul.f32 %v2064, %v2036
    %v2124 = vmul.f32 %v2068, %v2036
    %v2125 = vmul.f32 %v2072, %v2036
    %v2126 = vmul.f32 %v2076, %v2036
    %v2127 = vmul.f32 %v2080, %v2036
    %v2128 = vmul.f32 %v2084, %v2036
    %v2129 = vmul.f32 %v2088, %v2036
    %v2130 = vmul.f32 %v2092, %v2036
    %v2131 = vmul.f32 %v2096, %v2036
    %v2132 = vmul.f32 %v2100, %v2036
    %v2133 = vadd.f32 %v2019, %v2117
    %v2134 = vadd.f32 %v2020, %v2118
    %v2135 = vadd.f32 %v2021, %v2119
    %v2136 = vadd.f32 %v2022, %v2120
    %v2137 = vadd.f32 %v2023, %v2121
    %v2138 = vadd.f32 %v2024, %v2122
    %v2139 = vadd.f32 %v2025, %v2123
    %v2140 = vadd.f32 %v2026, %v2124
    %v2141 = vadd.f32 %v2027, %v2125
    %v2142 = vadd.f32 %v2028, %v2126
    %v2143 = vadd.f32 %v2029, %v2127
    %v2144 = vadd.f32 %v2030, %v2128
    %v2145 = vadd.f32 %v2031, %v2129
    %v2146 = vadd.f32 %v2032, %v2130
    %v2147 = vadd.f32 %v2033, %v2131
    %v2148 = vadd.f32 %v2034, %v2132
    %v2149 = vlaneseq
    %v2150 = vshrl.u32 %v2149, 7
    %v2151 = vsub.s32 0, %v2150
    %v2152 = vrot.slane %v1049, %v2151
    %v2153 = vlaneseq
    %v2154 = vshrl.u32 %v2153, 7
    %v2155 = vsub.s32 0, %v2154
    %v2156 = vrot.slane %v1063, %v2155
    %v2157 = vlaneseq
    %v2158 = vshrl.u32 %v2157, 7
    %v2159 = vsub.s32 0, %v2158
    %v2160 = vrot.slane %v1071, %v2159
    %v2161 = vlaneseq
    %v2162 = vshrl.u32 %v2161, 7
    %v2163 = vsub.s32 0, %v2162
    %v2164 = vrot.slane %v1073, %v2163
    %v2165 = vlaneseq
    %v2166 = vshrl.u32 %v2165, 7
    %v2167 = vsub.s32 0, %v2166
    %v2168 = vrot.slane %v1056, %v2167
    %v2169 = vlaneseq
    %v2170 = vshrl.u32 %v2169, 7
    %v2171 = vsub.s32 0, %v2170
    %v2172 = vrot.slane %v1070, %v2171
    %v2173 = vlaneseq
    %v2174 = vshrl.u32 %v2173, 7
    %v2175 = vsub.s32 0, %v2174
    %v2176 = vrot.slane %v1072, %v2175
    %v2177 = vlaneseq
    %v2178 = vshrl.u32 %v2177, 7
    %v2179 = vsub.s32 0, %v2178
    %v2180 = vrot.slane %v1074, %v2179
    %v2181 = vlaneseq
    %v2182 = vshrl.u32 %v2181, 7
    %v2183 = vsub.s32 0, %v2182
    %v2184 = vrot.slane %v1098, %v2183
    %v2185 = vlaneseq
    %v2186 = vshrl.u32 %v2185, 7
    %v2187 = vsub.s32 0, %v2186
    %v2188 = vrot.slane %v1112, %v2187
    %v2189 = vlaneseq
    %v2190 = vshrl.u32 %v2189, 7
    %v2191 = vsub.s32 0, %v2190
    %v2192 = vrot.slane %v1120, %v2191
    %v2193 = vlaneseq
    %v2194 = vshrl.u32 %v2193, 7
    %v2195 = vsub.s32 0, %v2194
    %v2196 = vrot.slane %v1122, %v2195
    %v2197 = vlaneseq
    %v2198 = vshrl.u32 %v2197, 7
    %v2199 = vsub.s32 0, %v2198
    %v2200 = vrot.slane %v1105, %v2199
    %v2201 = vlaneseq
    %v2202 = vshrl.u32 %v2201, 7
    %v2203 = vsub.s32 0, %v2202
    %v2204 = vrot.slane %v1119, %v2203
    %v2205 = vlaneseq
    %v2206 = vshrl.u32 %v2205, 7
    %v2207 = vsub.s32 0, %v2206
    %v2208 = vrot.slane %v1121, %v2207
    %v2209 = vlaneseq
    %v2210 = vshrl.u32 %v2209, 7
    %v2211 = vsub.s32 0, %v2210
    %v2212 = vrot.slane %v1123, %v2211
    %v2229 = vadd.f32 %v2133, %v2152
    %v2230 = vadd.f32 %v2134, %v2156
    %v2231 = vadd.f32 %v2135, %v2160
    %v2232 = vadd.f32 %v2136, %v2164
    %v2233 = vadd.f32 %v2137, %v2168
    %v2234 = vadd.f32 %v2138, %v2172
    %v2235 = vadd.f32 %v2139, %v2176
    %v2236 = vadd.f32 %v2140, %v2180
    %v2237 = vadd.f32 %v2141, %v2184
    %v2238 = vadd.f32 %v2142, %v2188
    %v2239 = vadd.f32 %v2143, %v2192
    %v2240 = vadd.f32 %v2144, %v2196
    %v2241 = vadd.f32 %v2145, %v2200
    %v2242 = vadd.f32 %v2146, %v2204
    %v2243 = vadd.f32 %v2147, %v2208
    %v2244 = vadd.f32 %v2148, %v2212
    %v2245 = vmax.f32 %v2229, 0.0
    %v2246 = vmax.f32 %v2230, 0.0
    %v2247 = vmax.f32 %v2231, 0.0
    %v2248 = vmax.f32 %v2232, 0.0
    %v2249 = vmax.f32 %v2233, 0.0
    %v2250 = vmax.f32 %v2234, 0.0
    %v2251 = vmax.f32 %v2235, 0.0
    %v2252 = vmax.f32 %v2236, 0.0
    %v2253 = vmax.f32 %v2237, 0.0
    %v2254 = vmax.f32 %v2238, 0.0
    %v2255 = vmax.f32 %v2239, 0.0
    %v2256 = vmax.f32 %v2240, 0.0
    %v2257 = vmax.f32 %v2241, 0.0
    %v2258 = vmax.f32 %v2242, 0.0
    %v2259 = vmax.f32 %v2243, 0.0
    %v2260 = vmax.f32 %v2244, 0.0
    %s2261 = scalar_lea.vmem [#allocation2], 72
    %v2262 = vld [vmem:[%s2261] sm:$0xff]
    %v2263 = vmul.f32 %v1128, %v2262
    %v2264 = vmul.f32 %v1132, %v2262
    %v2265 = vmul.f32 %v1136, %v2262
    %v2266 = vmul.f32 %v1140, %v2262
    %v2267 = vmul.f32 %v1144, %v2262
    %v2268 = vmul.f32 %v1148, %v2262
    %v2269 = vmul.f32 %v1152, %v2262
    %v2270 = vmul.f32 %v1156, %v2262
    %v2271 = vmul.f32 %v1160, %v2262
    %v2272 = vmul.f32 %v1164, %v2262
    %v2273 = vmul.f32 %v1168, %v2262
    %v2274 = vmul.f32 %v1172, %v2262
    %v2275 = vmul.f32 %v1176, %v2262
    %v2276 = vmul.f32 %v1180, %v2262
    %v2277 = vmul.f32 %v1184, %v2262
    %v2278 = vmul.f32 %v1188, %v2262
    %v2279 = vadd.f32 %v2263, 0.0
    %v2280 = vadd.f32 %v2264, 0.0
    %v2281 = vadd.f32 %v2265, 0.0
    %v2282 = vadd.f32 %v2266, 0.0
    %v2283 = vadd.f32 %v2267, 0.0
    %v2284 = vadd.f32 %v2268, 0.0
    %v2285 = vadd.f32 %v2269, 0.0
    %v2286 = vadd.f32 %v2270, 0.0
    %v2287 = vadd.f32 %v2271, 0.0
    %v2288 = vadd.f32 %v2272, 0.0
    %v2289 = vadd.f32 %v2273, 0.0
    %v2290 = vadd.f32 %v2274, 0.0
    %v2291 = vadd.f32 %v2275, 0.0
    %v2292 = vadd.f32 %v2276, 0.0
    %v2293 = vadd.f32 %v2277, 0.0
    %v2294 = vadd.f32 %v2278, 0.0
    %s2295 = scalar_lea.vmem [#allocation2], 80
    %v2296 = vld [vmem:[%s2295] sm:$0xff]
    %v2297 = vmul.f32 %v1242, %v2296
    %v2298 = vmul.f32 %v1246, %v2296
    %v2299 = vmul.f32 %v1250, %v2296
    %v2300 = vmul.f32 %v1254, %v2296
    %v2301 = vmul.f32 %v1258, %v2296
    %v2302 = vmul.f32 %v1262, %v2296
    %v2303 = vmul.f32 %v1266, %v2296
    %v2304 = vmul.f32 %v1270, %v2296
    %v2305 = vmul.f32 %v1274, %v2296
    %v2306 = vmul.f32 %v1278, %v2296
    %v2307 = vmul.f32 %v1282, %v2296
    %v2308 = vmul.f32 %v1286, %v2296
    %v2309 = vmul.f32 %v1290, %v2296
    %v2310 = vmul.f32 %v1294, %v2296
    %v2311 = vmul.f32 %v1298, %v2296
    %v2312 = vmul.f32 %v1302, %v2296
    %v2313 = vadd.f32 %v2279, %v2297
    %v2314 = vadd.f32 %v2280, %v2298
    %v2315 = vadd.f32 %v2281, %v2299
    %v2316 = vadd.f32 %v2282, %v2300
    %v2317 = vadd.f32 %v2283, %v2301
    %v2318 = vadd.f32 %v2284, %v2302
    %v2319 = vadd.f32 %v2285, %v2303
    %v2320 = vadd.f32 %v2286, %v2304
    %v2321 = vadd.f32 %v2287, %v2305
    %v2322 = vadd.f32 %v2288, %v2306
    %v2323 = vadd.f32 %v2289, %v2307
    %v2324 = vadd.f32 %v2290, %v2308
    %v2325 = vadd.f32 %v2291, %v2309
    %v2326 = vadd.f32 %v2292, %v2310
    %v2327 = vadd.f32 %v2293, %v2311
    %v2328 = vadd.f32 %v2294, %v2312
    %s2329 = scalar_lea.vmem [#allocation2], 88
    %v2330 = vld [vmem:[%s2329] sm:$0xff]
    %v2331 = vmul.f32 %v1356, %v2330
    %v2332 = vmul.f32 %v1360, %v2330
    %v2333 = vmul.f32 %v1364, %v2330
    %v2334 = vmul.f32 %v1368, %v2330
    %v2335 = vmul.f32 %v1372, %v2330
    %v2336 = vmul.f32 %v1376, %v2330
    %v2337 = vmul.f32 %v1380, %v2330
    %v2338 = vmul.f32 %v1384, %v2330
    %v2339 = vmul.f32 %v1388, %v2330
    %v2340 = vmul.f32 %v1392, %v2330
    %v2341 = vmul.f32 %v1396, %v2330
    %v2342 = vmul.f32 %v1400, %v2330
    %v2343 = vmul.f32 %v1404, %v2330
    %v2344 = vmul.f32 %v1408, %v2330
    %v2345 = vmul.f32 %v1412, %v2330
    %v2346 = vmul.f32 %v1416, %v2330
    %v2347 = vadd.f32 %v2313, %v2331
    %v2348 = vadd.f32 %v2314, %v2332
    %v2349 = vadd.f32 %v2315, %v2333
    %v2350 = vadd.f32 %v2316, %v2334
    %v2351 = vadd.f32 %v2317, %v2335
    %v2352 = vadd.f32 %v2318, %v2336
    %v2353 = vadd.f32 %v2319, %v2337
    %v2354 = vadd.f32 %v2320, %v2338
    %v2355 = vadd.f32 %v2321, %v2339
    %v2356 = vadd.f32 %v2322, %v2340
    %v2357 = vadd.f32 %v2323, %v2341
    %v2358 = vadd.f32 %v2324, %v2342
    %v2359 = vadd.f32 %v2325, %v2343
    %v2360 = vadd.f32 %v2326, %v2344
    %v2361 = vadd.f32 %v2327, %v2345
    %v2362 = vadd.f32 %v2328, %v2346
    %s2363 = scalar_lea.vmem [#allocation2], 96
    %v2364 = vld [vmem:[%s2363] sm:$0xff]
    %v2365 = vmul.f32 %v1470, %v2364
    %v2366 = vmul.f32 %v1474, %v2364
    %v2367 = vmul.f32 %v1478, %v2364
    %v2368 = vmul.f32 %v1482, %v2364
    %v2369 = vmul.f32 %v1486, %v2364
    %v2370 = vmul.f32 %v1490, %v2364
    %v2371 = vmul.f32 %v1494, %v2364
    %v2372 = vmul.f32 %v1498, %v2364
    %v2373 = vmul.f32 %v1502, %v2364
    %v2374 = vmul.f32 %v1506, %v2364
    %v2375 = vmul.f32 %v1510, %v2364
    %v2376 = vmul.f32 %v1514, %v2364
    %v2377 = vmul.f32 %v1518, %v2364
    %v2378 = vmul.f32 %v1522, %v2364
    %v2379 = vmul.f32 %v1526, %v2364
    %v2380 = vmul.f32 %v1530, %v2364
    %v2381 = vadd.f32 %v2347, %v2365
    %v2382 = vadd.f32 %v2348, %v2366
    %v2383 = vadd.f32 %v2349, %v2367
    %v2384 = vadd.f32 %v2350, %v2368
    %v2385 = vadd.f32 %v2351, %v2369
    %v2386 = vadd.f32 %v2352, %v2370
    %v2387 = vadd.f32 %v2353, %v2371
    %v2388 = vadd.f32 %v2354, %v2372
    %v2389 = vadd.f32 %v2355, %v2373
    %v2390 = vadd.f32 %v2356, %v2374
    %v2391 = vadd.f32 %v2357, %v2375
    %v2392 = vadd.f32 %v2358, %v2376
    %v2393 = vadd.f32 %v2359, %v2377
    %v2394 = vadd.f32 %v2360, %v2378
    %v2395 = vadd.f32 %v2361, %v2379
    %v2396 = vadd.f32 %v2362, %v2380
    %s2397 = scalar_lea.vmem [#allocation2], 104
    %v2398 = vld [vmem:[%s2397] sm:$0xff]
    %v2399 = vmul.f32 %v1584, %v2398
    %v2400 = vmul.f32 %v1588, %v2398
    %v2401 = vmul.f32 %v1592, %v2398
    %v2402 = vmul.f32 %v1596, %v2398
    %v2403 = vmul.f32 %v1600, %v2398
    %v2404 = vmul.f32 %v1604, %v2398
    %v2405 = vmul.f32 %v1608, %v2398
    %v2406 = vmul.f32 %v1612, %v2398
    %v2407 = vmul.f32 %v1616, %v2398
    %v2408 = vmul.f32 %v1620, %v2398
    %v2409 = vmul.f32 %v1624, %v2398
    %v2410 = vmul.f32 %v1628, %v2398
    %v2411 = vmul.f32 %v1632, %v2398
    %v2412 = vmul.f32 %v1636, %v2398
    %v2413 = vmul.f32 %v1640, %v2398
    %v2414 = vmul.f32 %v1644, %v2398
    %v2415 = vadd.f32 %v2381, %v2399
    %v2416 = vadd.f32 %v2382, %v2400
    %v2417 = vadd.f32 %v2383, %v2401
    %v2418 = vadd.f32 %v2384, %v2402
    %v2419 = vadd.f32 %v2385, %v2403
    %v2420 = vadd.f32 %v2386, %v2404
    %v2421 = vadd.f32 %v2387, %v2405
    %v2422 = vadd.f32 %v2388, %v2406
    %v2423 = vadd.f32 %v2389, %v2407
    %v2424 = vadd.f32 %v2390, %v2408
    %v2425 = vadd.f32 %v2391, %v2409
    %v2426 = vadd.f32 %v2392, %v2410
    %v2427 = vadd.f32 %v2393, %v2411
    %v2428 = vadd.f32 %v2394, %v2412
    %v2429 = vadd.f32 %v2395, %v2413
    %v2430 = vadd.f32 %v2396, %v2414
    %s2431 = scalar_lea.vmem [#allocation2], 112
    %v2432 = vld [vmem:[%s2431] sm:$0xff]
    %v2433 = vmul.f32 %v1698, %v2432
    %v2434 = vmul.f32 %v1702, %v2432
    %v2435 = vmul.f32 %v1706, %v2432
    %v2436 = vmul.f32 %v1710, %v2432
    %v2437 = vmul.f32 %v1714, %v2432
    %v2438 = vmul.f32 %v1718, %v2432
    %v2439 = vmul.f32 %v1722, %v2432
    %v2440 = vmul.f32 %v1726, %v2432
    %v2441 = vmul.f32 %v1730, %v2432
    %v2442 = vmul.f32 %v1734, %v2432
    %v2443 = vmul.f32 %v1738, %v2432
    %v2444 = vmul.f32 %v1742, %v2432
    %v2445 = vmul.f32 %v1746, %v2432
    %v2446 = vmul.f32 %v1750, %v2432
    %v2447 = vmul.f32 %v1754, %v2432
    %v2448 = vmul.f32 %v1758, %v2432
    %v2449 = vadd.f32 %v2415, %v2433
    %v2450 = vadd.f32 %v2416, %v2434
    %v2451 = vadd.f32 %v2417, %v2435
    %v2452 = vadd.f32 %v2418, %v2436
    %v2453 = vadd.f32 %v2419, %v2437
    %v2454 = vadd.f32 %v2420, %v2438
    %v2455 = vadd.f32 %v2421, %v2439
    %v2456 = vadd.f32 %v2422, %v2440
    %v2457 = vadd.f32 %v2423, %v2441
    %v2458 = vadd.f32 %v2424, %v2442
    %v2459 = vadd.f32 %v2425, %v2443
    %v2460 = vadd.f32 %v2426, %v2444
    %v2461 = vadd.f32 %v2427, %v2445
    %v2462 = vadd.f32 %v2428, %v2446
    %v2463 = vadd.f32 %v2429, %v2447
    %v2464 = vadd.f32 %v2430, %v2448
    %s2465 = scalar_lea.vmem [#allocation2], 120
    %v2466 = vld [vmem:[%s2465] sm:$0xff]
    %v2467 = vmul.f32 %v1812, %v2466
    %v2468 = vmul.f32 %v1816, %v2466
    %v2469 = vmul.f32 %v1820, %v2466
    %v2470 = vmul.f32 %v1824, %v2466
    %v2471 = vmul.f32 %v1828, %v2466
    %v2472 = vmul.f32 %v1832, %v2466
    %v2473 = vmul.f32 %v1836, %v2466
    %v2474 = vmul.f32 %v1840, %v2466
    %v2475 = vmul.f32 %v1844, %v2466
    %v2476 = vmul.f32 %v1848, %v2466
    %v2477 = vmul.f32 %v1852, %v2466
    %v2478 = vmul.f32 %v1856, %v2466
    %v2479 = vmul.f32 %v1860, %v2466
    %v2480 = vmul.f32 %v1864, %v2466
    %v2481 = vmul.f32 %v1868, %v2466
    %v2482 = vmul.f32 %v1872, %v2466
    %v2483 = vadd.f32 %v2449, %v2467
    %v2484 = vadd.f32 %v2450, %v2468
    %v2485 = vadd.f32 %v2451, %v2469
    %v2486 = vadd.f32 %v2452, %v2470
    %v2487 = vadd.f32 %v2453, %v2471
    %v2488 = vadd.f32 %v2454, %v2472
    %v2489 = vadd.f32 %v2455, %v2473
    %v2490 = vadd.f32 %v2456, %v2474
    %v2491 = vadd.f32 %v2457, %v2475
    %v2492 = vadd.f32 %v2458, %v2476
    %v2493 = vadd.f32 %v2459, %v2477
    %v2494 = vadd.f32 %v2460, %v2478
    %v2495 = vadd.f32 %v2461, %v2479
    %v2496 = vadd.f32 %v2462, %v2480
    %v2497 = vadd.f32 %v2463, %v2481
    %v2498 = vadd.f32 %v2464, %v2482
    %s2499 = scalar_lea.vmem [#allocation2], 128
    %v2500 = vld [vmem:[%s2499] sm:$0xff]
    %v2501 = vmul.f32 %v1926, %v2500
    %v2502 = vmul.f32 %v1930, %v2500
    %v2503 = vmul.f32 %v1934, %v2500
    %v2504 = vmul.f32 %v1938, %v2500
    %v2505 = vmul.f32 %v1942, %v2500
    %v2506 = vmul.f32 %v1946, %v2500
    %v2507 = vmul.f32 %v1950, %v2500
    %v2508 = vmul.f32 %v1954, %v2500
    %v2509 = vmul.f32 %v1958, %v2500
    %v2510 = vmul.f32 %v1962, %v2500
    %v2511 = vmul.f32 %v1966, %v2500
    %v2512 = vmul.f32 %v1970, %v2500
    %v2513 = vmul.f32 %v1974, %v2500
    %v2514 = vmul.f32 %v1978, %v2500
    %v2515 = vmul.f32 %v1982, %v2500
    %v2516 = vmul.f32 %v1986, %v2500
    %v2517 = vadd.f32 %v2483, %v2501
    %v2518 = vadd.f32 %v2484, %v2502
    %v2519 = vadd.f32 %v2485, %v2503
    %v2520 = vadd.f32 %v2486, %v2504
    %v2521 = vadd.f32 %v2487, %v2505
    %v2522 = vadd.f32 %v2488, %v2506
    %v2523 = vadd.f32 %v2489, %v2507
    %v2524 = vadd.f32 %v2490, %v2508
    %v2525 = vadd.f32 %v2491, %v2509
    %v2526 = vadd.f32 %v2492, %v2510
    %v2527 = vadd.f32 %v2493, %v2511
    %v2528 = vadd.f32 %v2494, %v2512
    %v2529 = vadd.f32 %v2495, %v2513
    %v2530 = vadd.f32 %v2496, %v2514
    %v2531 = vadd.f32 %v2497, %v2515
    %v2532 = vadd.f32 %v2498, %v2516
    %s2533 = scalar_lea.vmem [#allocation2], 136
    %v2534 = vld [vmem:[%s2533] sm:$0xff]
    %v2535 = vmul.f32 %v2040, %v2534
    %v2536 = vmul.f32 %v2044, %v2534
    %v2537 = vmul.f32 %v2048, %v2534
    %v2538 = vmul.f32 %v2052, %v2534
    %v2539 = vmul.f32 %v2056, %v2534
    %v2540 = vmul.f32 %v2060, %v2534
    %v2541 = vmul.f32 %v2064, %v2534
    %v2542 = vmul.f32 %v2068, %v2534
    %v2543 = vmul.f32 %v2072, %v2534
    %v2544 = vmul.f32 %v2076, %v2534
    %v2545 = vmul.f32 %v2080, %v2534
    %v2546 = vmul.f32 %v2084, %v2534
    %v2547 = vmul.f32 %v2088, %v2534
    %v2548 = vmul.f32 %v2092, %v2534
    %v2549 = vmul.f32 %v2096, %v2534
    %v2550 = vmul.f32 %v2100, %v2534
    %v2551 = vadd.f32 %v2517, %v2535
    %v2552 = vadd.f32 %v2518, %v2536
    %v2553 = vadd.f32 %v2519, %v2537
    %v2554 = vadd.f32 %v2520, %v2538
    %v2555 = vadd.f32 %v2521, %v2539
    %v2556 = vadd.f32 %v2522, %v2540
    %v2557 = vadd.f32 %v2523, %v2541
    %v2558 = vadd.f32 %v2524, %v2542
    %v2559 = vadd.f32 %v2525, %v2543
    %v2560 = vadd.f32 %v2526, %v2544
    %v2561 = vadd.f32 %v2527, %v2545
    %v2562 = vadd.f32 %v2528, %v2546
    %v2563 = vadd.f32 %v2529, %v2547
    %v2564 = vadd.f32 %v2530, %v2548
    %v2565 = vadd.f32 %v2531, %v2549
    %v2566 = vadd.f32 %v2532, %v2550
    %v2567 = vadd.f32 %v2551, %v2152
    %v2568 = vadd.f32 %v2552, %v2156
    %v2569 = vadd.f32 %v2553, %v2160
    %v2570 = vadd.f32 %v2554, %v2164
    %v2571 = vadd.f32 %v2555, %v2168
    %v2572 = vadd.f32 %v2556, %v2172
    %v2573 = vadd.f32 %v2557, %v2176
    %v2574 = vadd.f32 %v2558, %v2180
    %v2575 = vadd.f32 %v2559, %v2184
    %v2576 = vadd.f32 %v2560, %v2188
    %v2577 = vadd.f32 %v2561, %v2192
    %v2578 = vadd.f32 %v2562, %v2196
    %v2579 = vadd.f32 %v2563, %v2200
    %v2580 = vadd.f32 %v2564, %v2204
    %v2581 = vadd.f32 %v2565, %v2208
    %v2582 = vadd.f32 %v2566, %v2212
    %v2583 = vmax.f32 %v2567, 0.0
    %v2584 = vmax.f32 %v2568, 0.0
    %v2585 = vmax.f32 %v2569, 0.0
    %v2586 = vmax.f32 %v2570, 0.0
    %v2587 = vmax.f32 %v2571, 0.0
    %v2588 = vmax.f32 %v2572, 0.0
    %v2589 = vmax.f32 %v2573, 0.0
    %v2590 = vmax.f32 %v2574, 0.0
    %v2591 = vmax.f32 %v2575, 0.0
    %v2592 = vmax.f32 %v2576, 0.0
    %v2593 = vmax.f32 %v2577, 0.0
    %v2594 = vmax.f32 %v2578, 0.0
    %v2595 = vmax.f32 %v2579, 0.0
    %v2596 = vmax.f32 %v2580, 0.0
    %v2597 = vmax.f32 %v2581, 0.0
    %v2598 = vmax.f32 %v2582, 0.0
    %v2599 = vmax.f32 %v2245, %v2583
    %v2600 = vmax.f32 %v2246, %v2584
    %v2601 = vmax.f32 %v2247, %v2585
    %v2602 = vmax.f32 %v2248, %v2586
    %v2603 = vmax.f32 %v2249, %v2587
    %v2604 = vmax.f32 %v2250, %v2588
    %v2605 = vmax.f32 %v2251, %v2589
    %v2606 = vmax.f32 %v2252, %v2590
    %v2607 = vmax.f32 %v2253, %v2591
    %v2608 = vmax.f32 %v2254, %v2592
    %v2609 = vmax.f32 %v2255, %v2593
    %v2610 = vmax.f32 %v2256, %v2594
    %v2611 = vmax.f32 %v2257, %v2595
    %v2612 = vmax.f32 %v2258, %v2596
    %v2613 = vmax.f32 %v2259, %v2597
    %v2614 = vmax.f32 %v2260, %v2598
    %s2615 = scalar_lea.vmem [#allocation2], 144
    %v2616 = vld [vmem:[%s2615] sm:$0xff]
    %v2617 = vmul.f32 %v1128, %v2616
    %v2618 = vmul.f32 %v1132, %v2616
    %v2619 = vmul.f32 %v1136, %v2616
    %v2620 = vmul.f32 %v1140, %v2616
    %v2621 = vmul.f32 %v1144, %v2616
    %v2622 = vmul.f32 %v1148, %v2616
    %v2623 = vmul.f32 %v1152, %v2616
    %v2624 = vmul.f32 %v1156, %v2616
    %v2625 = vmul.f32 %v1160, %v2616
    %v2626 = vmul.f32 %v1164, %v2616
    %v2627 = vmul.f32 %v1168, %v2616
    %v2628 = vmul.f32 %v1172, %v2616
    %v2629 = vmul.f32 %v1176, %v2616
    %v2630 = vmul.f32 %v1180, %v2616
    %v2631 = vmul.f32 %v1184, %v2616
    %v2632 = vmul.f32 %v1188, %v2616
    %v2633 = vadd.f32 %v2617, 0.0
    %v2634 = vadd.f32 %v2618, 0.0
    %v2635 = vadd.f32 %v2619, 0.0
    %v2636 = vadd.f32 %v2620, 0.0
    %v2637 = vadd.f32 %v2621, 0.0
    %v2638 = vadd.f32 %v2622, 0.0
    %v2639 = vadd.f32 %v2623, 0.0
    %v2640 = vadd.f32 %v2624, 0.0
    %v2641 = vadd.f32 %v2625, 0.0
    %v2642 = vadd.f32 %v2626, 0.0
    %v2643 = vadd.f32 %v2627, 0.0
    %v2644 = vadd.f32 %v2628, 0.0
    %v2645 = vadd.f32 %v2629, 0.0
    %v2646 = vadd.f32 %v2630, 0.0
    %v2647 = vadd.f32 %v2631, 0.0
    %v2648 = vadd.f32 %v2632, 0.0
    %s2649 = scalar_lea.vmem [#allocation2], 152
    %v2650 = vld [vmem:[%s2649] sm:$0xff]
    %v2651 = vmul.f32 %v1242, %v2650
    %v2652 = vmul.f32 %v1246, %v2650
    %v2653 = vmul.f32 %v1250, %v2650
    %v2654 = vmul.f32 %v1254, %v2650
    %v2655 = vmul.f32 %v1258, %v2650
    %v2656 = vmul.f32 %v1262, %v2650
    %v2657 = vmul.f32 %v1266, %v2650
    %v2658 = vmul.f32 %v1270, %v2650
    %v2659 = vmul.f32 %v1274, %v2650
    %v2660 = vmul.f32 %v1278, %v2650
    %v2661 = vmul.f32 %v1282, %v2650
    %v2662 = vmul.f32 %v1286, %v2650
    %v2663 = vmul.f32 %v1290, %v2650
    %v2664 = vmul.f32 %v1294, %v2650
    %v2665 = vmul.f32 %v1298, %v2650
    %v2666 = vmul.f32 %v1302, %v2650
    %v2667 = vadd.f32 %v2633, %v2651
    %v2668 = vadd.f32 %v2634, %v2652
    %v2669 = vadd.f32 %v2635, %v2653
    %v2670 = vadd.f32 %v2636, %v2654
    %v2671 = vadd.f32 %v2637, %v2655
    %v2672 = vadd.f32 %v2638, %v2656
    %v2673 = vadd.f32 %v2639, %v2657
    %v2674 = vadd.f32 %v2640, %v2658
    %v2675 = vadd.f32 %v2641, %v2659
    %v2676 = vadd.f32 %v2642, %v2660
    %v2677 = vadd.f32 %v2643, %v2661
    %v2678 = vadd.f32 %v2644, %v2662
    %v2679 = vadd.f32 %v2645, %v2663
    %v2680 = vadd.f32 %v2646, %v2664
    %v2681 = vadd.f32 %v2647, %v2665
    %v2682 = vadd.f32 %v2648, %v2666
    %s2683 = scalar_lea.vmem [#allocation2], 160
    %v2684 = vld [vmem:[%s2683] sm:$0xff]
    %v2685 = vmul.f32 %v1356, %v2684
    %v2686 = vmul.f32 %v1360, %v2684
    %v2687 = vmul.f32 %v1364, %v2684
    %v2688 = vmul.f32 %v1368, %v2684
    %v2689 = vmul.f32 %v1372, %v2684
    %v2690 = vmul.f32 %v1376, %v2684
    %v2691 = vmul.f32 %v1380, %v2684
    %v2692 = vmul.f32 %v1384, %v2684
    %v2693 = vmul.f32 %v1388, %v2684
    %v2694 = vmul.f32 %v1392, %v2684
    %v2695 = vmul.f32 %v1396, %v2684
    %v2696 = vmul.f32 %v1400, %v2684
    %v2697 = vmul.f32 %v1404, %v2684
    %v2698 = vmul.f32 %v1408, %v2684
    %v2699 = vmul.f32 %v1412, %v2684
    %v2700 = vmul.f32 %v1416, %v2684
    %v2701 = vadd.f32 %v2667, %v2685
    %v2702 = vadd.f32 %v2668, %v2686
    %v2703 = vadd.f32 %v2669, %v2687
    %v2704 = vadd.f32 %v2670, %v2688
    %v2705 = vadd.f32 %v2671, %v2689
    %v2706 = vadd.f32 %v2672, %v2690
    %v2707 = vadd.f32 %v2673, %v2691
    %v2708 = vadd.f32 %v2674, %v2692
    %v2709 = vadd.f32 %v2675, %v2693
    %v2710 = vadd.f32 %v2676, %v2694
    %v2711 = vadd.f32 %v2677, %v2695
    %v2712 = vadd.f32 %v2678, %v2696
    %v2713 = vadd.f32 %v2679, %v2697
    %v2714 = vadd.f32 %v2680, %v2698
    %v2715 = vadd.f32 %v2681, %v2699
    %v2716 = vadd.f32 %v2682, %v2700
    %s2717 = scalar_lea.vmem [#allocation2], 168
    %v2718 = vld [vmem:[%s2717] sm:$0xff]
    %v2719 = vmul.f32 %v1470, %v2718
    %v2720 = vmul.f32 %v1474, %v2718
    %v2721 = vmul.f32 %v1478, %v2718
    %v2722 = vmul.f32 %v1482, %v2718
    %v2723 = vmul.f32 %v1486, %v2718
    %v2724 = vmul.f32 %v1490, %v2718
    %v2725 = vmul.f32 %v1494, %v2718
    %v2726 = vmul.f32 %v1498, %v2718
    %v2727 = vmul.f32 %v1502, %v2718
    %v2728 = vmul.f32 %v1506, %v2718
    %v2729 = vmul.f32 %v1510, %v2718
    %v2730 = vmul.f32 %v1514, %v2718
    %v2731 = vmul.f32 %v1518, %v2718
    %v2732 = vmul.f32 %v1522, %v2718
    %v2733 = vmul.f32 %v1526, %v2718
    %v2734 = vmul.f32 %v1530, %v2718
    %v2735 = vadd.f32 %v2701, %v2719
    %v2736 = vadd.f32 %v2702, %v2720
    %v2737 = vadd.f32 %v2703, %v2721
    %v2738 = vadd.f32 %v2704, %v2722
    %v2739 = vadd.f32 %v2705, %v2723
    %v2740 = vadd.f32 %v2706, %v2724
    %v2741 = vadd.f32 %v2707, %v2725
    %v2742 = vadd.f32 %v2708, %v2726
    %v2743 = vadd.f32 %v2709, %v2727
    %v2744 = vadd.f32 %v2710, %v2728
    %v2745 = vadd.f32 %v2711, %v2729
    %v2746 = vadd.f32 %v2712, %v2730
    %v2747 = vadd.f32 %v2713, %v2731
    %v2748 = vadd.f32 %v2714, %v2732
    %v2749 = vadd.f32 %v2715, %v2733
    %v2750 = vadd.f32 %v2716, %v2734
    %s2751 = scalar_lea.vmem [#allocation2], 176
    %v2752 = vld [vmem:[%s2751] sm:$0xff]
    %v2753 = vmul.f32 %v1584, %v2752
    %v2754 = vmul.f32 %v1588, %v2752
    %v2755 = vmul.f32 %v1592, %v2752
    %v2756 = vmul.f32 %v1596, %v2752
    %v2757 = vmul.f32 %v1600, %v2752
    %v2758 = vmul.f32 %v1604, %v2752
    %v2759 = vmul.f32 %v1608, %v2752
    %v2760 = vmul.f32 %v1612, %v2752
    %v2761 = vmul.f32 %v1616, %v2752
    %v2762 = vmul.f32 %v1620, %v2752
    %v2763 = vmul.f32 %v1624, %v2752
    %v2764 = vmul.f32 %v1628, %v2752
    %v2765 = vmul.f32 %v1632, %v2752
    %v2766 = vmul.f32 %v1636, %v2752
    %v2767 = vmul.f32 %v1640, %v2752
    %v2768 = vmul.f32 %v1644, %v2752
    %v2769 = vadd.f32 %v2735, %v2753
    %v2770 = vadd.f32 %v2736, %v2754
    %v2771 = vadd.f32 %v2737, %v2755
    %v2772 = vadd.f32 %v2738, %v2756
    %v2773 = vadd.f32 %v2739, %v2757
    %v2774 = vadd.f32 %v2740, %v2758
    %v2775 = vadd.f32 %v2741, %v2759
    %v2776 = vadd.f32 %v2742, %v2760
    %v2777 = vadd.f32 %v2743, %v2761
    %v2778 = vadd.f32 %v2744, %v2762
    %v2779 = vadd.f32 %v2745, %v2763
    %v2780 = vadd.f32 %v2746, %v2764
    %v2781 = vadd.f32 %v2747, %v2765
    %v2782 = vadd.f32 %v2748, %v2766
    %v2783 = vadd.f32 %v2749, %v2767
    %v2784 = vadd.f32 %v2750, %v2768
    %s2785 = scalar_lea.vmem [#allocation2], 184
    %v2786 = vld [vmem:[%s2785] sm:$0xff]
    %v2787 = vmul.f32 %v1698, %v2786
    %v2788 = vmul.f32 %v1702, %v2786
    %v2789 = vmul.f32 %v1706, %v2786
    %v2790 = vmul.f32 %v1710, %v2786
    %v2791 = vmul.f32 %v1714, %v2786
    %v2792 = vmul.f32 %v1718, %v2786
    %v2793 = vmul.f32 %v1722, %v2786
    %v2794 = vmul.f32 %v1726, %v2786
    %v2795 = vmul.f32 %v1730, %v2786
    %v2796 = vmul.f32 %v1734, %v2786
    %v2797 = vmul.f32 %v1738, %v2786
    %v2798 = vmul.f32 %v1742, %v2786
    %v2799 = vmul.f32 %v1746, %v2786
    %v2800 = vmul.f32 %v1750, %v2786
    %v2801 = vmul.f32 %v1754, %v2786
    %v2802 = vmul.f32 %v1758, %v2786
    %v2803 = vadd.f32 %v2769, %v2787
    %v2804 = vadd.f32 %v2770, %v2788
    %v2805 = vadd.f32 %v2771, %v2789
    %v2806 = vadd.f32 %v2772, %v2790
    %v2807 = vadd.f32 %v2773, %v2791
    %v2808 = vadd.f32 %v2774, %v2792
    %v2809 = vadd.f32 %v2775, %v2793
    %v2810 = vadd.f32 %v2776, %v2794
    %v2811 = vadd.f32 %v2777, %v2795
    %v2812 = vadd.f32 %v2778, %v2796
    %v2813 = vadd.f32 %v2779, %v2797
    %v2814 = vadd.f32 %v2780, %v2798
    %v2815 = vadd.f32 %v2781, %v2799
    %v2816 = vadd.f32 %v2782, %v2800
    %v2817 = vadd.f32 %v2783, %v2801
    %v2818 = vadd.f32 %v2784, %v2802
    %s2819 = scalar_lea.vmem [#allocation2], 192
    %v2820 = vld [vmem:[%s2819] sm:$0xff]
    %v2821 = vmul.f32 %v1812, %v2820
    %v2822 = vmul.f32 %v1816, %v2820
    %v2823 = vmul.f32 %v1820, %v2820
    %v2824 = vmul.f32 %v1824, %v2820
    %v2825 = vmul.f32 %v1828, %v2820
    %v2826 = vmul.f32 %v1832, %v2820
    %v2827 = vmul.f32 %v1836, %v2820
    %v2828 = vmul.f32 %v1840, %v2820
    %v2829 = vmul.f32 %v1844, %v2820
    %v2830 = vmul.f32 %v1848, %v2820
    %v2831 = vmul.f32 %v1852, %v2820
    %v2832 = vmul.f32 %v1856, %v2820
    %v2833 = vmul.f32 %v1860, %v2820
    %v2834 = vmul.f32 %v1864, %v2820
    %v2835 = vmul.f32 %v1868, %v2820
    %v2836 = vmul.f32 %v1872, %v2820
    %v2837 = vadd.f32 %v2803, %v2821
    %v2838 = vadd.f32 %v2804, %v2822
    %v2839 = vadd.f32 %v2805, %v2823
    %v2840 = vadd.f32 %v2806, %v2824
    %v2841 = vadd.f32 %v2807, %v2825
    %v2842 = vadd.f32 %v2808, %v2826
    %v2843 = vadd.f32 %v2809, %v2827
    %v2844 = vadd.f32 %v2810, %v2828
    %v2845 = vadd.f32 %v2811, %v2829
    %v2846 = vadd.f32 %v2812, %v2830
    %v2847 = vadd.f32 %v2813, %v2831
    %v2848 = vadd.f32 %v2814, %v2832
    %v2849 = vadd.f32 %v2815, %v2833
    %v2850 = vadd.f32 %v2816, %v2834
    %v2851 = vadd.f32 %v2817, %v2835
    %v2852 = vadd.f32 %v2818, %v2836
    %s2853 = scalar_lea.vmem [#allocation2], 200
    %v2854 = vld [vmem:[%s2853] sm:$0xff]
    %v2855 = vmul.f32 %v1926, %v2854
    %v2856 = vmul.f32 %v1930, %v2854
    %v2857 = vmul.f32 %v1934, %v2854
    %v2858 = vmul.f32 %v1938, %v2854
    %v2859 = vmul.f32 %v1942, %v2854
    %v2860 = vmul.f32 %v1946, %v2854
    %v2861 = vmul.f32 %v1950, %v2854
    %v2862 = vmul.f32 %v1954, %v2854
    %v2863 = vmul.f32 %v1958, %v2854
    %v2864 = vmul.f32 %v1962, %v2854
    %v2865 = vmul.f32 %v1966, %v2854
    %v2866 = vmul.f32 %v1970, %v2854
    %v2867 = vmul.f32 %v1974, %v2854
    %v2868 = vmul.f32 %v1978, %v2854
    %v2869 = vmul.f32 %v1982, %v2854
    %v2870 = vmul.f32 %v1986, %v2854
    %v2871 = vadd.f32 %v2837, %v2855
    %v2872 = vadd.f32 %v2838, %v2856
    %v2873 = vadd.f32 %v2839, %v2857
    %v2874 = vadd.f32 %v2840, %v2858
    %v2875 = vadd.f32 %v2841, %v2859
    %v2876 = vadd.f32 %v2842, %v2860
    %v2877 = vadd.f32 %v2843, %v2861
    %v2878 = vadd.f32 %v2844, %v2862
    %v2879 = vadd.f32 %v2845, %v2863
    %v2880 = vadd.f32 %v2846, %v2864
    %v2881 = vadd.f32 %v2847, %v2865
    %v2882 = vadd.f32 %v2848, %v2866
    %v2883 = vadd.f32 %v2849, %v2867
    %v2884 = vadd.f32 %v2850, %v2868
    %v2885 = vadd.f32 %v2851, %v2869
    %v2886 = vadd.f32 %v2852, %v2870
    %s2887 = scalar_lea.vmem [#allocation2], 208
    %v2888 = vld [vmem:[%s2887] sm:$0xff]
    %v2889 = vmul.f32 %v2040, %v2888
    %v2890 = vmul.f32 %v2044, %v2888
    %v2891 = vmul.f32 %v2048, %v2888
    %v2892 = vmul.f32 %v2052, %v2888
    %v2893 = vmul.f32 %v2056, %v2888
    %v2894 = vmul.f32 %v2060, %v2888
    %v2895 = vmul.f32 %v2064, %v2888
    %v2896 = vmul.f32 %v2068, %v2888
    %v2897 = vmul.f32 %v2072, %v2888
    %v2898 = vmul.f32 %v2076, %v2888
    %v2899 = vmul.f32 %v2080, %v2888
    %v2900 = vmul.f32 %v2084, %v2888
    %v2901 = vmul.f32 %v2088, %v2888
    %v2902 = vmul.f32 %v2092, %v2888
    %v2903 = vmul.f32 %v2096, %v2888
    %v2904 = vmul.f32 %v2100, %v2888
    %v2905 = vadd.f32 %v2871, %v2889
    %v2906 = vadd.f32 %v2872, %v2890
    %v2907 = vadd.f32 %v2873, %v2891
    %v2908 = vadd.f32 %v2874, %v2892
    %v2909 = vadd.f32 %v2875, %v2893
    %v2910 = vadd.f32 %v2876, %v2894
    %v2911 = vadd.f32 %v2877, %v2895
    %v2912 = vadd.f32 %v2878, %v2896
    %v2913 = vadd.f32 %v2879, %v2897
    %v2914 = vadd.f32 %v2880, %v2898
    %v2915 = vadd.f32 %v2881, %v2899
    %v2916 = vadd.f32 %v2882, %v2900
    %v2917 = vadd.f32 %v2883, %v2901
    %v2918 = vadd.f32 %v2884, %v2902
    %v2919 = vadd.f32 %v2885, %v2903
    %v2920 = vadd.f32 %v2886, %v2904
    %v2921 = vadd.f32 %v2905, %v2152
    %v2922 = vadd.f32 %v2906, %v2156
    %v2923 = vadd.f32 %v2907, %v2160
    %v2924 = vadd.f32 %v2908, %v2164
    %v2925 = vadd.f32 %v2909, %v2168
    %v2926 = vadd.f32 %v2910, %v2172
    %v2927 = vadd.f32 %v2911, %v2176
    %v2928 = vadd.f32 %v2912, %v2180
    %v2929 = vadd.f32 %v2913, %v2184
    %v2930 = vadd.f32 %v2914, %v2188
    %v2931 = vadd.f32 %v2915, %v2192
    %v2932 = vadd.f32 %v2916, %v2196
    %v2933 = vadd.f32 %v2917, %v2200
    %v2934 = vadd.f32 %v2918, %v2204
    %v2935 = vadd.f32 %v2919, %v2208
    %v2936 = vadd.f32 %v2920, %v2212
    %v2937 = vmax.f32 %v2921, 0.0
    %v2938 = vmax.f32 %v2922, 0.0
    %v2939 = vmax.f32 %v2923, 0.0
    %v2940 = vmax.f32 %v2924, 0.0
    %v2941 = vmax.f32 %v2925, 0.0
    %v2942 = vmax.f32 %v2926, 0.0
    %v2943 = vmax.f32 %v2927, 0.0
    %v2944 = vmax.f32 %v2928, 0.0
    %v2945 = vmax.f32 %v2929, 0.0
    %v2946 = vmax.f32 %v2930, 0.0
    %v2947 = vmax.f32 %v2931, 0.0
    %v2948 = vmax.f32 %v2932, 0.0
    %v2949 = vmax.f32 %v2933, 0.0
    %v2950 = vmax.f32 %v2934, 0.0
    %v2951 = vmax.f32 %v2935, 0.0
    %v2952 = vmax.f32 %v2936, 0.0
    %v2953 = vmax.f32 %v2599, %v2937
    %v2954 = vmax.f32 %v2600, %v2938
    %v2955 = vmax.f32 %v2601, %v2939
    %v2956 = vmax.f32 %v2602, %v2940
    %v2957 = vmax.f32 %v2603, %v2941
    %v2958 = vmax.f32 %v2604, %v2942
    %v2959 = vmax.f32 %v2605, %v2943
    %v2960 = vmax.f32 %v2606, %v2944
    %v2961 = vmax.f32 %v2607, %v2945
    %v2962 = vmax.f32 %v2608, %v2946
    %v2963 = vmax.f32 %v2609, %v2947
    %v2964 = vmax.f32 %v2610, %v2948
    %v2965 = vmax.f32 %v2611, %v2949
    %v2966 = vmax.f32 %v2612, %v2950
    %v2967 = vmax.f32 %v2613, %v2951
    %v2968 = vmax.f32 %v2614, %v2952
    %s2969 = scalar_lea.vmem [#allocation2], 216
    %v2970 = vld [vmem:[%s2969] sm:$0xff]
    %v2971 = vmul.f32 %v1128, %v2970
    %v2972 = vmul.f32 %v1132, %v2970
    %v2973 = vmul.f32 %v1136, %v2970
    %v2974 = vmul.f32 %v1140, %v2970
    %v2975 = vmul.f32 %v1144, %v2970
    %v2976 = vmul.f32 %v1148, %v2970
    %v2977 = vmul.f32 %v1152, %v2970
    %v2978 = vmul.f32 %v1156, %v2970
    %v2979 = vmul.f32 %v1160, %v2970
    %v2980 = vmul.f32 %v1164, %v2970
    %v2981 = vmul.f32 %v1168, %v2970
    %v2982 = vmul.f32 %v1172, %v2970
    %v2983 = vmul.f32 %v1176, %v2970
    %v2984 = vmul.f32 %v1180, %v2970
    %v2985 = vmul.f32 %v1184, %v2970
    %v2986 = vmul.f32 %v1188, %v2970
    %v2987 = vadd.f32 %v2971, 0.0
    %v2988 = vadd.f32 %v2972, 0.0
    %v2989 = vadd.f32 %v2973, 0.0
    %v2990 = vadd.f32 %v2974, 0.0
    %v2991 = vadd.f32 %v2975, 0.0
    %v2992 = vadd.f32 %v2976, 0.0
    %v2993 = vadd.f32 %v2977, 0.0
    %v2994 = vadd.f32 %v2978, 0.0
    %v2995 = vadd.f32 %v2979, 0.0
    %v2996 = vadd.f32 %v2980, 0.0
    %v2997 = vadd.f32 %v2981, 0.0
    %v2998 = vadd.f32 %v2982, 0.0
    %v2999 = vadd.f32 %v2983, 0.0
    %v3000 = vadd.f32 %v2984, 0.0
    %v3001 = vadd.f32 %v2985, 0.0
    %v3002 = vadd.f32 %v2986, 0.0
    %s3003 = scalar_lea.vmem [#allocation2], 224
    %v3004 = vld [vmem:[%s3003] sm:$0xff]
    %v3005 = vmul.f32 %v1242, %v3004
    %v3006 = vmul.f32 %v1246, %v3004
    %v3007 = vmul.f32 %v1250, %v3004
    %v3008 = vmul.f32 %v1254, %v3004
    %v3009 = vmul.f32 %v1258, %v3004
    %v3010 = vmul.f32 %v1262, %v3004
    %v3011 = vmul.f32 %v1266, %v3004
    %v3012 = vmul.f32 %v1270, %v3004
    %v3013 = vmul.f32 %v1274, %v3004
    %v3014 = vmul.f32 %v1278, %v3004
    %v3015 = vmul.f32 %v1282, %v3004
    %v3016 = vmul.f32 %v1286, %v3004
    %v3017 = vmul.f32 %v1290, %v3004
    %v3018 = vmul.f32 %v1294, %v3004
    %v3019 = vmul.f32 %v1298, %v3004
    %v3020 = vmul.f32 %v1302, %v3004
    %v3021 = vadd.f32 %v2987, %v3005
    %v3022 = vadd.f32 %v2988, %v3006
    %v3023 = vadd.f32 %v2989, %v3007
    %v3024 = vadd.f32 %v2990, %v3008
    %v3025 = vadd.f32 %v2991, %v3009
    %v3026 = vadd.f32 %v2992, %v3010
    %v3027 = vadd.f32 %v2993, %v3011
    %v3028 = vadd.f32 %v2994, %v3012
    %v3029 = vadd.f32 %v2995, %v3013
    %v3030 = vadd.f32 %v2996, %v3014
    %v3031 = vadd.f32 %v2997, %v3015
    %v3032 = vadd.f32 %v2998, %v3016
    %v3033 = vadd.f32 %v2999, %v3017
    %v3034 = vadd.f32 %v3000, %v3018
    %v3035 = vadd.f32 %v3001, %v3019
    %v3036 = vadd.f32 %v3002, %v3020
    %s3037 = scalar_lea.vmem [#allocation2], 232
    %v3038 = vld [vmem:[%s3037] sm:$0xff]
    %v3039 = vmul.f32 %v1356, %v3038
    %v3040 = vmul.f32 %v1360, %v3038
    %v3041 = vmul.f32 %v1364, %v3038
    %v3042 = vmul.f32 %v1368, %v3038
    %v3043 = vmul.f32 %v1372, %v3038
    %v3044 = vmul.f32 %v1376, %v3038
    %v3045 = vmul.f32 %v1380, %v3038
    %v3046 = vmul.f32 %v1384, %v3038
    %v3047 = vmul.f32 %v1388, %v3038
    %v3048 = vmul.f32 %v1392, %v3038
    %v3049 = vmul.f32 %v1396, %v3038
    %v3050 = vmul.f32 %v1400, %v3038
    %v3051 = vmul.f32 %v1404, %v3038
    %v3052 = vmul.f32 %v1408, %v3038
    %v3053 = vmul.f32 %v1412, %v3038
    %v3054 = vmul.f32 %v1416, %v3038
    %v3055 = vadd.f32 %v3021, %v3039
    %v3056 = vadd.f32 %v3022, %v3040
    %v3057 = vadd.f32 %v3023, %v3041
    %v3058 = vadd.f32 %v3024, %v3042
    %v3059 = vadd.f32 %v3025, %v3043
    %v3060 = vadd.f32 %v3026, %v3044
    %v3061 = vadd.f32 %v3027, %v3045
    %v3062 = vadd.f32 %v3028, %v3046
    %v3063 = vadd.f32 %v3029, %v3047
    %v3064 = vadd.f32 %v3030, %v3048
    %v3065 = vadd.f32 %v3031, %v3049
    %v3066 = vadd.f32 %v3032, %v3050
    %v3067 = vadd.f32 %v3033, %v3051
    %v3068 = vadd.f32 %v3034, %v3052
    %v3069 = vadd.f32 %v3035, %v3053
    %v3070 = vadd.f32 %v3036, %v3054
    %s3071 = scalar_lea.vmem [#allocation2], 240
    %v3072 = vld [vmem:[%s3071] sm:$0xff]
    %v3073 = vmul.f32 %v1470, %v3072
    %v3074 = vmul.f32 %v1474, %v3072
    %v3075 = vmul.f32 %v1478, %v3072
    %v3076 = vmul.f32 %v1482, %v3072
    %v3077 = vmul.f32 %v1486, %v3072
    %v3078 = vmul.f32 %v1490, %v3072
    %v3079 = vmul.f32 %v1494, %v3072
    %v3080 = vmul.f32 %v1498, %v3072
    %v3081 = vmul.f32 %v1502, %v3072
    %v3082 = vmul.f32 %v1506, %v3072
    %v3083 = vmul.f32 %v1510, %v3072
    %v3084 = vmul.f32 %v1514, %v3072
    %v3085 = vmul.f32 %v1518, %v3072
    %v3086 = vmul.f32 %v1522, %v3072
    %v3087 = vmul.f32 %v1526, %v3072
    %v3088 = vmul.f32 %v1530, %v3072
    %v3089 = vadd.f32 %v3055, %v3073
    %v3090 = vadd.f32 %v3056, %v3074
    %v3091 = vadd.f32 %v3057, %v3075
    %v3092 = vadd.f32 %v3058, %v3076
    %v3093 = vadd.f32 %v3059, %v3077
    %v3094 = vadd.f32 %v3060, %v3078
    %v3095 = vadd.f32 %v3061, %v3079
    %v3096 = vadd.f32 %v3062, %v3080
    %v3097 = vadd.f32 %v3063, %v3081
    %v3098 = vadd.f32 %v3064, %v3082
    %v3099 = vadd.f32 %v3065, %v3083
    %v3100 = vadd.f32 %v3066, %v3084
    %v3101 = vadd.f32 %v3067, %v3085
    %v3102 = vadd.f32 %v3068, %v3086
    %v3103 = vadd.f32 %v3069, %v3087
    %v3104 = vadd.f32 %v3070, %v3088
    %s3105 = scalar_lea.vmem [#allocation2], 248
    %v3106 = vld [vmem:[%s3105] sm:$0xff]
    %v3107 = vmul.f32 %v1584, %v3106
    %v3108 = vmul.f32 %v1588, %v3106
    %v3109 = vmul.f32 %v1592, %v3106
    %v3110 = vmul.f32 %v1596, %v3106
    %v3111 = vmul.f32 %v1600, %v3106
    %v3112 = vmul.f32 %v1604, %v3106
    %v3113 = vmul.f32 %v1608, %v3106
    %v3114 = vmul.f32 %v1612, %v3106
    %v3115 = vmul.f32 %v1616, %v3106
    %v3116 = vmul.f32 %v1620, %v3106
    %v3117 = vmul.f32 %v1624, %v3106
    %v3118 = vmul.f32 %v1628, %v3106
    %v3119 = vmul.f32 %v1632, %v3106
    %v3120 = vmul.f32 %v1636, %v3106
    %v3121 = vmul.f32 %v1640, %v3106
    %v3122 = vmul.f32 %v1644, %v3106
    %v3123 = vadd.f32 %v3089, %v3107
    %v3124 = vadd.f32 %v3090, %v3108
    %v3125 = vadd.f32 %v3091, %v3109
    %v3126 = vadd.f32 %v3092, %v3110
    %v3127 = vadd.f32 %v3093, %v3111
    %v3128 = vadd.f32 %v3094, %v3112
    %v3129 = vadd.f32 %v3095, %v3113
    %v3130 = vadd.f32 %v3096, %v3114
    %v3131 = vadd.f32 %v3097, %v3115
    %v3132 = vadd.f32 %v3098, %v3116
    %v3133 = vadd.f32 %v3099, %v3117
    %v3134 = vadd.f32 %v3100, %v3118
    %v3135 = vadd.f32 %v3101, %v3119
    %v3136 = vadd.f32 %v3102, %v3120
    %v3137 = vadd.f32 %v3103, %v3121
    %v3138 = vadd.f32 %v3104, %v3122
    %s3139 = scalar_lea.vmem [#allocation2], 256
    %v3140 = vld [vmem:[%s3139] sm:$0xff]
    %v3141 = vmul.f32 %v1698, %v3140
    %v3142 = vmul.f32 %v1702, %v3140
    %v3143 = vmul.f32 %v1706, %v3140
    %v3144 = vmul.f32 %v1710, %v3140
    %v3145 = vmul.f32 %v1714, %v3140
    %v3146 = vmul.f32 %v1718, %v3140
    %v3147 = vmul.f32 %v1722, %v3140
    %v3148 = vmul.f32 %v1726, %v3140
    %v3149 = vmul.f32 %v1730, %v3140
    %v3150 = vmul.f32 %v1734, %v3140
    %v3151 = vmul.f32 %v1738, %v3140
    %v3152 = vmul.f32 %v1742, %v3140
    %v3153 = vmul.f32 %v1746, %v3140
    %v3154 = vmul.f32 %v1750, %v3140
    %v3155 = vmul.f32 %v1754, %v3140
    %v3156 = vmul.f32 %v1758, %v3140
    %v3157 = vadd.f32 %v3123, %v3141
    %v3158 = vadd.f32 %v3124, %v3142
    %v3159 = vadd.f32 %v3125, %v3143
    %v3160 = vadd.f32 %v3126, %v3144
    %v3161 = vadd.f32 %v3127, %v3145
    %v3162 = vadd.f32 %v3128, %v3146
    %v3163 = vadd.f32 %v3129, %v3147
    %v3164 = vadd.f32 %v3130, %v3148
    %v3165 = vadd.f32 %v3131, %v3149
    %v3166 = vadd.f32 %v3132, %v3150
    %v3167 = vadd.f32 %v3133, %v3151
    %v3168 = vadd.f32 %v3134, %v3152
    %v3169 = vadd.f32 %v3135, %v3153
    %v3170 = vadd.f32 %v3136, %v3154
    %v3171 = vadd.f32 %v3137, %v3155
    %v3172 = vadd.f32 %v3138, %v3156
    %s3173 = scalar_lea.vmem [#allocation2], 264
    %v3174 = vld [vmem:[%s3173] sm:$0xff]
    %v3175 = vmul.f32 %v1812, %v3174
    %v3176 = vmul.f32 %v1816, %v3174
    %v3177 = vmul.f32 %v1820, %v3174
    %v3178 = vmul.f32 %v1824, %v3174
    %v3179 = vmul.f32 %v1828, %v3174
    %v3180 = vmul.f32 %v1832, %v3174
    %v3181 = vmul.f32 %v1836, %v3174
    %v3182 = vmul.f32 %v1840, %v3174
    %v3183 = vmul.f32 %v1844, %v3174
    %v3184 = vmul.f32 %v1848, %v3174
    %v3185 = vmul.f32 %v1852, %v3174
    %v3186 = vmul.f32 %v1856, %v3174
    %v3187 = vmul.f32 %v1860, %v3174
    %v3188 = vmul.f32 %v1864, %v3174
    %v3189 = vmul.f32 %v1868, %v3174
    %v3190 = vmul.f32 %v1872, %v3174
    %v3191 = vadd.f32 %v3157, %v3175
    %v3192 = vadd.f32 %v3158, %v3176
    %v3193 = vadd.f32 %v3159, %v3177
    %v3194 = vadd.f32 %v3160, %v3178
    %v3195 = vadd.f32 %v3161, %v3179
    %v3196 = vadd.f32 %v3162, %v3180
    %v3197 = vadd.f32 %v3163, %v3181
    %v3198 = vadd.f32 %v3164, %v3182
    %v3199 = vadd.f32 %v3165, %v3183
    %v3200 = vadd.f32 %v3166, %v3184
    %v3201 = vadd.f32 %v3167, %v3185
    %v3202 = vadd.f32 %v3168, %v3186
    %v3203 = vadd.f32 %v3169, %v3187
    %v3204 = vadd.f32 %v3170, %v3188
    %v3205 = vadd.f32 %v3171, %v3189
    %v3206 = vadd.f32 %v3172, %v3190
    %s3207 = scalar_lea.vmem [#allocation2], 272
    %v3208 = vld [vmem:[%s3207] sm:$0xff]
    %v3209 = vmul.f32 %v1926, %v3208
    %v3210 = vmul.f32 %v1930, %v3208
    %v3211 = vmul.f32 %v1934, %v3208
    %v3212 = vmul.f32 %v1938, %v3208
    %v3213 = vmul.f32 %v1942, %v3208
    %v3214 = vmul.f32 %v1946, %v3208
    %v3215 = vmul.f32 %v1950, %v3208
    %v3216 = vmul.f32 %v1954, %v3208
    %v3217 = vmul.f32 %v1958, %v3208
    %v3218 = vmul.f32 %v1962, %v3208
    %v3219 = vmul.f32 %v1966, %v3208
    %v3220 = vmul.f32 %v1970, %v3208
    %v3221 = vmul.f32 %v1974, %v3208
    %v3222 = vmul.f32 %v1978, %v3208
    %v3223 = vmul.f32 %v1982, %v3208
    %v3224 = vmul.f32 %v1986, %v3208
    %v3225 = vadd.f32 %v3191, %v3209
    %v3226 = vadd.f32 %v3192, %v3210
    %v3227 = vadd.f32 %v3193, %v3211
    %v3228 = vadd.f32 %v3194, %v3212
    %v3229 = vadd.f32 %v3195, %v3213
    %v3230 = vadd.f32 %v3196, %v3214
    %v3231 = vadd.f32 %v3197, %v3215
    %v3232 = vadd.f32 %v3198, %v3216
    %v3233 = vadd.f32 %v3199, %v3217
    %v3234 = vadd.f32 %v3200, %v3218
    %v3235 = vadd.f32 %v3201, %v3219
    %v3236 = vadd.f32 %v3202, %v3220
    %v3237 = vadd.f32 %v3203, %v3221
    %v3238 = vadd.f32 %v3204, %v3222
    %v3239 = vadd.f32 %v3205, %v3223
    %v3240 = vadd.f32 %v3206, %v3224
    %s3241 = scalar_lea.vmem [#allocation2], 280
    %v3242 = vld [vmem:[%s3241] sm:$0xff]
    %v3243 = vmul.f32 %v2040, %v3242
    %v3244 = vmul.f32 %v2044, %v3242
    %v3245 = vmul.f32 %v2048, %v3242
    %v3246 = vmul.f32 %v2052, %v3242
    %v3247 = vmul.f32 %v2056, %v3242
    %v3248 = vmul.f32 %v2060, %v3242
    %v3249 = vmul.f32 %v2064, %v3242
    %v3250 = vmul.f32 %v2068, %v3242
    %v3251 = vmul.f32 %v2072, %v3242
    %v3252 = vmul.f32 %v2076, %v3242
    %v3253 = vmul.f32 %v2080, %v3242
    %v3254 = vmul.f32 %v2084, %v3242
    %v3255 = vmul.f32 %v2088, %v3242
    %v3256 = vmul.f32 %v2092, %v3242
    %v3257 = vmul.f32 %v2096, %v3242
    %v3258 = vmul.f32 %v2100, %v3242
    %v3259 = vadd.f32 %v3225, %v3243
    %v3260 = vadd.f32 %v3226, %v3244
    %v3261 = vadd.f32 %v3227, %v3245
    %v3262 = vadd.f32 %v3228, %v3246
    %v3263 = vadd.f32 %v3229, %v3247
    %v3264 = vadd.f32 %v3230, %v3248
    %v3265 = vadd.f32 %v3231, %v3249
    %v3266 = vadd.f32 %v3232, %v3250
    %v3267 = vadd.f32 %v3233, %v3251
    %v3268 = vadd.f32 %v3234, %v3252
    %v3269 = vadd.f32 %v3235, %v3253
    %v3270 = vadd.f32 %v3236, %v3254
    %v3271 = vadd.f32 %v3237, %v3255
    %v3272 = vadd.f32 %v3238, %v3256
    %v3273 = vadd.f32 %v3239, %v3257
    %v3274 = vadd.f32 %v3240, %v3258
    %v3275 = vadd.f32 %v3259, %v2152
    %v3276 = vadd.f32 %v3260, %v2156
    %v3277 = vadd.f32 %v3261, %v2160
    %v3278 = vadd.f32 %v3262, %v2164
    %v3279 = vadd.f32 %v3263, %v2168
    %v3280 = vadd.f32 %v3264, %v2172
    %v3281 = vadd.f32 %v3265, %v2176
    %v3282 = vadd.f32 %v3266, %v2180
    %v3283 = vadd.f32 %v3267, %v2184
    %v3284 = vadd.f32 %v3268, %v2188
    %v3285 = vadd.f32 %v3269, %v2192
    %v3286 = vadd.f32 %v3270, %v2196
    %v3287 = vadd.f32 %v3271, %v2200
    %v3288 = vadd.f32 %v3272, %v2204
    %v3289 = vadd.f32 %v3273, %v2208
    %v3290 = vadd.f32 %v3274, %v2212
    %v3291 = vmax.f32 %v3275, 0.0
    %v3292 = vmax.f32 %v3276, 0.0
    %v3293 = vmax.f32 %v3277, 0.0
    %v3294 = vmax.f32 %v3278, 0.0
    %v3295 = vmax.f32 %v3279, 0.0
    %v3296 = vmax.f32 %v3280, 0.0
    %v3297 = vmax.f32 %v3281, 0.0
    %v3298 = vmax.f32 %v3282, 0.0
    %v3299 = vmax.f32 %v3283, 0.0
    %v3300 = vmax.f32 %v3284, 0.0
    %v3301 = vmax.f32 %v3285, 0.0
    %v3302 = vmax.f32 %v3286, 0.0
    %v3303 = vmax.f32 %v3287, 0.0
    %v3304 = vmax.f32 %v3288, 0.0
    %v3305 = vmax.f32 %v3289, 0.0
    %v3306 = vmax.f32 %v3290, 0.0
    %v3307 = vmax.f32 %v2953, %v3291
    %v3308 = vmax.f32 %v2954, %v3292
    %v3309 = vmax.f32 %v2955, %v3293
    %v3310 = vmax.f32 %v2956, %v3294
    %v3311 = vmax.f32 %v2957, %v3295
    %v3312 = vmax.f32 %v2958, %v3296
    %v3313 = vmax.f32 %v2959, %v3297
    %v3314 = vmax.f32 %v2960, %v3298
    %v3315 = vmax.f32 %v2961, %v3299
    %v3316 = vmax.f32 %v2962, %v3300
    %v3317 = vmax.f32 %v2963, %v3301
    %v3318 = vmax.f32 %v2964, %v3302
    %v3319 = vmax.f32 %v2965, %v3303
    %v3320 = vmax.f32 %v2966, %v3304
    %v3321 = vmax.f32 %v2967, %v3305
    %v3322 = vmax.f32 %v2968, %v3306
    %v3323 = vpack.c.bf16 %v3307, %v3307
    %v3324 = vpack.c.bf16 %v3308, %v3308
    %v3325 = vpack.c.bf16 %v3309, %v3309
    %v3326 = vpack.c.bf16 %v3310, %v3310
    %v3327 = vpack.c.bf16 %v3311, %v3311
    %v3328 = vpack.c.bf16 %v3312, %v3312
    %v3329 = vpack.c.bf16 %v3313, %v3313
    %v3330 = vpack.c.bf16 %v3314, %v3314
    %v3331 = vpack.c.bf16 %v3315, %v3315
    %v3332 = vpack.c.bf16 %v3316, %v3316
    %v3333 = vpack.c.bf16 %v3317, %v3317
    %v3334 = vpack.c.bf16 %v3318, %v3318
    %v3335 = vpack.c.bf16 %v3319, %v3319
    %v3336 = vpack.c.bf16 %v3320, %v3320
    %v3337 = vpack.c.bf16 %v3321, %v3321
    %v3338 = vpack.c.bf16 %v3322, %v3322
    %v3339 = vld [vmem:[#allocation8] sm:$0xf]
    %v3340 = vld [vmem:[#allocation8 + $0x4] sm:$0xf]
    %v3341 = vld [vmem:[#allocation8 + $0x8] sm:$0xf]
    %v3342 = vld [vmem:[#allocation8 + $0xc] sm:$0xf]
    %v3343 = vld [vmem:[#allocation8 + $0x10] sm:$0xf]
    %v3344 = vld [vmem:[#allocation8 + $0x14] sm:$0xf]
    %v3345 = vld [vmem:[#allocation8 + $0x18] sm:$0xf]
    %v3346 = vld [vmem:[#allocation8 + $0x1c] sm:$0xf]
    %v3347 = vld [vmem:[#allocation8 + $0x20] sm:$0xf]
    %v3348 = vld [vmem:[#allocation8 + $0x24] sm:$0xf]
    %v3349 = vld [vmem:[#allocation8 + $0x28] sm:$0xf]
    %v3350 = vld [vmem:[#allocation8 + $0x2c] sm:$0xf]
    %v3351 = vld [vmem:[#allocation8 + $0x30] sm:$0xf]
    %v3352 = vld [vmem:[#allocation8 + $0x34] sm:$0xf]
    %v3353 = vld [vmem:[#allocation8 + $0x38] sm:$0xf]
    %v3354 = vld [vmem:[#allocation8 + $0x3c] sm:$0xf]
    %s3355 = scalar_lea.vmem [#allocation8], 64
    %v3356 = vld [vmem:[%s3355] sm:$0xf]
    %v3357 = vld [vmem:[%s3355 + $0x4] sm:$0xf]
    %v3358 = vld [vmem:[%s3355 + $0x8] sm:$0xf]
    %v3359 = vld [vmem:[%s3355 + $0xc] sm:$0xf]
    %v3360 = vld [vmem:[%s3355 + $0x10] sm:$0xf]
    %v3361 = vld [vmem:[%s3355 + $0x14] sm:$0xf]
    %v3362 = vld [vmem:[%s3355 + $0x18] sm:$0xf]
    %v3363 = vld [vmem:[%s3355 + $0x1c] sm:$0xf]
    %v3364 = vld [vmem:[%s3355 + $0x20] sm:$0xf]
    %v3365 = vld [vmem:[%s3355 + $0x24] sm:$0xf]
    %v3366 = vld [vmem:[%s3355 + $0x28] sm:$0xf]
    %v3367 = vld [vmem:[%s3355 + $0x2c] sm:$0xf]
    %v3368 = vld [vmem:[%s3355 + $0x30] sm:$0xf]
    %v3369 = vld [vmem:[%s3355 + $0x34] sm:$0xf]
    %v3370 = vld [vmem:[%s3355 + $0x38] sm:$0xf]
    %v3371 = vld [vmem:[%s3355 + $0x3c] sm:$0xf]
    %v3388 = vunpack.c.l.b16 %v3356
    %v3389 = vunpack.c.l.b16 %v3357
    %v3390 = vunpack.c.l.b16 %v3358
    %v3391 = vunpack.c.l.b16 %v3359
    %v3392 = vunpack.c.l.b16 %v3360
    %v3393 = vunpack.c.l.b16 %v3361
    %v3394 = vunpack.c.l.b16 %v3362
    %v3395 = vunpack.c.l.b16 %v3363
    %v3396 = vunpack.c.l.b16 %v3364
    %v3397 = vunpack.c.l.b16 %v3365
    %v3398 = vunpack.c.l.b16 %v3366
    %v3399 = vunpack.c.l.b16 %v3367
    %v3400 = vunpack.c.l.b16 %v3368
    %v3401 = vunpack.c.l.b16 %v3369
    %v3402 = vunpack.c.l.b16 %v3370
    %v3403 = vunpack.c.l.b16 %v3371
    %v3404 = vpack.c.b16 %v3389, %v3388
    %v3405 = vpack.c.b16 %v3391, %v3390
    %v3406 = vpack.c.b16 %v3393, %v3392
    %v3407 = vpack.c.b16 %v3395, %v3394
    %v3408 = vpack.c.b16 %v3397, %v3396
    %v3409 = vpack.c.b16 %v3399, %v3398
    %v3410 = vpack.c.b16 %v3401, %v3400
    %v3411 = vpack.c.b16 %v3403, %v3402
    %3420 = vmatprep.subr.bf16.mxu0 0
    %3421 = vmatpush1.bf16.msra.mxu0 %v3404
    %3422 = vmatprep.subr.bf16.mxu0 0
    %3423 = vmatpush1.bf16.msra.mxu0 %v3405
    %3424 = vmatprep.subr.bf16.mxu0 0
    %3425 = vmatpush1.bf16.msra.mxu0 %v3406
    %3426 = vmatprep.subr.bf16.mxu0 0
    %3427 = vmatpush1.bf16.msra.mxu0 %v3407
    %3428 = vmatprep.subr.bf16.mxu0 0
    %3429 = vmatpush1.bf16.msra.mxu0 %v3408
    %3430 = vmatprep.subr.bf16.mxu0 0
    %3431 = vmatpush1.bf16.msra.mxu0 %v3409
    %3432 = vmatprep.subr.bf16.mxu0 0
    %3433 = vmatpush1.bf16.msra.mxu0 %v3410
    %3434 = vmatprep.subr.bf16.mxu0 0
    %3435 = vmatpush1.bf16.msra.mxu0 %v3411
    %3436 = vmatprep.subr.bf16.mxu0 0
    %3437 = vmatpush1.bf16.msra.mxu0 0
    %3438 = vmatprep.subr.bf16.mxu0 0
    %3439 = vmatpush1.bf16.msra.mxu0 0
    %3440 = vmatprep.subr.bf16.mxu0 0
    %3441 = vmatpush1.bf16.msra.mxu0 0
    %3442 = vmatprep.subr.bf16.mxu0 0
    %3443 = vmatpush1.bf16.msra.mxu0 0
    %3444 = vmatprep.subr.bf16.mxu0 0
    %3445 = vmatpush1.bf16.msra.mxu0 0
    %3446 = vmatprep.subr.bf16.mxu0 0
    %3447 = vmatpush1.bf16.msra.mxu0 0
    %3448 = vmatprep.subr.bf16.mxu0 0
    %3449 = vmatpush1.bf16.msra.mxu0 0
    %3450 = vmatprep.subr.bf16.mxu0 0
    %3451 = vmatpush1.bf16.msra.mxu0 0
    %3452 = vmatprep.mubr.bf16.mxu0 0
    %3453 = vmatmul.mubr.bf16.gmra.mrb[0].mxu0 %v3324
    %v3454 = vpop.f32.mrb[0].mxu0
    %v3455 = vadd.f32 0.0, %v3454
    %v3456 = vpop.f32.mrb[0].mxu0
    %v3457 = vpop.f32.mrb[0].mxu0
    %v3458 = vpop.f32.mrb[0].mxu0
    %3459 = vdwg.mxu0
    %v3476 = vunpack.c.l.b16 %v3339
    %v3477 = vunpack.c.l.b16 %v3340
    %v3478 = vunpack.c.l.b16 %v3341
    %v3479 = vunpack.c.l.b16 %v3342
    %v3480 = vunpack.c.l.b16 %v3343
    %v3481 = vunpack.c.l.b16 %v3344
    %v3482 = vunpack.c.l.b16 %v3345
    %v3483 = vunpack.c.l.b16 %v3346
    %v3484 = vunpack.c.l.b16 %v3347
    %v3485 = vunpack.c.l.b16 %v3348
    %v3486 = vunpack.c.l.b16 %v3349
    %v3487 = vunpack.c.l.b16 %v3350
    %v3488 = vunpack.c.l.b16 %v3351
    %v3489 = vunpack.c.l.b16 %v3352
    %v3490 = vunpack.c.l.b16 %v3353
    %v3491 = vunpack.c.l.b16 %v3354
    %v3492 = vpack.c.b16 %v3477, %v3476
    %v3493 = vpack.c.b16 %v3479, %v3478
    %v3494 = vpack.c.b16 %v3481, %v3480
    %v3495 = vpack.c.b16 %v3483, %v3482
    %v3496 = vpack.c.b16 %v3485, %v3484
    %v3497 = vpack.c.b16 %v3487, %v3486
    %v3498 = vpack.c.b16 %v3489, %v3488
    %v3499 = vpack.c.b16 %v3491, %v3490
    %3508 = vmatprep.subr.bf16.mxu0 0
    %3509 = vmatpush1.bf16.msra.mxu0 %v3492
    %3510 = vmatprep.subr.bf16.mxu0 0
    %3511 = vmatpush1.bf16.msra.mxu0 %v3493
    %3512 = vmatprep.subr.bf16.mxu0 0
    %3513 = vmatpush1.bf16.msra.mxu0 %v3494
    %3514 = vmatprep.subr.bf16.mxu0 0
    %3515 = vmatpush1.bf16.msra.mxu0 %v3495
    %3516 = vmatprep.subr.bf16.mxu0 0
    %3517 = vmatpush1.bf16.msra.mxu0 %v3496
    %3518 = vmatprep.subr.bf16.mxu0 0
    %3519 = vmatpush1.bf16.msra.mxu0 %v3497
    %3520 = vmatprep.subr.bf16.mxu0 0
    %3521 = vmatpush1.bf16.msra.mxu0 %v3498
    %3522 = vmatprep.subr.bf16.mxu0 0
    %3523 = vmatpush1.bf16.msra.mxu0 %v3499
    %3524 = vmatprep.subr.bf16.mxu0 0
    %3525 = vmatpush1.bf16.msra.mxu0 0
    %3526 = vmatprep.subr.bf16.mxu0 0
    %3527 = vmatpush1.bf16.msra.mxu0 0
    %3528 = vmatprep.subr.bf16.mxu0 0
    %3529 = vmatpush1.bf16.msra.mxu0 0
    %3530 = vmatprep.subr.bf16.mxu0 0
    %3531 = vmatpush1.bf16.msra.mxu0 0
    %3532 = vmatprep.subr.bf16.mxu0 0
    %3533 = vmatpush1.bf16.msra.mxu0 0
    %3534 = vmatprep.subr.bf16.mxu0 0
    %3535 = vmatpush1.bf16.msra.mxu0 0
    %3536 = vmatprep.subr.bf16.mxu0 0
    %3537 = vmatpush1.bf16.msra.mxu0 0
    %3538 = vmatprep.subr.bf16.mxu0 0
    %3539 = vmatpush1.bf16.msra.mxu0 0
    %3540 = vmatprep.mubr.bf16.mxu0 0
    %3541 = vmatmul.mubr.bf16.gmra.mrb[0].mxu0 %v3323
    %v3542 = vpop.f32.mrb[0].mxu0
    %v3543 = vadd.f32 %v3455, %v3542
    %v3544 = vpop.f32.mrb[0].mxu0
    %v3545 = vpop.f32.mrb[0].mxu0
    %v3546 = vpop.f32.mrb[0].mxu0
    %3547 = vdwg.mxu0
    %s3548 = scalar_lea.vmem [#allocation8], 128
    %v3549 = vld [vmem:[%s3548] sm:$0xf]
    %v3550 = vld [vmem:[%s3548 + $0x4] sm:$0xf]
    %v3551 = vld [vmem:[%s3548 + $0x8] sm:$0xf]
    %v3552 = vld [vmem:[%s3548 + $0xc] sm:$0xf]
    %v3553 = vld [vmem:[%s3548 + $0x10] sm:$0xf]
    %v3554 = vld [vmem:[%s3548 + $0x14] sm:$0xf]
    %v3555 = vld [vmem:[%s3548 + $0x18] sm:$0xf]
    %v3556 = vld [vmem:[%s3548 + $0x1c] sm:$0xf]
    %v3557 = vld [vmem:[%s3548 + $0x20] sm:$0xf]
    %v3558 = vld [vmem:[%s3548 + $0x24] sm:$0xf]
    %v3559 = vld [vmem:[%s3548 + $0x28] sm:$0xf]
    %v3560 = vld [vmem:[%s3548 + $0x2c] sm:$0xf]
    %v3561 = vld [vmem:[%s3548 + $0x30] sm:$0xf]
    %v3562 = vld [vmem:[%s3548 + $0x34] sm:$0xf]
    %v3563 = vld [vmem:[%s3548 + $0x38] sm:$0xf]
    %v3564 = vld [vmem:[%s3548 + $0x3c] sm:$0xf]
    %v3581 = vunpack.c.l.b16 %v3549
    %v3582 = vunpack.c.l.b16 %v3550
    %v3583 = vunpack.c.l.b16 %v3551
    %v3584 = vunpack.c.l.b16 %v3552
    %v3585 = vunpack.c.l.b16 %v3553
    %v3586 = vunpack.c.l.b16 %v3554
    %v3587 = vunpack.c.l.b16 %v3555
    %v3588 = vunpack.c.l.b16 %v3556
    %v3589 = vunpack.c.l.b16 %v3557
    %v3590 = vunpack.c.l.b16 %v3558
    %v3591 = vunpack.c.l.b16 %v3559
    %v3592 = vunpack.c.l.b16 %v3560
    %v3593 = vunpack.c.l.b16 %v3561
    %v3594 = vunpack.c.l.b16 %v3562
    %v3595 = vunpack.c.l.b16 %v3563
    %v3596 = vunpack.c.l.b16 %v3564
    %v3597 = vpack.c.b16 %v3582, %v3581
    %v3598 = vpack.c.b16 %v3584, %v3583
    %v3599 = vpack.c.b16 %v3586, %v3585
    %v3600 = vpack.c.b16 %v3588, %v3587
    %v3601 = vpack.c.b16 %v3590, %v3589
    %v3602 = vpack.c.b16 %v3592, %v3591
    %v3603 = vpack.c.b16 %v3594, %v3593
    %v3604 = vpack.c.b16 %v3596, %v3595
    %3613 = vmatprep.subr.bf16.mxu0 0
    %3614 = vmatpush1.bf16.msra.mxu0 %v3597
    %3615 = vmatprep.subr.bf16.mxu0 0
    %3616 = vmatpush1.bf16.msra.mxu0 %v3598
    %3617 = vmatprep.subr.bf16.mxu0 0
    %3618 = vmatpush1.bf16.msra.mxu0 %v3599
    %3619 = vmatprep.subr.bf16.mxu0 0
    %3620 = vmatpush1.bf16.msra.mxu0 %v3600
    %3621 = vmatprep.subr.bf16.mxu0 0
    %3622 = vmatpush1.bf16.msra.mxu0 %v3601
    %3623 = vmatprep.subr.bf16.mxu0 0
    %3624 = vmatpush1.bf16.msra.mxu0 %v3602
    %3625 = vmatprep.subr.bf16.mxu0 0
    %3626 = vmatpush1.bf16.msra.mxu0 %v3603
    %3627 = vmatprep.subr.bf16.mxu0 0
    %3628 = vmatpush1.bf16.msra.mxu0 %v3604
    %3629 = vmatprep.subr.bf16.mxu0 0
    %3630 = vmatpush1.bf16.msra.mxu0 0
    %3631 = vmatprep.subr.bf16.mxu0 0
    %3632 = vmatpush1.bf16.msra.mxu0 0
    %3633 = vmatprep.subr.bf16.mxu0 0
    %3634 = vmatpush1.bf16.msra.mxu0 0
    %3635 = vmatprep.subr.bf16.mxu0 0
    %3636 = vmatpush1.bf16.msra.mxu0 0
    %3637 = vmatprep.subr.bf16.mxu0 0
    %3638 = vmatpush1.bf16.msra.mxu0 0
    %3639 = vmatprep.subr.bf16.mxu0 0
    %3640 = vmatpush1.bf16.msra.mxu0 0
    %3641 = vmatprep.subr.bf16.mxu0 0
    %3642 = vmatpush1.bf16.msra.mxu0 0
    %3643 = vmatprep.subr.bf16.mxu0 0
    %3644 = vmatpush1.bf16.msra.mxu0 0
    %3645 = vmatprep.mubr.bf16.mxu0 0
    %3646 = vmatmul.mubr.bf16.gmra.mrb[0].mxu0 %v3325
    %v3647 = vpop.f32.mrb[0].mxu0
    %v3648 = vadd.f32 0.0, %v3647
    %v3649 = vpop.f32.mrb[0].mxu0
    %v3650 = vpop.f32.mrb[0].mxu0
    %v3651 = vpop.f32.mrb[0].mxu0
    %3652 = vdwg.mxu0
    %v3653 = vadd.f32 %v3543, %v3648
    %s3654 = scalar_lea.vmem [#allocation8], 192
    %v3655 = vld [vmem:[%s3654] sm:$0xf]
    %v3656 = vld [vmem:[%s3654 + $0x4] sm:$0xf]
    %v3657 = vld [vmem:[%s3654 + $0x8] sm:$0xf]
    %v3658 = vld [vmem:[%s3654 + $0xc] sm:$0xf]
    %v3659 = vld [vmem:[%s3654 + $0x10] sm:$0xf]
    %v3660 = vld [vmem:[%s3654 + $0x14] sm:$0xf]
    %v3661 = vld [vmem:[%s3654 + $0x18] sm:$0xf]
    %v3662 = vld [vmem:[%s3654 + $0x1c] sm:$0xf]
    %v3663 = vld [vmem:[%s3654 + $0x20] sm:$0xf]
    %v3664 = vld [vmem:[%s3654 + $0x24] sm:$0xf]
    %v3665 = vld [vmem:[%s3654 + $0x28] sm:$0xf]
    %v3666 = vld [vmem:[%s3654 + $0x2c] sm:$0xf]
    %v3667 = vld [vmem:[%s3654 + $0x30] sm:$0xf]
    %v3668 = vld [vmem:[%s3654 + $0x34] sm:$0xf]
    %v3669 = vld [vmem:[%s3654 + $0x38] sm:$0xf]
    %v3670 = vld [vmem:[%s3654 + $0x3c] sm:$0xf]
    %v3687 = vunpack.c.l.b16 %v3655
    %v3688 = vunpack.c.l.b16 %v3656
    %v3689 = vunpack.c.l.b16 %v3657
    %v3690 = vunpack.c.l.b16 %v3658
    %v3691 = vunpack.c.l.b16 %v3659
    %v3692 = vunpack.c.l.b16 %v3660
    %v3693 = vunpack.c.l.b16 %v3661
    %v3694 = vunpack.c.l.b16 %v3662
    %v3695 = vunpack.c.l.b16 %v3663
    %v3696 = vunpack.c.l.b16 %v3664
    %v3697 = vunpack.c.l.b16 %v3665
    %v3698 = vunpack.c.l.b16 %v3666
    %v3699 = vunpack.c.l.b16 %v3667
    %v3700 = vunpack.c.l.b16 %v3668
    %v3701 = vunpack.c.l.b16 %v3669
    %v3702 = vunpack.c.l.b16 %v3670
    %v3703 = vpack.c.b16 %v3688, %v3687
    %v3704 = vpack.c.b16 %v3690, %v3689
    %v3705 = vpack.c.b16 %v3692, %v3691
    %v3706 = vpack.c.b16 %v3694, %v3693
    %v3707 = vpack.c.b16 %v3696, %v3695
    %v3708 = vpack.c.b16 %v3698, %v3697
    %v3709 = vpack.c.b16 %v3700, %v3699
    %v3710 = vpack.c.b16 %v3702, %v3701
    %3719 = vmatprep.subr.bf16.mxu0 0
    %3720 = vmatpush1.bf16.msra.mxu0 %v3703
    %3721 = vmatprep.subr.bf16.mxu0 0
    %3722 = vmatpush1.bf16.msra.mxu0 %v3704
    %3723 = vmatprep.subr.bf16.mxu0 0
    %3724 = vmatpush1.bf16.msra.mxu0 %v3705
    %3725 = vmatprep.subr.bf16.mxu0 0
    %3726 = vmatpush1.bf16.msra.mxu0 %v3706
    %3727 = vmatprep.subr.bf16.mxu0 0
    %3728 = vmatpush1.bf16.msra.mxu0 %v3707
    %3729 = vmatprep.subr.bf16.mxu0 0
    %3730 = vmatpush1.bf16.msra.mxu0 %v3708
    %3731 = vmatprep.subr.bf16.mxu0 0
    %3732 = vmatpush1.bf16.msra.mxu0 %v3709
    %3733 = vmatprep.subr.bf16.mxu0 0
    %3734 = vmatpush1.bf16.msra.mxu0 %v3710
    %3735 = vmatprep.subr.bf16.mxu0 0
    %3736 = vmatpush1.bf16.msra.mxu0 0
    %3737 = vmatprep.subr.bf16.mxu0 0
    %3738 = vmatpush1.bf16.msra.mxu0 0
    %3739 = vmatprep.subr.bf16.mxu0 0
    %3740 = vmatpush1.bf16.msra.mxu0 0
    %3741 = vmatprep.subr.bf16.mxu0 0
    %3742 = vmatpush1.bf16.msra.mxu0 0
    %3743 = vmatprep.subr.bf16.mxu0 0
    %3744 = vmatpush1.bf16.msra.mxu0 0
    %3745 = vmatprep.subr.bf16.mxu0 0
    %3746 = vmatpush1.bf16.msra.mxu0 0
    %3747 = vmatprep.subr.bf16.mxu0 0
    %3748 = vmatpush1.bf16.msra.mxu0 0
    %3749 = vmatprep.subr.bf16.mxu0 0
    %3750 = vmatpush1.bf16.msra.mxu0 0
    %3751 = vmatprep.mubr.bf16.mxu0 0
    %3752 = vmatmul.mubr.bf16.gmra.mrb[0].mxu0 %v3326
    %v3753 = vpop.f32.mrb[0].mxu0
    %v3754 = vadd.f32 0.0, %v3753
    %v3755 = vpop.f32.mrb[0].mxu0
    %v3756 = vpop.f32.mrb[0].mxu0
    %v3757 = vpop.f32.mrb[0].mxu0
    %3758 = vdwg.mxu0
    %v3759 = vadd.f32 %v3653, %v3754
    %s3760 = scalar_lea.vmem [#allocation8], 256
    %v3761 = vld [vmem:[%s3760] sm:$0xf]
    %v3762 = vld [vmem:[%s3760 + $0x4] sm:$0xf]
    %v3763 = vld [vmem:[%s3760 + $0x8] sm:$0xf]
    %v3764 = vld [vmem:[%s3760 + $0xc] sm:$0xf]
    %v3765 = vld [vmem:[%s3760 + $0x10] sm:$0xf]
    %v3766 = vld [vmem:[%s3760 + $0x14] sm:$0xf]
    %v3767 = vld [vmem:[%s3760 + $0x18] sm:$0xf]
    %v3768 = vld [vmem:[%s3760 + $0x1c] sm:$0xf]
    %v3769 = vld [vmem:[%s3760 + $0x20] sm:$0xf]
    %v3770 = vld [vmem:[%s3760 + $0x24] sm:$0xf]
    %v3771 = vld [vmem:[%s3760 + $0x28] sm:$0xf]
    %v3772 = vld [vmem:[%s3760 + $0x2c] sm:$0xf]
    %v3773 = vld [vmem:[%s3760 + $0x30] sm:$0xf]
    %v3774 = vld [vmem:[%s3760 + $0x34] sm:$0xf]
    %v3775 = vld [vmem:[%s3760 + $0x38] sm:$0xf]
    %v3776 = vld [vmem:[%s3760 + $0x3c] sm:$0xf]
    %v3793 = vunpack.c.l.b16 %v3761
    %v3794 = vunpack.c.l.b16 %v3762
    %v3795 = vunpack.c.l.b16 %v3763
    %v3796 = vunpack.c.l.b16 %v3764
    %v3797 = vunpack.c.l.b16 %v3765
    %v3798 = vunpack.c.l.b16 %v3766
    %v3799 = vunpack.c.l.b16 %v3767
    %v3800 = vunpack.c.l.b16 %v3768
    %v3801 = vunpack.c.l.b16 %v3769
    %v3802 = vunpack.c.l.b16 %v3770
    %v3803 = vunpack.c.l.b16 %v3771
    %v3804 = vunpack.c.l.b16 %v3772
    %v3805 = vunpack.c.l.b16 %v3773
    %v3806 = vunpack.c.l.b16 %v3774
    %v3807 = vunpack.c.l.b16 %v3775
    %v3808 = vunpack.c.l.b16 %v3776
    %v3809 = vpack.c.b16 %v3794, %v3793
    %v3810 = vpack.c.b16 %v3796, %v3795
    %v3811 = vpack.c.b16 %v3798, %v3797
    %v3812 = vpack.c.b16 %v3800, %v3799
    %v3813 = vpack.c.b16 %v3802, %v3801
    %v3814 = vpack.c.b16 %v3804, %v3803
    %v3815 = vpack.c.b16 %v3806, %v3805
    %v3816 = vpack.c.b16 %v3808, %v3807
    %3825 = vmatprep.subr.bf16.mxu0 0
    %3826 = vmatpush1.bf16.msra.mxu0 %v3809
    %3827 = vmatprep.subr.bf16.mxu0 0
    %3828 = vmatpush1.bf16.msra.mxu0 %v3810
    %3829 = vmatprep.subr.bf16.mxu0 0
    %3830 = vmatpush1.bf16.msra.mxu0 %v3811
    %3831 = vmatprep.subr.bf16.mxu0 0
    %3832 = vmatpush1.bf16.msra.mxu0 %v3812
    %3833 = vmatprep.subr.bf16.mxu0 0
    %3834 = vmatpush1.bf16.msra.mxu0 %v3813
    %3835 = vmatprep.subr.bf16.mxu0 0
    %3836 = vmatpush1.bf16.msra.mxu0 %v3814
    %3837 = vmatprep.subr.bf16.mxu0 0
    %3838 = vmatpush1.bf16.msra.mxu0 %v3815
    %3839 = vmatprep.subr.bf16.mxu0 0
    %3840 = vmatpush1.bf16.msra.mxu0 %v3816
    %3841 = vmatprep.subr.bf16.mxu0 0
    %3842 = vmatpush1.bf16.msra.mxu0 0
    %3843 = vmatprep.subr.bf16.mxu0 0
    %3844 = vmatpush1.bf16.msra.mxu0 0
    %3845 = vmatprep.subr.bf16.mxu0 0
    %3846 = vmatpush1.bf16.msra.mxu0 0
    %3847 = vmatprep.subr.bf16.mxu0 0
    %3848 = vmatpush1.bf16.msra.mxu0 0
    %3849 = vmatprep.subr.bf16.mxu0 0
    %3850 = vmatpush1.bf16.msra.mxu0 0
    %3851 = vmatprep.subr.bf16.mxu0 0
    %3852 = vmatpush1.bf16.msra.mxu0 0
    %3853 = vmatprep.subr.bf16.mxu0 0
    %3854 = vmatpush1.bf16.msra.mxu0 0
    %3855 = vmatprep.subr.bf16.mxu0 0
    %3856 = vmatpush1.bf16.msra.mxu0 0
    %3857 = vmatprep.mubr.bf16.mxu0 0
    %3858 = vmatmul.mubr.bf16.gmra.mrb[0].mxu0 %v3327
    %v3859 = vpop.f32.mrb[0].mxu0
    %v3860 = vadd.f32 0.0, %v3859
    %v3861 = vpop.f32.mrb[0].mxu0
    %v3862 = vpop.f32.mrb[0].mxu0
    %v3863 = vpop.f32.mrb[0].mxu0
    %3864 = vdwg.mxu0
    %v3865 = vadd.f32 %v3759, %v3860
    %s3866 = scalar_lea.vmem [#allocation8], 320
    %v3867 = vld [vmem:[%s3866] sm:$0xf]
    %v3868 = vld [vmem:[%s3866 + $0x4] sm:$0xf]
    %v3869 = vld [vmem:[%s3866 + $0x8] sm:$0xf]
    %v3870 = vld [vmem:[%s3866 + $0xc] sm:$0xf]
    %v3871 = vld [vmem:[%s3866 + $0x10] sm:$0xf]
    %v3872 = vld [vmem:[%s3866 + $0x14] sm:$0xf]
    %v3873 = vld [vmem:[%s3866 + $0x18] sm:$0xf]
    %v3874 = vld [vmem:[%s3866 + $0x1c] sm:$0xf]
    %v3875 = vld [vmem:[%s3866 + $0x20] sm:$0xf]
    %v3876 = vld [vmem:[%s3866 + $0x24] sm:$0xf]
    %v3877 = vld [vmem:[%s3866 + $0x28] sm:$0xf]
    %v3878 = vld [vmem:[%s3866 + $0x2c] sm:$0xf]
    %v3879 = vld [vmem:[%s3866 + $0x30] sm:$0xf]
    %v3880 = vld [vmem:[%s3866 + $0x34] sm:$0xf]
    %v3881 = vld [vmem:[%s3866 + $0x38] sm:$0xf]
    %v3882 = vld [vmem:[%s3866 + $0x3c] sm:$0xf]
    %v3899 = vunpack.c.l.b16 %v3867
    %v3900 = vunpack.c.l.b16 %v3868
    %v3901 = vunpack.c.l.b16 %v3869
    %v3902 = vunpack.c.l.b16 %v3870
    %v3903 = vunpack.c.l.b16 %v3871
    %v3904 = vunpack.c.l.b16 %v3872
    %v3905 = vunpack.c.l.b16 %v3873
    %v3906 = vunpack.c.l.b16 %v3874
    %v3907 = vunpack.c.l.b16 %v3875
    %v3908 = vunpack.c.l.b16 %v3876
    %v3909 = vunpack.c.l.b16 %v3877
    %v3910 = vunpack.c.l.b16 %v3878
    %v3911 = vunpack.c.l.b16 %v3879
    %v3912 = vunpack.c.l.b16 %v3880
    %v3913 = vunpack.c.l.b16 %v3881
    %v3914 = vunpack.c.l.b16 %v3882
    %v3915 = vpack.c.b16 %v3900, %v3899
    %v3916 = vpack.c.b16 %v3902, %v3901
    %v3917 = vpack.c.b16 %v3904, %v3903
    %v3918 = vpack.c.b16 %v3906, %v3905
    %v3919 = vpack.c.b16 %v3908, %v3907
    %v3920 = vpack.c.b16 %v3910, %v3909
    %v3921 = vpack.c.b16 %v3912, %v3911
    %v3922 = vpack.c.b16 %v3914, %v3913
    %3931 = vmatprep.subr.bf16.mxu0 0
    %3932 = vmatpush1.bf16.msra.mxu0 %v3915
    %3933 = vmatprep.subr.bf16.mxu0 0
    %3934 = vmatpush1.bf16.msra.mxu0 %v3916
    %3935 = vmatprep.subr.bf16.mxu0 0
    %3936 = vmatpush1.bf16.msra.mxu0 %v3917
    %3937 = vmatprep.subr.bf16.mxu0 0
    %3938 = vmatpush1.bf16.msra.mxu0 %v3918
    %3939 = vmatprep.subr.bf16.mxu0 0
    %3940 = vmatpush1.bf16.msra.mxu0 %v3919
    %3941 = vmatprep.subr.bf16.mxu0 0
    %3942 = vmatpush1.bf16.msra.mxu0 %v3920
    %3943 = vmatprep.subr.bf16.mxu0 0
    %3944 = vmatpush1.bf16.msra.mxu0 %v3921
    %3945 = vmatprep.subr.bf16.mxu0 0
    %3946 = vmatpush1.bf16.msra.mxu0 %v3922
    %3947 = vmatprep.subr.bf16.mxu0 0
    %3948 = vmatpush1.bf16.msra.mxu0 0
    %3949 = vmatprep.subr.bf16.mxu0 0
    %3950 = vmatpush1.bf16.msra.mxu0 0
    %3951 = vmatprep.subr.bf16.mxu0 0
    %3952 = vmatpush1.bf16.msra.mxu0 0
    %3953 = vmatprep.subr.bf16.mxu0 0
    %3954 = vmatpush1.bf16.msra.mxu0 0
    %3955 = vmatprep.subr.bf16.mxu0 0
    %3956 = vmatpush1.bf16.msra.mxu0 0
    %3957 = vmatprep.subr.bf16.mxu0 0
    %3958 = vmatpush1.bf16.msra.mxu0 0
    %3959 = vmatprep.subr.bf16.mxu0 0
    %3960 = vmatpush1.bf16.msra.mxu0 0
    %3961 = vmatprep.subr.bf16.mxu0 0
    %3962 = vmatpush1.bf16.msra.mxu0 0
    %3963 = vmatprep.mubr.bf16.mxu0 0
    %3964 = vmatmul.mubr.bf16.gmra.mrb[0].mxu0 %v3328
    %v3965 = vpop.f32.mrb[0].mxu0
    %v3966 = vadd.f32 0.0, %v3965
    %v3967 = vpop.f32.mrb[0].mxu0
    %v3968 = vpop.f32.mrb[0].mxu0
    %v3969 = vpop.f32.mrb[0].mxu0
    %3970 = vdwg.mxu0
    %v3971 = vadd.f32 %v3865, %v3966
    %s3972 = scalar_lea.vmem [#allocation8], 384
    %v3973 = vld [vmem:[%s3972] sm:$0xf]
    %v3974 = vld [vmem:[%s3972 + $0x4] sm:$0xf]
    %v3975 = vld [vmem:[%s3972 + $0x8] sm:$0xf]
    %v3976 = vld [vmem:[%s3972 + $0xc] sm:$0xf]
    %v3977 = vld [vmem:[%s3972 + $0x10] sm:$0xf]
    %v3978 = vld [vmem:[%s3972 + $0x14] sm:$0xf]
    %v3979 = vld [vmem:[%s3972 + $0x18] sm:$0xf]
    %v3980 = vld [vmem:[%s3972 + $0x1c] sm:$0xf]
    %v3981 = vld [vmem:[%s3972 + $0x20] sm:$0xf]
    %v3982 = vld [vmem:[%s3972 + $0x24] sm:$0xf]
    %v3983 = vld [vmem:[%s3972 + $0x28] sm:$0xf]
    %v3984 = vld [vmem:[%s3972 + $0x2c] sm:$0xf]
    %v3985 = vld [vmem:[%s3972 + $0x30] sm:$0xf]
    %v3986 = vld [vmem:[%s3972 + $0x34] sm:$0xf]
    %v3987 = vld [vmem:[%s3972 + $0x38] sm:$0xf]
    %v3988 = vld [vmem:[%s3972 + $0x3c] sm:$0xf]
    %v4005 = vunpack.c.l.b16 %v3973
    %v4006 = vunpack.c.l.b16 %v3974
    %v4007 = vunpack.c.l.b16 %v3975
    %v4008 = vunpack.c.l.b16 %v3976
    %v4009 = vunpack.c.l.b16 %v3977
    %v4010 = vunpack.c.l.b16 %v3978
    %v4011 = vunpack.c.l.b16 %v3979
    %v4012 = vunpack.c.l.b16 %v3980
    %v4013 = vunpack.c.l.b16 %v3981
    %v4014 = vunpack.c.l.b16 %v3982
    %v4015 = vunpack.c.l.b16 %v3983
    %v4016 = vunpack.c.l.b16 %v3984
    %v4017 = vunpack.c.l.b16 %v3985
    %v4018 = vunpack.c.l.b16 %v3986
    %v4019 = vunpack.c.l.b16 %v3987
    %v4020 = vunpack.c.l.b16 %v3988
    %v4021 = vpack.c.b16 %v4006, %v4005
    %v4022 = vpack.c.b16 %v4008, %v4007
    %v4023 = vpack.c.b16 %v4010, %v4009
    %v4024 = vpack.c.b16 %v4012, %v4011
    %v4025 = vpack.c.b16 %v4014, %v4013
    %v4026 = vpack.c.b16 %v4016, %v4015
    %v4027 = vpack.c.b16 %v4018, %v4017
    %v4028 = vpack.c.b16 %v4020, %v4019
    %4037 = vmatprep.subr.bf16.mxu0 0
    %4038 = vmatpush1.bf16.msra.mxu0 %v4021
    %4039 = vmatprep.subr.bf16.mxu0 0
    %4040 = vmatpush1.bf16.msra.mxu0 %v4022
    %4041 = vmatprep.subr.bf16.mxu0 0
    %4042 = vmatpush1.bf16.msra.mxu0 %v4023
    %4043 = vmatprep.subr.bf16.mxu0 0
    %4044 = vmatpush1.bf16.msra.mxu0 %v4024
    %4045 = vmatprep.subr.bf16.mxu0 0
    %4046 = vmatpush1.bf16.msra.mxu0 %v4025
    %4047 = vmatprep.subr.bf16.mxu0 0
    %4048 = vmatpush1.bf16.msra.mxu0 %v4026
    %4049 = vmatprep.subr.bf16.mxu0 0
    %4050 = vmatpush1.bf16.msra.mxu0 %v4027
    %4051 = vmatprep.subr.bf16.mxu0 0
    %4052 = vmatpush1.bf16.msra.mxu0 %v4028
    %4053 = vmatprep.subr.bf16.mxu0 0
    %4054 = vmatpush1.bf16.msra.mxu0 0
    %4055 = vmatprep.subr.bf16.mxu0 0
    %4056 = vmatpush1.bf16.msra.mxu0 0
    %4057 = vmatprep.subr.bf16.mxu0 0
    %4058 = vmatpush1.bf16.msra.mxu0 0
    %4059 = vmatprep.subr.bf16.mxu0 0
    %4060 = vmatpush1.bf16.msra.mxu0 0
    %4061 = vmatprep.subr.bf16.mxu0 0
    %4062 = vmatpush1.bf16.msra.mxu0 0
    %4063 = vmatprep.subr.bf16.mxu0 0
    %4064 = vmatpush1.bf16.msra.mxu0 0
    %4065 = vmatprep.subr.bf16.mxu0 0
    %4066 = vmatpush1.bf16.msra.mxu0 0
    %4067 = vmatprep.subr.bf16.mxu0 0
    %4068 = vmatpush1.bf16.msra.mxu0 0
    %4069 = vmatprep.mubr.bf16.mxu0 0
    %4070 = vmatmul.mubr.bf16.gmra.mrb[0].mxu0 %v3329
    %v4071 = vpop.f32.mrb[0].mxu0
    %v4072 = vadd.f32 0.0, %v4071
    %v4073 = vpop.f32.mrb[0].mxu0
    %v4074 = vpop.f32.mrb[0].mxu0
    %v4075 = vpop.f32.mrb[0].mxu0
    %4076 = vdwg.mxu0
    %v4077 = vadd.f32 %v3971, %v4072
    %s4078 = scalar_lea.vmem [#allocation8], 448
    %v4079 = vld [vmem:[%s4078] sm:$0xf]
    %v4080 = vld [vmem:[%s4078 + $0x4] sm:$0xf]
    %v4081 = vld [vmem:[%s4078 + $0x8] sm:$0xf]
    %v4082 = vld [vmem:[%s4078 + $0xc] sm:$0xf]
    %v4083 = vld [vmem:[%s4078 + $0x10] sm:$0xf]
    %v4084 = vld [vmem:[%s4078 + $0x14] sm:$0xf]
    %v4085 = vld [vmem:[%s4078 + $0x18] sm:$0xf]
    %v4086 = vld [vmem:[%s4078 + $0x1c] sm:$0xf]
    %v4087 = vld [vmem:[%s4078 + $0x20] sm:$0xf]
    %v4088 = vld [vmem:[%s4078 + $0x24] sm:$0xf]
    %v4089 = vld [vmem:[%s4078 + $0x28] sm:$0xf]
    %v4090 = vld [vmem:[%s4078 + $0x2c] sm:$0xf]
    %v4091 = vld [vmem:[%s4078 + $0x30] sm:$0xf]
    %v4092 = vld [vmem:[%s4078 + $0x34] sm:$0xf]
    %v4093 = vld [vmem:[%s4078 + $0x38] sm:$0xf]
    %v4094 = vld [vmem:[%s4078 + $0x3c] sm:$0xf]
    %v4111 = vunpack.c.l.b16 %v4079
    %v4112 = vunpack.c.l.b16 %v4080
    %v4113 = vunpack.c.l.b16 %v4081
    %v4114 = vunpack.c.l.b16 %v4082
    %v4115 = vunpack.c.l.b16 %v4083
    %v4116 = vunpack.c.l.b16 %v4084
    %v4117 = vunpack.c.l.b16 %v4085
    %v4118 = vunpack.c.l.b16 %v4086
    %v4119 = vunpack.c.l.b16 %v4087
    %v4120 = vunpack.c.l.b16 %v4088
    %v4121 = vunpack.c.l.b16 %v4089
    %v4122 = vunpack.c.l.b16 %v4090
    %v4123 = vunpack.c.l.b16 %v4091
    %v4124 = vunpack.c.l.b16 %v4092
    %v4125 = vunpack.c.l.b16 %v4093
    %v4126 = vunpack.c.l.b16 %v4094
    %v4127 = vpack.c.b16 %v4112, %v4111
    %v4128 = vpack.c.b16 %v4114, %v4113
    %v4129 = vpack.c.b16 %v4116, %v4115
    %v4130 = vpack.c.b16 %v4118, %v4117
    %v4131 = vpack.c.b16 %v4120, %v4119
    %v4132 = vpack.c.b16 %v4122, %v4121
    %v4133 = vpack.c.b16 %v4124, %v4123
    %v4134 = vpack.c.b16 %v4126, %v4125
    %4143 = vmatprep.subr.bf16.mxu0 0
    %4144 = vmatpush1.bf16.msra.mxu0 %v4127
    %4145 = vmatprep.subr.bf16.mxu0 0
    %4146 = vmatpush1.bf16.msra.mxu0 %v4128
    %4147 = vmatprep.subr.bf16.mxu0 0
    %4148 = vmatpush1.bf16.msra.mxu0 %v4129
    %4149 = vmatprep.subr.bf16.mxu0 0
    %4150 = vmatpush1.bf16.msra.mxu0 %v4130
    %4151 = vmatprep.subr.bf16.mxu0 0
    %4152 = vmatpush1.bf16.msra.mxu0 %v4131
    %4153 = vmatprep.subr.bf16.mxu0 0
    %4154 = vmatpush1.bf16.msra.mxu0 %v4132
    %4155 = vmatprep.subr.bf16.mxu0 0
    %4156 = vmatpush1.bf16.msra.mxu0 %v4133
    %4157 = vmatprep.subr.bf16.mxu0 0
    %4158 = vmatpush1.bf16.msra.mxu0 %v4134
    %4159 = vmatprep.subr.bf16.mxu0 0
    %4160 = vmatpush1.bf16.msra.mxu0 0
    %4161 = vmatprep.subr.bf16.mxu0 0
    %4162 = vmatpush1.bf16.msra.mxu0 0
    %4163 = vmatprep.subr.bf16.mxu0 0
    %4164 = vmatpush1.bf16.msra.mxu0 0
    %4165 = vmatprep.subr.bf16.mxu0 0
    %4166 = vmatpush1.bf16.msra.mxu0 0
    %4167 = vmatprep.subr.bf16.mxu0 0
    %4168 = vmatpush1.bf16.msra.mxu0 0
    %4169 = vmatprep.subr.bf16.mxu0 0
    %4170 = vmatpush1.bf16.msra.mxu0 0
    %4171 = vmatprep.subr.bf16.mxu0 0
    %4172 = vmatpush1.bf16.msra.mxu0 0
    %4173 = vmatprep.subr.bf16.mxu0 0
    %4174 = vmatpush1.bf16.msra.mxu0 0
    %4175 = vmatprep.mubr.bf16.mxu0 0
    %4176 = vmatmul.mubr.bf16.gmra.mrb[0].mxu0 %v3330
    %v4177 = vpop.f32.mrb[0].mxu0
    %v4178 = vadd.f32 0.0, %v4177
    %v4179 = vpop.f32.mrb[0].mxu0
    %v4180 = vpop.f32.mrb[0].mxu0
    %v4181 = vpop.f32.mrb[0].mxu0
    %4182 = vdwg.mxu0
    %v4183 = vadd.f32 %v4077, %v4178
    %s4184 = scalar_lea.vmem [#allocation8], 512
    %v4185 = vld [vmem:[%s4184] sm:$0xf]
    %v4186 = vld [vmem:[%s4184 + $0x4] sm:$0xf]
    %v4187 = vld [vmem:[%s4184 + $0x8] sm:$0xf]
    %v4188 = vld [vmem:[%s4184 + $0xc] sm:$0xf]
    %v4189 = vld [vmem:[%s4184 + $0x10] sm:$0xf]
    %v4190 = vld [vmem:[%s4184 + $0x14] sm:$0xf]
    %v4191 = vld [vmem:[%s4184 + $0x18] sm:$0xf]
    %v4192 = vld [vmem:[%s4184 + $0x1c] sm:$0xf]
    %v4193 = vld [vmem:[%s4184 + $0x20] sm:$0xf]
    %v4194 = vld [vmem:[%s4184 + $0x24] sm:$0xf]
    %v4195 = vld [vmem:[%s4184 + $0x28] sm:$0xf]
    %v4196 = vld [vmem:[%s4184 + $0x2c] sm:$0xf]
    %v4197 = vld [vmem:[%s4184 + $0x30] sm:$0xf]
    %v4198 = vld [vmem:[%s4184 + $0x34] sm:$0xf]
    %v4199 = vld [vmem:[%s4184 + $0x38] sm:$0xf]
    %v4200 = vld [vmem:[%s4184 + $0x3c] sm:$0xf]
    %v4217 = vunpack.c.l.b16 %v4185
    %v4218 = vunpack.c.l.b16 %v4186
    %v4219 = vunpack.c.l.b16 %v4187
    %v4220 = vunpack.c.l.b16 %v4188
    %v4221 = vunpack.c.l.b16 %v4189
    %v4222 = vunpack.c.l.b16 %v4190
    %v4223 = vunpack.c.l.b16 %v4191
    %v4224 = vunpack.c.l.b16 %v4192
    %v4225 = vunpack.c.l.b16 %v4193
    %v4226 = vunpack.c.l.b16 %v4194
    %v4227 = vunpack.c.l.b16 %v4195
    %v4228 = vunpack.c.l.b16 %v4196
    %v4229 = vunpack.c.l.b16 %v4197
    %v4230 = vunpack.c.l.b16 %v4198
    %v4231 = vunpack.c.l.b16 %v4199
    %v4232 = vunpack.c.l.b16 %v4200
    %v4233 = vpack.c.b16 %v4218, %v4217
    %v4234 = vpack.c.b16 %v4220, %v4219
    %v4235 = vpack.c.b16 %v4222, %v4221
    %v4236 = vpack.c.b16 %v4224, %v4223
    %v4237 = vpack.c.b16 %v4226, %v4225
    %v4238 = vpack.c.b16 %v4228, %v4227
    %v4239 = vpack.c.b16 %v4230, %v4229
    %v4240 = vpack.c.b16 %v4232, %v4231
    %4249 = vmatprep.subr.bf16.mxu0 0
    %4250 = vmatpush1.bf16.msra.mxu0 %v4233
    %4251 = vmatprep.subr.bf16.mxu0 0
    %4252 = vmatpush1.bf16.msra.mxu0 %v4234
    %4253 = vmatprep.subr.bf16.mxu0 0
    %4254 = vmatpush1.bf16.msra.mxu0 %v4235
    %4255 = vmatprep.subr.bf16.mxu0 0
    %4256 = vmatpush1.bf16.msra.mxu0 %v4236
    %4257 = vmatprep.subr.bf16.mxu0 0
    %4258 = vmatpush1.bf16.msra.mxu0 %v4237
    %4259 = vmatprep.subr.bf16.mxu0 0
    %4260 = vmatpush1.bf16.msra.mxu0 %v4238
    %4261 = vmatprep.subr.bf16.mxu0 0
    %4262 = vmatpush1.bf16.msra.mxu0 %v4239
    %4263 = vmatprep.subr.bf16.mxu0 0
    %4264 = vmatpush1.bf16.msra.mxu0 %v4240
    %4265 = vmatprep.subr.bf16.mxu0 0
    %4266 = vmatpush1.bf16.msra.mxu0 0
    %4267 = vmatprep.subr.bf16.mxu0 0
    %4268 = vmatpush1.bf16.msra.mxu0 0
    %4269 = vmatprep.subr.bf16.mxu0 0
    %4270 = vmatpush1.bf16.msra.mxu0 0
    %4271 = vmatprep.subr.bf16.mxu0 0
    %4272 = vmatpush1.bf16.msra.mxu0 0
    %4273 = vmatprep.subr.bf16.mxu0 0
    %4274 = vmatpush1.bf16.msra.mxu0 0
    %4275 = vmatprep.subr.bf16.mxu0 0
    %4276 = vmatpush1.bf16.msra.mxu0 0
    %4277 = vmatprep.subr.bf16.mxu0 0
    %4278 = vmatpush1.bf16.msra.mxu0 0
    %4279 = vmatprep.subr.bf16.mxu0 0
    %4280 = vmatpush1.bf16.msra.mxu0 0
    %4281 = vmatprep.mubr.bf16.mxu0 0
    %4282 = vmatmul.mubr.bf16.gmra.mrb[0].mxu0 %v3331
    %v4283 = vpop.f32.mrb[0].mxu0
    %v4284 = vadd.f32 0.0, %v4283
    %v4285 = vpop.f32.mrb[0].mxu0
    %v4286 = vpop.f32.mrb[0].mxu0
    %v4287 = vpop.f32.mrb[0].mxu0
    %4288 = vdwg.mxu0
    %v4289 = vadd.f32 %v4183, %v4284
    %s4290 = scalar_lea.vmem [#allocation8], 576
    %v4291 = vld [vmem:[%s4290] sm:$0xf]
    %v4292 = vld [vmem:[%s4290 + $0x4] sm:$0xf]
    %v4293 = vld [vmem:[%s4290 + $0x8] sm:$0xf]
    %v4294 = vld [vmem:[%s4290 + $0xc] sm:$0xf]
    %v4295 = vld [vmem:[%s4290 + $0x10] sm:$0xf]
    %v4296 = vld [vmem:[%s4290 + $0x14] sm:$0xf]
    %v4297 = vld [vmem:[%s4290 + $0x18] sm:$0xf]
    %v4298 = vld [vmem:[%s4290 + $0x1c] sm:$0xf]
    %v4299 = vld [vmem:[%s4290 + $0x20] sm:$0xf]
    %v4300 = vld [vmem:[%s4290 + $0x24] sm:$0xf]
    %v4301 = vld [vmem:[%s4290 + $0x28] sm:$0xf]
    %v4302 = vld [vmem:[%s4290 + $0x2c] sm:$0xf]
    %v4303 = vld [vmem:[%s4290 + $0x30] sm:$0xf]
    %v4304 = vld [vmem:[%s4290 + $0x34] sm:$0xf]
    %v4305 = vld [vmem:[%s4290 + $0x38] sm:$0xf]
    %v4306 = vld [vmem:[%s4290 + $0x3c] sm:$0xf]
    %v4323 = vunpack.c.l.b16 %v4291
    %v4324 = vunpack.c.l.b16 %v4292
    %v4325 = vunpack.c.l.b16 %v4293
    %v4326 = vunpack.c.l.b16 %v4294
    %v4327 = vunpack.c.l.b16 %v4295
    %v4328 = vunpack.c.l.b16 %v4296
    %v4329 = vunpack.c.l.b16 %v4297
    %v4330 = vunpack.c.l.b16 %v4298
    %v4331 = vunpack.c.l.b16 %v4299
    %v4332 = vunpack.c.l.b16 %v4300
    %v4333 = vunpack.c.l.b16 %v4301
    %v4334 = vunpack.c.l.b16 %v4302
    %v4335 = vunpack.c.l.b16 %v4303
    %v4336 = vunpack.c.l.b16 %v4304
    %v4337 = vunpack.c.l.b16 %v4305
    %v4338 = vunpack.c.l.b16 %v4306
    %v4339 = vpack.c.b16 %v4324, %v4323
    %v4340 = vpack.c.b16 %v4326, %v4325
    %v4341 = vpack.c.b16 %v4328, %v4327
    %v4342 = vpack.c.b16 %v4330, %v4329
    %v4343 = vpack.c.b16 %v4332, %v4331
    %v4344 = vpack.c.b16 %v4334, %v4333
    %v4345 = vpack.c.b16 %v4336, %v4335
    %v4346 = vpack.c.b16 %v4338, %v4337
    %4355 = vmatprep.subr.bf16.mxu0 0
    %4356 = vmatpush1.bf16.msra.mxu0 %v4339
    %4357 = vmatprep.subr.bf16.mxu0 0
    %4358 = vmatpush1.bf16.msra.mxu0 %v4340
    %4359 = vmatprep.subr.bf16.mxu0 0
    %4360 = vmatpush1.bf16.msra.mxu0 %v4341
    %4361 = vmatprep.subr.bf16.mxu0 0
    %4362 = vmatpush1.bf16.msra.mxu0 %v4342
    %4363 = vmatprep.subr.bf16.mxu0 0
    %4364 = vmatpush1.bf16.msra.mxu0 %v4343
    %4365 = vmatprep.subr.bf16.mxu0 0
    %4366 = vmatpush1.bf16.msra.mxu0 %v4344
    %4367 = vmatprep.subr.bf16.mxu0 0
    %4368 = vmatpush1.bf16.msra.mxu0 %v4345
    %4369 = vmatprep.subr.bf16.mxu0 0
    %4370 = vmatpush1.bf16.msra.mxu0 %v4346
    %4371 = vmatprep.subr.bf16.mxu0 0
    %4372 = vmatpush1.bf16.msra.mxu0 0
    %4373 = vmatprep.subr.bf16.mxu0 0
    %4374 = vmatpush1.bf16.msra.mxu0 0
    %4375 = vmatprep.subr.bf16.mxu0 0
    %4376 = vmatpush1.bf16.msra.mxu0 0
    %4377 = vmatprep.subr.bf16.mxu0 0
    %4378 = vmatpush1.bf16.msra.mxu0 0
    %4379 = vmatprep.subr.bf16.mxu0 0
    %4380 = vmatpush1.bf16.msra.mxu0 0
    %4381 = vmatprep.subr.bf16.mxu0 0
    %4382 = vmatpush1.bf16.msra.mxu0 0
    %4383 = vmatprep.subr.bf16.mxu0 0
    %4384 = vmatpush1.bf16.msra.mxu0 0
    %4385 = vmatprep.subr.bf16.mxu0 0
    %4386 = vmatpush1.bf16.msra.mxu0 0
    %4387 = vmatprep.mubr.bf16.mxu0 0
    %4388 = vmatmul.mubr.bf16.gmra.mrb[0].mxu0 %v3332
    %v4389 = vpop.f32.mrb[0].mxu0
    %v4390 = vadd.f32 0.0, %v4389
    %v4391 = vpop.f32.mrb[0].mxu0
    %v4392 = vpop.f32.mrb[0].mxu0
    %v4393 = vpop.f32.mrb[0].mxu0
    %4394 = vdwg.mxu0
    %v4395 = vadd.f32 %v4289, %v4390
    %s4396 = scalar_lea.vmem [#allocation8], 640
    %v4397 = vld [vmem:[%s4396] sm:$0xf]
    %v4398 = vld [vmem:[%s4396 + $0x4] sm:$0xf]
    %v4399 = vld [vmem:[%s4396 + $0x8] sm:$0xf]
    %v4400 = vld [vmem:[%s4396 + $0xc] sm:$0xf]
    %v4401 = vld [vmem:[%s4396 + $0x10] sm:$0xf]
    %v4402 = vld [vmem:[%s4396 + $0x14] sm:$0xf]
    %v4403 = vld [vmem:[%s4396 + $0x18] sm:$0xf]
    %v4404 = vld [vmem:[%s4396 + $0x1c] sm:$0xf]
    %v4405 = vld [vmem:[%s4396 + $0x20] sm:$0xf]
    %v4406 = vld [vmem:[%s4396 + $0x24] sm:$0xf]
    %v4407 = vld [vmem:[%s4396 + $0x28] sm:$0xf]
    %v4408 = vld [vmem:[%s4396 + $0x2c] sm:$0xf]
    %v4409 = vld [vmem:[%s4396 + $0x30] sm:$0xf]
    %v4410 = vld [vmem:[%s4396 + $0x34] sm:$0xf]
    %v4411 = vld [vmem:[%s4396 + $0x38] sm:$0xf]
    %v4412 = vld [vmem:[%s4396 + $0x3c] sm:$0xf]
    %v4429 = vunpack.c.l.b16 %v4397
    %v4430 = vunpack.c.l.b16 %v4398
    %v4431 = vunpack.c.l.b16 %v4399
    %v4432 = vunpack.c.l.b16 %v4400
    %v4433 = vunpack.c.l.b16 %v4401
    %v4434 = vunpack.c.l.b16 %v4402
    %v4435 = vunpack.c.l.b16 %v4403
    %v4436 = vunpack.c.l.b16 %v4404
    %v4437 = vunpack.c.l.b16 %v4405
    %v4438 = vunpack.c.l.b16 %v4406
    %v4439 = vunpack.c.l.b16 %v4407
    %v4440 = vunpack.c.l.b16 %v4408
    %v4441 = vunpack.c.l.b16 %v4409
    %v4442 = vunpack.c.l.b16 %v4410
    %v4443 = vunpack.c.l.b16 %v4411
    %v4444 = vunpack.c.l.b16 %v4412
    %v4445 = vpack.c.b16 %v4430, %v4429
    %v4446 = vpack.c.b16 %v4432, %v4431
    %v4447 = vpack.c.b16 %v4434, %v4433
    %v4448 = vpack.c.b16 %v4436, %v4435
    %v4449 = vpack.c.b16 %v4438, %v4437
    %v4450 = vpack.c.b16 %v4440, %v4439
    %v4451 = vpack.c.b16 %v4442, %v4441
    %v4452 = vpack.c.b16 %v4444, %v4443
    %4461 = vmatprep.subr.bf16.mxu0 0
    %4462 = vmatpush1.bf16.msra.mxu0 %v4445
    %4463 = vmatprep.subr.bf16.mxu0 0
    %4464 = vmatpush1.bf16.msra.mxu0 %v4446
    %4465 = vmatprep.subr.bf16.mxu0 0
    %4466 = vmatpush1.bf16.msra.mxu0 %v4447
    %4467 = vmatprep.subr.bf16.mxu0 0
    %4468 = vmatpush1.bf16.msra.mxu0 %v4448
    %4469 = vmatprep.subr.bf16.mxu0 0
    %4470 = vmatpush1.bf16.msra.mxu0 %v4449
    %4471 = vmatprep.subr.bf16.mxu0 0
    %4472 = vmatpush1.bf16.msra.mxu0 %v4450
    %4473 = vmatprep.subr.bf16.mxu0 0
    %4474 = vmatpush1.bf16.msra.mxu0 %v4451
    %4475 = vmatprep.subr.bf16.mxu0 0
    %4476 = vmatpush1.bf16.msra.mxu0 %v4452
    %4477 = vmatprep.subr.bf16.mxu0 0
    %4478 = vmatpush1.bf16.msra.mxu0 0
    %4479 = vmatprep.subr.bf16.mxu0 0
    %4480 = vmatpush1.bf16.msra.mxu0 0
    %4481 = vmatprep.subr.bf16.mxu0 0
    %4482 = vmatpush1.bf16.msra.mxu0 0
    %4483 = vmatprep.subr.bf16.mxu0 0
    %4484 = vmatpush1.bf16.msra.mxu0 0
    %4485 = vmatprep.subr.bf16.mxu0 0
    %4486 = vmatpush1.bf16.msra.mxu0 0
    %4487 = vmatprep.subr.bf16.mxu0 0
    %4488 = vmatpush1.bf16.msra.mxu0 0
    %4489 = vmatprep.subr.bf16.mxu0 0
    %4490 = vmatpush1.bf16.msra.mxu0 0
    %4491 = vmatprep.subr.bf16.mxu0 0
    %4492 = vmatpush1.bf16.msra.mxu0 0
    %4493 = vmatprep.mubr.bf16.mxu0 0
    %4494 = vmatmul.mubr.bf16.gmra.mrb[0].mxu0 %v3333
    %v4495 = vpop.f32.mrb[0].mxu0
    %v4496 = vadd.f32 0.0, %v4495
    %v4497 = vpop.f32.mrb[0].mxu0
    %v4498 = vpop.f32.mrb[0].mxu0
    %v4499 = vpop.f32.mrb[0].mxu0
    %4500 = vdwg.mxu0
    %v4501 = vadd.f32 %v4395, %v4496
    %s4502 = scalar_lea.vmem [#allocation8], 704
    %v4503 = vld [vmem:[%s4502] sm:$0xf]
    %v4504 = vld [vmem:[%s4502 + $0x4] sm:$0xf]
    %v4505 = vld [vmem:[%s4502 + $0x8] sm:$0xf]
    %v4506 = vld [vmem:[%s4502 + $0xc] sm:$0xf]
    %v4507 = vld [vmem:[%s4502 + $0x10] sm:$0xf]
    %v4508 = vld [vmem:[%s4502 + $0x14] sm:$0xf]
    %v4509 = vld [vmem:[%s4502 + $0x18] sm:$0xf]
    %v4510 = vld [vmem:[%s4502 + $0x1c] sm:$0xf]
    %v4511 = vld [vmem:[%s4502 + $0x20] sm:$0xf]
    %v4512 = vld [vmem:[%s4502 + $0x24] sm:$0xf]
    %v4513 = vld [vmem:[%s4502 + $0x28] sm:$0xf]
    %v4514 = vld [vmem:[%s4502 + $0x2c] sm:$0xf]
    %v4515 = vld [vmem:[%s4502 + $0x30] sm:$0xf]
    %v4516 = vld [vmem:[%s4502 + $0x34] sm:$0xf]
    %v4517 = vld [vmem:[%s4502 + $0x38] sm:$0xf]
    %v4518 = vld [vmem:[%s4502 + $0x3c] sm:$0xf]
    %v4535 = vunpack.c.l.b16 %v4503
    %v4536 = vunpack.c.l.b16 %v4504
    %v4537 = vunpack.c.l.b16 %v4505
    %v4538 = vunpack.c.l.b16 %v4506
    %v4539 = vunpack.c.l.b16 %v4507
    %v4540 = vunpack.c.l.b16 %v4508
    %v4541 = vunpack.c.l.b16 %v4509
    %v4542 = vunpack.c.l.b16 %v4510
    %v4543 = vunpack.c.l.b16 %v4511
    %v4544 = vunpack.c.l.b16 %v4512
    %v4545 = vunpack.c.l.b16 %v4513
    %v4546 = vunpack.c.l.b16 %v4514
    %v4547 = vunpack.c.l.b16 %v4515
    %v4548 = vunpack.c.l.b16 %v4516
    %v4549 = vunpack.c.l.b16 %v4517
    %v4550 = vunpack.c.l.b16 %v4518
    %v4551 = vpack.c.b16 %v4536, %v4535
    %v4552 = vpack.c.b16 %v4538, %v4537
    %v4553 = vpack.c.b16 %v4540, %v4539
    %v4554 = vpack.c.b16 %v4542, %v4541
    %v4555 = vpack.c.b16 %v4544, %v4543
    %v4556 = vpack.c.b16 %v4546, %v4545
    %v4557 = vpack.c.b16 %v4548, %v4547
    %v4558 = vpack.c.b16 %v4550, %v4549
    %4567 = vmatprep.subr.bf16.mxu0 0
    %4568 = vmatpush1.bf16.msra.mxu0 %v4551
    %4569 = vmatprep.subr.bf16.mxu0 0
    %4570 = vmatpush1.bf16.msra.mxu0 %v4552
    %4571 = vmatprep.subr.bf16.mxu0 0
    %4572 = vmatpush1.bf16.msra.mxu0 %v4553
    %4573 = vmatprep.subr.bf16.mxu0 0
    %4574 = vmatpush1.bf16.msra.mxu0 %v4554
    %4575 = vmatprep.subr.bf16.mxu0 0
    %4576 = vmatpush1.bf16.msra.mxu0 %v4555
    %4577 = vmatprep.subr.bf16.mxu0 0
    %4578 = vmatpush1.bf16.msra.mxu0 %v4556
    %4579 = vmatprep.subr.bf16.mxu0 0
    %4580 = vmatpush1.bf16.msra.mxu0 %v4557
    %4581 = vmatprep.subr.bf16.mxu0 0
    %4582 = vmatpush1.bf16.msra.mxu0 %v4558
    %4583 = vmatprep.subr.bf16.mxu0 0
    %4584 = vmatpush1.bf16.msra.mxu0 0
    %4585 = vmatprep.subr.bf16.mxu0 0
    %4586 = vmatpush1.bf16.msra.mxu0 0
    %4587 = vmatprep.subr.bf16.mxu0 0
    %4588 = vmatpush1.bf16.msra.mxu0 0
    %4589 = vmatprep.subr.bf16.mxu0 0
    %4590 = vmatpush1.bf16.msra.mxu0 0
    %4591 = vmatprep.subr.bf16.mxu0 0
    %4592 = vmatpush1.bf16.msra.mxu0 0
    %4593 = vmatprep.subr.bf16.mxu0 0
    %4594 = vmatpush1.bf16.msra.mxu0 0
    %4595 = vmatprep.subr.bf16.mxu0 0
    %4596 = vmatpush1.bf16.msra.mxu0 0
    %4597 = vmatprep.subr.bf16.mxu0 0
    %4598 = vmatpush1.bf16.msra.mxu0 0
    %4599 = vmatprep.mubr.bf16.mxu0 0
    %4600 = vmatmul.mubr.bf16.gmra.mrb[0].mxu0 %v3334
    %v4601 = vpop.f32.mrb[0].mxu0
    %v4602 = vadd.f32 0.0, %v4601
    %v4603 = vpop.f32.mrb[0].mxu0
    %v4604 = vpop.f32.mrb[0].mxu0
    %v4605 = vpop.f32.mrb[0].mxu0
    %4606 = vdwg.mxu0
    %v4607 = vadd.f32 %v4501, %v4602
    %s4608 = scalar_lea.vmem [#allocation8], 768
    %v4609 = vld [vmem:[%s4608] sm:$0xf]
    %v4610 = vld [vmem:[%s4608 + $0x4] sm:$0xf]
    %v4611 = vld [vmem:[%s4608 + $0x8] sm:$0xf]
    %v4612 = vld [vmem:[%s4608 + $0xc] sm:$0xf]
    %v4613 = vld [vmem:[%s4608 + $0x10] sm:$0xf]
    %v4614 = vld [vmem:[%s4608 + $0x14] sm:$0xf]
    %v4615 = vld [vmem:[%s4608 + $0x18] sm:$0xf]
    %v4616 = vld [vmem:[%s4608 + $0x1c] sm:$0xf]
    %v4617 = vld [vmem:[%s4608 + $0x20] sm:$0xf]
    %v4618 = vld [vmem:[%s4608 + $0x24] sm:$0xf]
    %v4619 = vld [vmem:[%s4608 + $0x28] sm:$0xf]
    %v4620 = vld [vmem:[%s4608 + $0x2c] sm:$0xf]
    %v4621 = vld [vmem:[%s4608 + $0x30] sm:$0xf]
    %v4622 = vld [vmem:[%s4608 + $0x34] sm:$0xf]
    %v4623 = vld [vmem:[%s4608 + $0x38] sm:$0xf]
    %v4624 = vld [vmem:[%s4608 + $0x3c] sm:$0xf]
    %v4641 = vunpack.c.l.b16 %v4609
    %v4642 = vunpack.c.l.b16 %v4610
    %v4643 = vunpack.c.l.b16 %v4611
    %v4644 = vunpack.c.l.b16 %v4612
    %v4645 = vunpack.c.l.b16 %v4613
    %v4646 = vunpack.c.l.b16 %v4614
    %v4647 = vunpack.c.l.b16 %v4615
    %v4648 = vunpack.c.l.b16 %v4616
    %v4649 = vunpack.c.l.b16 %v4617
    %v4650 = vunpack.c.l.b16 %v4618
    %v4651 = vunpack.c.l.b16 %v4619
    %v4652 = vunpack.c.l.b16 %v4620
    %v4653 = vunpack.c.l.b16 %v4621
    %v4654 = vunpack.c.l.b16 %v4622
    %v4655 = vunpack.c.l.b16 %v4623
    %v4656 = vunpack.c.l.b16 %v4624
    %v4657 = vpack.c.b16 %v4642, %v4641
    %v4658 = vpack.c.b16 %v4644, %v4643
    %v4659 = vpack.c.b16 %v4646, %v4645
    %v4660 = vpack.c.b16 %v4648, %v4647
    %v4661 = vpack.c.b16 %v4650, %v4649
    %v4662 = vpack.c.b16 %v4652, %v4651
    %v4663 = vpack.c.b16 %v4654, %v4653
    %v4664 = vpack.c.b16 %v4656, %v4655
    %4673 = vmatprep.subr.bf16.mxu0 0
    %4674 = vmatpush1.bf16.msra.mxu0 %v4657
    %4675 = vmatprep.subr.bf16.mxu0 0
    %4676 = vmatpush1.bf16.msra.mxu0 %v4658
    %4677 = vmatprep.subr.bf16.mxu0 0
    %4678 = vmatpush1.bf16.msra.mxu0 %v4659
    %4679 = vmatprep.subr.bf16.mxu0 0
    %4680 = vmatpush1.bf16.msra.mxu0 %v4660
    %4681 = vmatprep.subr.bf16.mxu0 0
    %4682 = vmatpush1.bf16.msra.mxu0 %v4661
    %4683 = vmatprep.subr.bf16.mxu0 0
    %4684 = vmatpush1.bf16.msra.mxu0 %v4662
    %4685 = vmatprep.subr.bf16.mxu0 0
    %4686 = vmatpush1.bf16.msra.mxu0 %v4663
    %4687 = vmatprep.subr.bf16.mxu0 0
    %4688 = vmatpush1.bf16.msra.mxu0 %v4664
    %4689 = vmatprep.subr.bf16.mxu0 0
    %4690 = vmatpush1.bf16.msra.mxu0 0
    %4691 = vmatprep.subr.bf16.mxu0 0
    %4692 = vmatpush1.bf16.msra.mxu0 0
    %4693 = vmatprep.subr.bf16.mxu0 0
    %4694 = vmatpush1.bf16.msra.mxu0 0
    %4695 = vmatprep.subr.bf16.mxu0 0
    %4696 = vmatpush1.bf16.msra.mxu0 0
    %4697 = vmatprep.subr.bf16.mxu0 0
    %4698 = vmatpush1.bf16.msra.mxu0 0
    %4699 = vmatprep.subr.bf16.mxu0 0
    %4700 = vmatpush1.bf16.msra.mxu0 0
    %4701 = vmatprep.subr.bf16.mxu0 0
    %4702 = vmatpush1.bf16.msra.mxu0 0
    %4703 = vmatprep.subr.bf16.mxu0 0
    %4704 = vmatpush1.bf16.msra.mxu0 0
    %4705 = vmatprep.mubr.bf16.mxu0 0
    %4706 = vmatmul.mubr.bf16.gmra.mrb[0].mxu0 %v3335
    %v4707 = vpop.f32.mrb[0].mxu0
    %v4708 = vadd.f32 0.0, %v4707
    %v4709 = vpop.f32.mrb[0].mxu0
    %v4710 = vpop.f32.mrb[0].mxu0
    %v4711 = vpop.f32.mrb[0].mxu0
    %4712 = vdwg.mxu0
    %v4713 = vadd.f32 %v4607, %v4708
    %s4714 = scalar_lea.vmem [#allocation8], 832
    %v4715 = vld [vmem:[%s4714] sm:$0xf]
    %v4716 = vld [vmem:[%s4714 + $0x4] sm:$0xf]
    %v4717 = vld [vmem:[%s4714 + $0x8] sm:$0xf]
    %v4718 = vld [vmem:[%s4714 + $0xc] sm:$0xf]
    %v4719 = vld [vmem:[%s4714 + $0x10] sm:$0xf]
    %v4720 = vld [vmem:[%s4714 + $0x14] sm:$0xf]
    %v4721 = vld [vmem:[%s4714 + $0x18] sm:$0xf]
    %v4722 = vld [vmem:[%s4714 + $0x1c] sm:$0xf]
    %v4723 = vld [vmem:[%s4714 + $0x20] sm:$0xf]
    %v4724 = vld [vmem:[%s4714 + $0x24] sm:$0xf]
    %v4725 = vld [vmem:[%s4714 + $0x28] sm:$0xf]
    %v4726 = vld [vmem:[%s4714 + $0x2c] sm:$0xf]
    %v4727 = vld [vmem:[%s4714 + $0x30] sm:$0xf]
    %v4728 = vld [vmem:[%s4714 + $0x34] sm:$0xf]
    %v4729 = vld [vmem:[%s4714 + $0x38] sm:$0xf]
    %v4730 = vld [vmem:[%s4714 + $0x3c] sm:$0xf]
    %v4747 = vunpack.c.l.b16 %v4715
    %v4748 = vunpack.c.l.b16 %v4716
    %v4749 = vunpack.c.l.b16 %v4717
    %v4750 = vunpack.c.l.b16 %v4718
    %v4751 = vunpack.c.l.b16 %v4719
    %v4752 = vunpack.c.l.b16 %v4720
    %v4753 = vunpack.c.l.b16 %v4721
    %v4754 = vunpack.c.l.b16 %v4722
    %v4755 = vunpack.c.l.b16 %v4723
    %v4756 = vunpack.c.l.b16 %v4724
    %v4757 = vunpack.c.l.b16 %v4725
    %v4758 = vunpack.c.l.b16 %v4726
    %v4759 = vunpack.c.l.b16 %v4727
    %v4760 = vunpack.c.l.b16 %v4728
    %v4761 = vunpack.c.l.b16 %v4729
    %v4762 = vunpack.c.l.b16 %v4730
    %v4763 = vpack.c.b16 %v4748, %v4747
    %v4764 = vpack.c.b16 %v4750, %v4749
    %v4765 = vpack.c.b16 %v4752, %v4751
    %v4766 = vpack.c.b16 %v4754, %v4753
    %v4767 = vpack.c.b16 %v4756, %v4755
    %v4768 = vpack.c.b16 %v4758, %v4757
    %v4769 = vpack.c.b16 %v4760, %v4759
    %v4770 = vpack.c.b16 %v4762, %v4761
    %4779 = vmatprep.subr.bf16.mxu0 0
    %4780 = vmatpush1.bf16.msra.mxu0 %v4763
    %4781 = vmatprep.subr.bf16.mxu0 0
    %4782 = vmatpush1.bf16.msra.mxu0 %v4764
    %4783 = vmatprep.subr.bf16.mxu0 0
    %4784 = vmatpush1.bf16.msra.mxu0 %v4765
    %4785 = vmatprep.subr.bf16.mxu0 0
    %4786 = vmatpush1.bf16.msra.mxu0 %v4766
    %4787 = vmatprep.subr.bf16.mxu0 0
    %4788 = vmatpush1.bf16.msra.mxu0 %v4767
    %4789 = vmatprep.subr.bf16.mxu0 0
    %4790 = vmatpush1.bf16.msra.mxu0 %v4768
    %4791 = vmatprep.subr.bf16.mxu0 0
    %4792 = vmatpush1.bf16.msra.mxu0 %v4769
    %4793 = vmatprep.subr.bf16.mxu0 0
    %4794 = vmatpush1.bf16.msra.mxu0 %v4770
    %4795 = vmatprep.subr.bf16.mxu0 0
    %4796 = vmatpush1.bf16.msra.mxu0 0
    %4797 = vmatprep.subr.bf16.mxu0 0
    %4798 = vmatpush1.bf16.msra.mxu0 0
    %4799 = vmatprep.subr.bf16.mxu0 0
    %4800 = vmatpush1.bf16.msra.mxu0 0
    %4801 = vmatprep.subr.bf16.mxu0 0
    %4802 = vmatpush1.bf16.msra.mxu0 0
    %4803 = vmatprep.subr.bf16.mxu0 0
    %4804 = vmatpush1.bf16.msra.mxu0 0
    %4805 = vmatprep.subr.bf16.mxu0 0
    %4806 = vmatpush1.bf16.msra.mxu0 0
    %4807 = vmatprep.subr.bf16.mxu0 0
    %4808 = vmatpush1.bf16.msra.mxu0 0
    %4809 = vmatprep.subr.bf16.mxu0 0
    %4810 = vmatpush1.bf16.msra.mxu0 0
    %4811 = vmatprep.mubr.bf16.mxu0 0
    %4812 = vmatmul.mubr.bf16.gmra.mrb[0].mxu0 %v3336
    %v4813 = vpop.f32.mrb[0].mxu0
    %v4814 = vadd.f32 0.0, %v4813
    %v4815 = vpop.f32.mrb[0].mxu0
    %v4816 = vpop.f32.mrb[0].mxu0
    %v4817 = vpop.f32.mrb[0].mxu0
    %4818 = vdwg.mxu0
    %v4819 = vadd.f32 %v4713, %v4814
    %s4820 = scalar_lea.vmem [#allocation8], 896
    %v4821 = vld [vmem:[%s4820] sm:$0xf]
    %v4822 = vld [vmem:[%s4820 + $0x4] sm:$0xf]
    %v4823 = vld [vmem:[%s4820 + $0x8] sm:$0xf]
    %v4824 = vld [vmem:[%s4820 + $0xc] sm:$0xf]
    %v4825 = vld [vmem:[%s4820 + $0x10] sm:$0xf]
    %v4826 = vld [vmem:[%s4820 + $0x14] sm:$0xf]
    %v4827 = vld [vmem:[%s4820 + $0x18] sm:$0xf]
    %v4828 = vld [vmem:[%s4820 + $0x1c] sm:$0xf]
    %v4829 = vld [vmem:[%s4820 + $0x20] sm:$0xf]
    %v4830 = vld [vmem:[%s4820 + $0x24] sm:$0xf]
    %v4831 = vld [vmem:[%s4820 + $0x28] sm:$0xf]
    %v4832 = vld [vmem:[%s4820 + $0x2c] sm:$0xf]
    %v4833 = vld [vmem:[%s4820 + $0x30] sm:$0xf]
    %v4834 = vld [vmem:[%s4820 + $0x34] sm:$0xf]
    %v4835 = vld [vmem:[%s4820 + $0x38] sm:$0xf]
    %v4836 = vld [vmem:[%s4820 + $0x3c] sm:$0xf]
    %v4853 = vunpack.c.l.b16 %v4821
    %v4854 = vunpack.c.l.b16 %v4822
    %v4855 = vunpack.c.l.b16 %v4823
    %v4856 = vunpack.c.l.b16 %v4824
    %v4857 = vunpack.c.l.b16 %v4825
    %v4858 = vunpack.c.l.b16 %v4826
    %v4859 = vunpack.c.l.b16 %v4827
    %v4860 = vunpack.c.l.b16 %v4828
    %v4861 = vunpack.c.l.b16 %v4829
    %v4862 = vunpack.c.l.b16 %v4830
    %v4863 = vunpack.c.l.b16 %v4831
    %v4864 = vunpack.c.l.b16 %v4832
    %v4865 = vunpack.c.l.b16 %v4833
    %v4866 = vunpack.c.l.b16 %v4834
    %v4867 = vunpack.c.l.b16 %v4835
    %v4868 = vunpack.c.l.b16 %v4836
    %v4869 = vpack.c.b16 %v4854, %v4853
    %v4870 = vpack.c.b16 %v4856, %v4855
    %v4871 = vpack.c.b16 %v4858, %v4857
    %v4872 = vpack.c.b16 %v4860, %v4859
    %v4873 = vpack.c.b16 %v4862, %v4861
    %v4874 = vpack.c.b16 %v4864, %v4863
    %v4875 = vpack.c.b16 %v4866, %v4865
    %v4876 = vpack.c.b16 %v4868, %v4867
    %4885 = vmatprep.subr.bf16.mxu0 0
    %4886 = vmatpush1.bf16.msra.mxu0 %v4869
    %4887 = vmatprep.subr.bf16.mxu0 0
    %4888 = vmatpush1.bf16.msra.mxu0 %v4870
    %4889 = vmatprep.subr.bf16.mxu0 0
    %4890 = vmatpush1.bf16.msra.mxu0 %v4871
    %4891 = vmatprep.subr.bf16.mxu0 0
    %4892 = vmatpush1.bf16.msra.mxu0 %v4872
    %4893 = vmatprep.subr.bf16.mxu0 0
    %4894 = vmatpush1.bf16.msra.mxu0 %v4873
    %4895 = vmatprep.subr.bf16.mxu0 0
    %4896 = vmatpush1.bf16.msra.mxu0 %v4874
    %4897 = vmatprep.subr.bf16.mxu0 0
    %4898 = vmatpush1.bf16.msra.mxu0 %v4875
    %4899 = vmatprep.subr.bf16.mxu0 0
    %4900 = vmatpush1.bf16.msra.mxu0 %v4876
    %4901 = vmatprep.subr.bf16.mxu0 0
    %4902 = vmatpush1.bf16.msra.mxu0 0
    %4903 = vmatprep.subr.bf16.mxu0 0
    %4904 = vmatpush1.bf16.msra.mxu0 0
    %4905 = vmatprep.subr.bf16.mxu0 0
    %4906 = vmatpush1.bf16.msra.mxu0 0
    %4907 = vmatprep.subr.bf16.mxu0 0
    %4908 = vmatpush1.bf16.msra.mxu0 0
    %4909 = vmatprep.subr.bf16.mxu0 0
    %4910 = vmatpush1.bf16.msra.mxu0 0
    %4911 = vmatprep.subr.bf16.mxu0 0
    %4912 = vmatpush1.bf16.msra.mxu0 0
    %4913 = vmatprep.subr.bf16.mxu0 0
    %4914 = vmatpush1.bf16.msra.mxu0 0
    %4915 = vmatprep.subr.bf16.mxu0 0
    %4916 = vmatpush1.bf16.msra.mxu0 0
    %4917 = vmatprep.mubr.bf16.mxu0 0
    %4918 = vmatmul.mubr.bf16.gmra.mrb[0].mxu0 %v3337
    %v4919 = vpop.f32.mrb[0].mxu0
    %v4920 = vadd.f32 0.0, %v4919
    %v4921 = vpop.f32.mrb[0].mxu0
    %v4922 = vpop.f32.mrb[0].mxu0
    %v4923 = vpop.f32.mrb[0].mxu0
    %4924 = vdwg.mxu0
    %v4925 = vadd.f32 %v4819, %v4920
    %s4926 = scalar_lea.vmem [#allocation8], 960
    %v4927 = vld [vmem:[%s4926] sm:$0xf]
    %v4928 = vld [vmem:[%s4926 + $0x4] sm:$0xf]
    %v4929 = vld [vmem:[%s4926 + $0x8] sm:$0xf]
    %v4930 = vld [vmem:[%s4926 + $0xc] sm:$0xf]
    %v4931 = vld [vmem:[%s4926 + $0x10] sm:$0xf]
    %v4932 = vld [vmem:[%s4926 + $0x14] sm:$0xf]
    %v4933 = vld [vmem:[%s4926 + $0x18] sm:$0xf]
    %v4934 = vld [vmem:[%s4926 + $0x1c] sm:$0xf]
    %v4935 = vld [vmem:[%s4926 + $0x20] sm:$0xf]
    %v4936 = vld [vmem:[%s4926 + $0x24] sm:$0xf]
    %v4937 = vld [vmem:[%s4926 + $0x28] sm:$0xf]
    %v4938 = vld [vmem:[%s4926 + $0x2c] sm:$0xf]
    %v4939 = vld [vmem:[%s4926 + $0x30] sm:$0xf]
    %v4940 = vld [vmem:[%s4926 + $0x34] sm:$0xf]
    %v4941 = vld [vmem:[%s4926 + $0x38] sm:$0xf]
    %v4942 = vld [vmem:[%s4926 + $0x3c] sm:$0xf]
    %v4959 = vunpack.c.l.b16 %v4927
    %v4960 = vunpack.c.l.b16 %v4928
    %v4961 = vunpack.c.l.b16 %v4929
    %v4962 = vunpack.c.l.b16 %v4930
    %v4963 = vunpack.c.l.b16 %v4931
    %v4964 = vunpack.c.l.b16 %v4932
    %v4965 = vunpack.c.l.b16 %v4933
    %v4966 = vunpack.c.l.b16 %v4934
    %v4967 = vunpack.c.l.b16 %v4935
    %v4968 = vunpack.c.l.b16 %v4936
    %v4969 = vunpack.c.l.b16 %v4937
    %v4970 = vunpack.c.l.b16 %v4938
    %v4971 = vunpack.c.l.b16 %v4939
    %v4972 = vunpack.c.l.b16 %v4940
    %v4973 = vunpack.c.l.b16 %v4941
    %v4974 = vunpack.c.l.b16 %v4942
    %v4975 = vpack.c.b16 %v4960, %v4959
    %v4976 = vpack.c.b16 %v4962, %v4961
    %v4977 = vpack.c.b16 %v4964, %v4963
    %v4978 = vpack.c.b16 %v4966, %v4965
    %v4979 = vpack.c.b16 %v4968, %v4967
    %v4980 = vpack.c.b16 %v4970, %v4969
    %v4981 = vpack.c.b16 %v4972, %v4971
    %v4982 = vpack.c.b16 %v4974, %v4973
    %4991 = vmatprep.subr.bf16.mxu0 0
    %4992 = vmatpush1.bf16.msra.mxu0 %v4975
    %4993 = vmatprep.subr.bf16.mxu0 0
    %4994 = vmatpush1.bf16.msra.mxu0 %v4976
    %4995 = vmatprep.subr.bf16.mxu0 0
    %4996 = vmatpush1.bf16.msra.mxu0 %v4977
    %4997 = vmatprep.subr.bf16.mxu0 0
    %4998 = vmatpush1.bf16.msra.mxu0 %v4978
    %4999 = vmatprep.subr.bf16.mxu0 0
    %5000 = vmatpush1.bf16.msra.mxu0 %v4979
    %5001 = vmatprep.subr.bf16.mxu0 0
    %5002 = vmatpush1.bf16.msra.mxu0 %v4980
    %5003 = vmatprep.subr.bf16.mxu0 0
    %5004 = vmatpush1.bf16.msra.mxu0 %v4981
    %5005 = vmatprep.subr.bf16.mxu0 0
    %5006 = vmatpush1.bf16.msra.mxu0 %v4982
    %5007 = vmatprep.subr.bf16.mxu0 0
    %5008 = vmatpush1.bf16.msra.mxu0 0
    %5009 = vmatprep.subr.bf16.mxu0 0
    %5010 = vmatpush1.bf16.msra.mxu0 0
    %5011 = vmatprep.subr.bf16.mxu0 0
    %5012 = vmatpush1.bf16.msra.mxu0 0
    %5013 = vmatprep.subr.bf16.mxu0 0
    %5014 = vmatpush1.bf16.msra.mxu0 0
    %5015 = vmatprep.subr.bf16.mxu0 0
    %5016 = vmatpush1.bf16.msra.mxu0 0
    %5017 = vmatprep.subr.bf16.mxu0 0
    %5018 = vmatpush1.bf16.msra.mxu0 0
    %5019 = vmatprep.subr.bf16.mxu0 0
    %5020 = vmatpush1.bf16.msra.mxu0 0
    %5021 = vmatprep.subr.bf16.mxu0 0
    %5022 = vmatpush1.bf16.msra.mxu0 0
    %5023 = vmatprep.mubr.bf16.mxu0 0
    %5024 = vmatmul.mubr.bf16.gmra.mrb[0].mxu0 %v3338
    %v5025 = vpop.f32.mrb[0].mxu0
    %v5026 = vadd.f32 0.0, %v5025
    %v5027 = vpop.f32.mrb[0].mxu0
    %v5028 = vpop.f32.mrb[0].mxu0
    %v5029 = vpop.f32.mrb[0].mxu0
    %5030 = vdwg.mxu0
    %v5031 = vadd.f32 %v4925, %v5026
    %v5032 = vld [vmem:[%s4] sm:$0x1]
    %v5034 = vlaneseq
    %v5035 = vshrl.u32 %v5034, 7
    %v5036 = vsub.s32 0, %v5035
    %v5037 = vrot.slane %v5032, %v5036
    %v5039 = vadd.f32 %v5031, %v5037
    %v5040 = vmax.f32 %v5039, 0.0
    %v5041 = vpack.c.bf16 %v5040, %v5040
    %v5042 = vld [vmem:[#allocation10] sm:$0xf]
    %v5043 = vld [vmem:[#allocation10 + $0x4] sm:$0xf]
    %v5044 = vld [vmem:[#allocation10 + $0x8] sm:$0xf]
    %v5045 = vld [vmem:[#allocation10 + $0xc] sm:$0xf]
    %v5046 = vld [vmem:[#allocation10 + $0x10] sm:$0xf]
    %v5047 = vld [vmem:[#allocation10 + $0x14] sm:$0xf]
    %v5048 = vld [vmem:[#allocation10 + $0x18] sm:$0xf]
    %v5049 = vld [vmem:[#allocation10 + $0x1c] sm:$0xf]
    %v5050 = vld [vmem:[#allocation10 + $0x20] sm:$0xf]
    %v5051 = vld [vmem:[#allocation10 + $0x24] sm:$0xf]
    %v5052 = vld [vmem:[#allocation10 + $0x28] sm:$0xf]
    %v5053 = vld [vmem:[#allocation10 + $0x2c] sm:$0xf]
    %v5054 = vld [vmem:[#allocation10 + $0x30] sm:$0xf]
    %v5055 = vld [vmem:[#allocation10 + $0x34] sm:$0xf]
    %v5056 = vld [vmem:[#allocation10 + $0x38] sm:$0xf]
    %v5057 = vld [vmem:[#allocation10 + $0x3c] sm:$0xf]
    %v5058 = vld [vmem:[%s6] sm:$0x1]
    %v5060 = vlaneseq
    %v5061 = vshrl.u32 %v5060, 7
    %v5062 = vsub.s32 0, %v5061
    %v5063 = vrot.slane %v5058, %v5062
    %v5081 = vunpack.c.l.b16 %v5042
    %v5082 = vunpack.c.l.b16 %v5043
    %v5083 = vunpack.c.l.b16 %v5044
    %v5084 = vunpack.c.l.b16 %v5045
    %v5085 = vunpack.c.l.b16 %v5046
    %v5086 = vunpack.c.l.b16 %v5047
    %v5087 = vunpack.c.l.b16 %v5048
    %v5088 = vunpack.c.l.b16 %v5049
    %v5089 = vunpack.c.l.b16 %v5050
    %v5090 = vunpack.c.l.b16 %v5051
    %v5091 = vunpack.c.l.b16 %v5052
    %v5092 = vunpack.c.l.b16 %v5053
    %v5093 = vunpack.c.l.b16 %v5054
    %v5094 = vunpack.c.l.b16 %v5055
    %v5095 = vunpack.c.l.b16 %v5056
    %v5096 = vunpack.c.l.b16 %v5057
    %v5097 = vpack.c.b16 %v5082, %v5081
    %v5098 = vpack.c.b16 %v5084, %v5083
    %v5099 = vpack.c.b16 %v5086, %v5085
    %v5100 = vpack.c.b16 %v5088, %v5087
    %v5101 = vpack.c.b16 %v5090, %v5089
    %v5102 = vpack.c.b16 %v5092, %v5091
    %v5103 = vpack.c.b16 %v5094, %v5093
    %v5104 = vpack.c.b16 %v5096, %v5095
    %5113 = vmatprep.subr.bf16.mxu0 0
    %5114 = vmatpush1.bf16.msra.mxu0 %v5097
    %5115 = vmatprep.subr.bf16.mxu0 0
    %5116 = vmatpush1.bf16.msra.mxu0 %v5098
    %5117 = vmatprep.subr.bf16.mxu0 0
    %5118 = vmatpush1.bf16.msra.mxu0 %v5099
    %5119 = vmatprep.subr.bf16.mxu0 0
    %5120 = vmatpush1.bf16.msra.mxu0 %v5100
    %5121 = vmatprep.subr.bf16.mxu0 0
    %5122 = vmatpush1.bf16.msra.mxu0 %v5101
    %5123 = vmatprep.subr.bf16.mxu0 0
    %5124 = vmatpush1.bf16.msra.mxu0 %v5102
    %5125 = vmatprep.subr.bf16.mxu0 0
    %5126 = vmatpush1.bf16.msra.mxu0 %v5103
    %5127 = vmatprep.subr.bf16.mxu0 0
    %5128 = vmatpush1.bf16.msra.mxu0 %v5104
    %5129 = vmatprep.subr.bf16.mxu0 0
    %5130 = vmatpush1.bf16.msra.mxu0 0
    %5131 = vmatprep.subr.bf16.mxu0 0
    %5132 = vmatpush1.bf16.msra.mxu0 0
    %5133 = vmatprep.subr.bf16.mxu0 0
    %5134 = vmatpush1.bf16.msra.mxu0 0
    %5135 = vmatprep.subr.bf16.mxu0 0
    %5136 = vmatpush1.bf16.msra.mxu0 0
    %5137 = vmatprep.subr.bf16.mxu0 0
    %5138 = vmatpush1.bf16.msra.mxu0 0
    %5139 = vmatprep.subr.bf16.mxu0 0
    %5140 = vmatpush1.bf16.msra.mxu0 0
    %5141 = vmatprep.subr.bf16.mxu0 0
    %5142 = vmatpush1.bf16.msra.mxu0 0
    %5143 = vmatprep.subr.bf16.mxu0 0
    %5144 = vmatpush1.bf16.msra.mxu0 0
    %5145 = vmatprep.mubr.bf16.mxu0 0
    %5146 = vmatmul.mubr.bf16.gmra.mrb[0].mxu0 %v5041
    %v5147 = vpop.f32.mrb[0].mxu0
    %v5148 = vadd.f32 %v5063, %v5147
    %v5149 = vpop.f32.mrb[0].mxu0
    %v5150 = vpop.f32.mrb[0].mxu0
    %v5151 = vpop.f32.mrb[0].mxu0
    %5152 = vdwg.mxu0
    %5153 = vst [vmem:[#allocation11] sm:$0xff] %v5148
    // Predicated region
    $region50: #{tpu_custom_call.1} parent=1 // pred_check
      _
    $region51: #{tpu_custom_call.1} parent=1 // pred_check_branch
      %5155 = sbr.rel (0) target = $region53
    $region52: #{tpu_custom_call.1} parent=1 // pred_region
      %s5157 = ssub.s32 128, 128
      %5158 = vsyncadd [#allocation4], %s5157
      %s5160 = sshll.u32 [#allocation11], 4
      %s5161 = int_to_ptr.vmem [resolvable:$true] %s5160
      %5163 = dma.vmem_to_hbm [thread:$0]  %s5161, 128, %s7, [#allocation4]
    $region53: #{tpu_custom_call.1} parent=1 // pred_fallthru
      _
    // Predicated region
    $region54: #{tpu_custom_call.1} parent=1 // pred_check
      _
    $region55: #{tpu_custom_call.1} parent=1 // pred_check_branch
      %5165 = sbr.rel (0) target = $region57
    $region56: #{tpu_custom_call.1} parent=1 // pred_region
      %5166 = dma.done [#allocation4], 128
    $region57: #{tpu_custom_call.1} parent=1 // pred_fallthru
      _
    %5167 = vsyncpa [#allocation3], 1
    %5168 = vsyncpa [#allocation6], 1
    %5169 = vsyncpa [#allocation9], 1
    %5170 = vsyncpa [#allocation4], 1

</llo_original>
